<compile_context>
chip_gen: v6e
topology: v6e:2x2x1
jax: 0.10.0
libtpu: 0.0.40
codegen_flags: <defaults>
</compile_context>

<pallas_src>
import jax
import jax.numpy as jnp
from jax.experimental import pallas as pl
from jax.experimental.pallas import tpu as pltpu


def _make_kernel(B, C, H, W, C1, Cr, NC, NCP):
    HW = H * W
    BHW = B * HW
    inv_hw = 1.0 / HW
    inv_b = 1.0 / B

    def kernel(xpad_ref, wconv_ref, bconv_ref, w1_ref, b1_ref, w2_ref, b2_ref,
               wfc_ref, bfc_ref, onehot_ref, logits_ref, loss_ref):
        # ---- 3x3 "same" conv as 9 shifted tap-matmuls built in VMEM ---------
        xp = xpad_ref[...]                                   # [B, H+2, W+2, C]
        acc = jnp.zeros((BHW, C1), jnp.float32)
        for kh in range(3):
            for kw in range(3):
                patch = xp[:, kh:kh + H, kw:kw + W, :].reshape(BHW, C)
                acc = acc + jnp.dot(patch, wconv_ref[kh * 3 + kw],
                                    preferred_element_type=jnp.float32)
        y = jnp.maximum(acc + bconv_ref[...], 0.0)           # [B*HW, C1]

        # ---- Squeeze-and-Excitation (whole batch in one slab) ----------------
        y3 = y.reshape(B, HW, C1)                            # per-sample view
        sq = jnp.sum(y3, axis=1) * inv_hw                    # [B, C1]
        h = jnp.maximum(
            jnp.dot(sq, w1_ref[...], preferred_element_type=jnp.float32)
            + b1_ref[...], 0.0)                              # [B, Cr]
        s = jax.nn.sigmoid(
            jnp.dot(h, w2_ref[...], preferred_element_type=jnp.float32)
            + b2_ref[...])                                   # [B, C1]
        ys = y3 * s[:, None, :]                              # channel re-weighting

        # ---- global average pool + classifier (lane-dense padded logits) ----
        pooled = jnp.sum(ys, axis=1) * inv_hw                # [B, C1]
        logits = jnp.dot(pooled, wfc_ref[...],
                         preferred_element_type=jnp.float32) + bfc_ref[...]
        logits_ref[...] = logits                             # [B, NCP]

        # ---- CrossEntropy(logits[:, :NC], argmax(targets)) -------------------
        col = jax.lax.broadcasted_iota(jnp.int32, (B, NCP), 1)
        lmask = jnp.where(col < NC, logits, jnp.float32(-1e30))
        m = jnp.max(lmask, axis=-1, keepdims=True)
        z = lmask - m
        lse = jnp.log(jnp.sum(jnp.exp(z), axis=-1, keepdims=True))
        logp = z - lse
        loss_ref[0] = -jnp.sum(onehot_ref[...] * logp) * inv_b

    return kernel


def full_model_forward(targets, x, params):
    """FullModel.forward(targets, x) -> (loss[1], logits[B, NC])."""
    wconv, bconv, w1, b1, w2, b2, wfc, bfc = params          # wconv: [C1, C, 3, 3]
    B, C, H, W = x.shape
    C1 = wconv.shape[0]
    Cr = w1.shape[1]
    NC = wfc.shape[1]
    NCP = 128 * pl.cdiv(NC, 128)                             # lane-dense class dim

    # Spatially pre-padded NHWC activation (1x the data; patches built in-kernel).
    xpad = jnp.pad(x, ((0, 0), (0, 0), (1, 1), (1, 1))).transpose(0, 2, 3, 1)
    xpad = xpad.astype(jnp.float32)

    # Per-tap conv weights [9, C, C1], tap order (kh, kw).
    wconv_t = jnp.transpose(wconv, (2, 3, 1, 0)).reshape(9, C, C1).astype(jnp.float32)

    # Lane-pad classifier to NCP columns (padded columns masked in the loss).
    wfc_p = jnp.pad(wfc, ((0, 0), (0, NCP - NC))).astype(jnp.float32)
    bfc_p = jnp.pad(bfc.reshape(1, NC), ((0, 0), (0, NCP - NC))).astype(jnp.float32)

    # torch.topk(targets.long(), 1)[1].squeeze(1) == first-max argmax of int-cast targets.
    labels = jnp.argmax(targets.astype(jnp.int32), axis=-1)
    onehot = jax.nn.one_hot(labels, NCP, dtype=jnp.float32)

    kernel = _make_kernel(B, C, H, W, C1, Cr, NC, NCP)
    vmem = lambda: pl.BlockSpec(memory_space=pltpu.MemorySpace.VMEM)

    logits_p, loss = pl.pallas_call(
        kernel,
        out_shape=(jax.ShapeDtypeStruct((B, NCP), jnp.float32),
                   jax.ShapeDtypeStruct((1,), jnp.float32)),
        in_specs=[vmem() for _ in range(10)],
        out_specs=(vmem(),
                   pl.BlockSpec(memory_space=pltpu.MemorySpace.SMEM)),
    )(xpad, wconv_t, bconv.reshape(1, C1), w1, b1.reshape(1, Cr),
      w2, b2.reshape(1, C1), wfc_p, bfc_p, onehot)

    # matches: return (torch.unsqueeze(loss, 0), outputs)
    return loss, logits_p[:, :NC]


def init_params(key, C, C1, Cr, NC):
    ks = jax.random.split(key, 8)
    wconv = jax.random.normal(ks[0], (C1, C, 3, 3), jnp.float32) / jnp.sqrt(C * 9)
    bconv = jax.random.normal(ks[1], (C1,), jnp.float32) * 0.1
    w1 = jax.random.normal(ks[2], (C1, Cr), jnp.float32) / jnp.sqrt(C1)
    b1 = jax.random.normal(ks[3], (Cr,), jnp.float32) * 0.1
    w2 = jax.random.normal(ks[4], (Cr, C1), jnp.float32) / jnp.sqrt(Cr)
    b2 = jax.random.normal(ks[5], (C1,), jnp.float32) * 0.1
    wfc = jax.random.normal(ks[6], (C1, NC), jnp.float32) / jnp.sqrt(C1)
    bfc = jax.random.normal(ks[7], (NC,), jnp.float32) * 0.1
    return (wconv, bconv, w1, b1, w2, b2, wfc, bfc)


def reference(targets, x, params):
    """Pure-JAX reference of the same forward pass (for correctness check)."""
    wconv, bconv, w1, b1, w2, b2, wfc, bfc = params
    y = jax.lax.conv_general_dilated(
        x, wconv, window_strides=(1, 1), padding='SAME',
        dimension_numbers=('NCHW', 'OIHW', 'NCHW')) + bconv.reshape(1, -1, 1, 1)
    y = jnp.maximum(y, 0.0)                                  # [B, C1, H, W]
    sq = y.mean(axis=(2, 3))
    h = jnp.maximum(sq @ w1 + b1, 0.0)
    s = jax.nn.sigmoid(h @ w2 + b2)
    pooled = (y * s[:, :, None, None]).mean(axis=(2, 3))
    logits = pooled @ wfc + bfc
    tgt = jnp.argmax(targets.astype(jnp.int32), axis=-1)
    logp = jax.nn.log_softmax(logits, axis=-1)
    loss = -jnp.take_along_axis(logp, tgt[:, None], axis=-1).mean()
    return loss[None], logits


if __name__ == "__main__":
    B, C, H, W = 2, 4, 16, 16
    C1, Cr, NC = 8, 4, 10

    key = jax.random.PRNGKey(0)
    kx, kt, kp = jax.random.split(key, 3)
    x = jax.random.normal(kx, (B, C, H, W), jnp.float32)
    labels = jax.random.randint(kt, (B,), 0, NC)
    targets = jax.nn.one_hot(labels, NC, dtype=jnp.float32)  # one-hot float targets
    params = init_params(kp, C, C1, Cr, NC)

    loss, logits = full_model_forward(targets, x, params)
    jax.block_until_ready((loss, logits))

    ref_loss, ref_logits = reference(targets, x, params)
    assert logits.shape == (B, NC) and loss.shape == (1,)
    assert jnp.allclose(logits, ref_logits, atol=1e-4, rtol=1e-4), "logits mismatch"
    assert jnp.allclose(loss, ref_loss, atol=1e-4, rtol=1e-4), "loss mismatch"

    print("KERNEL_OK")
</pallas_src>

<mosaic_0001>
module attributes {stable_mosaic.version = 11 : i64} {
  func.func @kernel(%arg0: memref<2x18x18x4xf32, #tpu.memory_space<vmem>>, %arg1: memref<9x4x8xf32, #tpu.memory_space<vmem>>, %arg2: memref<1x8xf32, #tpu.memory_space<vmem>>, %arg3: memref<8x4xf32, #tpu.memory_space<vmem>>, %arg4: memref<1x4xf32, #tpu.memory_space<vmem>>, %arg5: memref<4x8xf32, #tpu.memory_space<vmem>>, %arg6: memref<1x8xf32, #tpu.memory_space<vmem>>, %arg7: memref<8x128xf32, #tpu.memory_space<vmem>>, %arg8: memref<1x128xf32, #tpu.memory_space<vmem>>, %arg9: memref<2x128xf32, #tpu.memory_space<vmem>>, %arg10: memref<2x128xf32, #tpu.memory_space<vmem>>, %arg11: memref<1xf32, #tpu.memory_space<smem>>) attributes {dimension_semantics = [], scalar_prefetch = 0 : i64, scratch_operands = 0 : i64, tpu.core_type = #tpu.core_type<tc>} {
    %c0 = arith.constant 0 : index
    %c0_0 = arith.constant 0 : index
    %c0_1 = arith.constant 0 : index
    %c0_2 = arith.constant 0 : index
    %0 = vector.load %arg0[%c0, %c0_0, %c0_1, %c0_2] : memref<2x18x18x4xf32, #tpu.memory_space<vmem>>, vector<2x18x18x4xf32>
    %cst = arith.constant 0.000000e+00 : f32
    %1 = vector.broadcast %cst : f32 to vector<512x8xf32>
    %2 = vector.extract_strided_slice %0 {offsets = [0, 0, 0, 0], sizes = [2, 16, 16, 4], strides = [1, 1, 1, 1]} : vector<2x18x18x4xf32> to vector<2x16x16x4xf32>
    %3 = vector.shape_cast %2 : vector<2x16x16x4xf32> to vector<512x4xf32>
    %c0_3 = arith.constant 0 : index
    %c0_4 = arith.constant 0 : index
    %c0_5 = arith.constant 0 : index
    %4 = vector.load %arg1[%c0_3, %c0_4, %c0_5] : memref<9x4x8xf32, #tpu.memory_space<vmem>>, vector<1x4x8xf32>
    %5 = vector.shape_cast %4 : vector<1x4x8xf32> to vector<4x8xf32>
    %cst_6 = arith.constant dense<0.000000e+00> : vector<512x8xf32>
    %6 = tpu.matmul %3, %5, %cst_6 {dimension_numbers = #tpu.dot_dimension_numbers<[1], [0], [0], [1], [0, 0, 1, 1], [], []>} : vector<512x4xf32>, vector<4x8xf32>, vector<512x8xf32> -> vector<512x8xf32>
    %7 = arith.addf %1, %6 : vector<512x8xf32>
    %8 = vector.extract_strided_slice %0 {offsets = [0, 0, 1, 0], sizes = [2, 16, 16, 4], strides = [1, 1, 1, 1]} : vector<2x18x18x4xf32> to vector<2x16x16x4xf32>
    %9 = vector.shape_cast %8 : vector<2x16x16x4xf32> to vector<512x4xf32>
    %c1 = arith.constant 1 : index
    %c0_7 = arith.constant 0 : index
    %c0_8 = arith.constant 0 : index
    %10 = vector.load %arg1[%c1, %c0_7, %c0_8] : memref<9x4x8xf32, #tpu.memory_space<vmem>>, vector<1x4x8xf32>
    %11 = vector.shape_cast %10 : vector<1x4x8xf32> to vector<4x8xf32>
    %cst_9 = arith.constant dense<0.000000e+00> : vector<512x8xf32>
    %12 = tpu.matmul %9, %11, %cst_9 {dimension_numbers = #tpu.dot_dimension_numbers<[1], [0], [0], [1], [0, 0, 1, 1], [], []>} : vector<512x4xf32>, vector<4x8xf32>, vector<512x8xf32> -> vector<512x8xf32>
    %13 = arith.addf %7, %12 : vector<512x8xf32>
    %14 = vector.extract_strided_slice %0 {offsets = [0, 0, 2, 0], sizes = [2, 16, 16, 4], strides = [1, 1, 1, 1]} : vector<2x18x18x4xf32> to vector<2x16x16x4xf32>
    %15 = vector.shape_cast %14 : vector<2x16x16x4xf32> to vector<512x4xf32>
    %c2 = arith.constant 2 : index
    %c0_10 = arith.constant 0 : index
    %c0_11 = arith.constant 0 : index
    %16 = vector.load %arg1[%c2, %c0_10, %c0_11] : memref<9x4x8xf32, #tpu.memory_space<vmem>>, vector<1x4x8xf32>
    %17 = vector.shape_cast %16 : vector<1x4x8xf32> to vector<4x8xf32>
    %cst_12 = arith.constant dense<0.000000e+00> : vector<512x8xf32>
    %18 = tpu.matmul %15, %17, %cst_12 {dimension_numbers = #tpu.dot_dimension_numbers<[1], [0], [0], [1], [0, 0, 1, 1], [], []>} : vector<512x4xf32>, vector<4x8xf32>, vector<512x8xf32> -> vector<512x8xf32>
    %19 = arith.addf %13, %18 : vector<512x8xf32>
    %20 = vector.extract_strided_slice %0 {offsets = [0, 1, 0, 0], sizes = [2, 16, 16, 4], strides = [1, 1, 1, 1]} : vector<2x18x18x4xf32> to vector<2x16x16x4xf32>
    %21 = vector.shape_cast %20 : vector<2x16x16x4xf32> to vector<512x4xf32>
    %c3 = arith.constant 3 : index
    %c0_13 = arith.constant 0 : index
    %c0_14 = arith.constant 0 : index
    %22 = vector.load %arg1[%c3, %c0_13, %c0_14] : memref<9x4x8xf32, #tpu.memory_space<vmem>>, vector<1x4x8xf32>
    %23 = vector.shape_cast %22 : vector<1x4x8xf32> to vector<4x8xf32>
    %cst_15 = arith.constant dense<0.000000e+00> : vector<512x8xf32>
    %24 = tpu.matmul %21, %23, %cst_15 {dimension_numbers = #tpu.dot_dimension_numbers<[1], [0], [0], [1], [0, 0, 1, 1], [], []>} : vector<512x4xf32>, vector<4x8xf32>, vector<512x8xf32> -> vector<512x8xf32>
    %25 = arith.addf %19, %24 : vector<512x8xf32>
    %26 = vector.extract_strided_slice %0 {offsets = [0, 1, 1, 0], sizes = [2, 16, 16, 4], strides = [1, 1, 1, 1]} : vector<2x18x18x4xf32> to vector<2x16x16x4xf32>
    %27 = vector.shape_cast %26 : vector<2x16x16x4xf32> to vector<512x4xf32>
    %c4 = arith.constant 4 : index
    %c0_16 = arith.constant 0 : index
    %c0_17 = arith.constant 0 : index
    %28 = vector.load %arg1[%c4, %c0_16, %c0_17] : memref<9x4x8xf32, #tpu.memory_space<vmem>>, vector<1x4x8xf32>
    %29 = vector.shape_cast %28 : vector<1x4x8xf32> to vector<4x8xf32>
    %cst_18 = arith.constant dense<0.000000e+00> : vector<512x8xf32>
    %30 = tpu.matmul %27, %29, %cst_18 {dimension_numbers = #tpu.dot_dimension_numbers<[1], [0], [0], [1], [0, 0, 1, 1], [], []>} : vector<512x4xf32>, vector<4x8xf32>, vector<512x8xf32> -> vector<512x8xf32>
    %31 = arith.addf %25, %30 : vector<512x8xf32>
    %32 = vector.extract_strided_slice %0 {offsets = [0, 1, 2, 0], sizes = [2, 16, 16, 4], strides = [1, 1, 1, 1]} : vector<2x18x18x4xf32> to vector<2x16x16x4xf32>
    %33 = vector.shape_cast %32 : vector<2x16x16x4xf32> to vector<512x4xf32>
    %c5 = arith.constant 5 : index
    %c0_19 = arith.constant 0 : index
    %c0_20 = arith.constant 0 : index
    %34 = vector.load %arg1[%c5, %c0_19, %c0_20] : memref<9x4x8xf32, #tpu.memory_space<vmem>>, vector<1x4x8xf32>
    %35 = vector.shape_cast %34 : vector<1x4x8xf32> to vector<4x8xf32>
    %cst_21 = arith.constant dense<0.000000e+00> : vector<512x8xf32>
    %36 = tpu.matmul %33, %35, %cst_21 {dimension_numbers = #tpu.dot_dimension_numbers<[1], [0], [0], [1], [0, 0, 1, 1], [], []>} : vector<512x4xf32>, vector<4x8xf32>, vector<512x8xf32> -> vector<512x8xf32>
    %37 = arith.addf %31, %36 : vector<512x8xf32>
    %38 = vector.extract_strided_slice %0 {offsets = [0, 2, 0, 0], sizes = [2, 16, 16, 4], strides = [1, 1, 1, 1]} : vector<2x18x18x4xf32> to vector<2x16x16x4xf32>
    %39 = vector.shape_cast %38 : vector<2x16x16x4xf32> to vector<512x4xf32>
    %c6 = arith.constant 6 : index
    %c0_22 = arith.constant 0 : index
    %c0_23 = arith.constant 0 : index
    %40 = vector.load %arg1[%c6, %c0_22, %c0_23] : memref<9x4x8xf32, #tpu.memory_space<vmem>>, vector<1x4x8xf32>
    %41 = vector.shape_cast %40 : vector<1x4x8xf32> to vector<4x8xf32>
    %cst_24 = arith.constant dense<0.000000e+00> : vector<512x8xf32>
    %42 = tpu.matmul %39, %41, %cst_24 {dimension_numbers = #tpu.dot_dimension_numbers<[1], [0], [0], [1], [0, 0, 1, 1], [], []>} : vector<512x4xf32>, vector<4x8xf32>, vector<512x8xf32> -> vector<512x8xf32>
    %43 = arith.addf %37, %42 : vector<512x8xf32>
    %44 = vector.extract_strided_slice %0 {offsets = [0, 2, 1, 0], sizes = [2, 16, 16, 4], strides = [1, 1, 1, 1]} : vector<2x18x18x4xf32> to vector<2x16x16x4xf32>
    %45 = vector.shape_cast %44 : vector<2x16x16x4xf32> to vector<512x4xf32>
    %c7 = arith.constant 7 : index
    %c0_25 = arith.constant 0 : index
    %c0_26 = arith.constant 0 : index
    %46 = vector.load %arg1[%c7, %c0_25, %c0_26] : memref<9x4x8xf32, #tpu.memory_space<vmem>>, vector<1x4x8xf32>
    %47 = vector.shape_cast %46 : vector<1x4x8xf32> to vector<4x8xf32>
    %cst_27 = arith.constant dense<0.000000e+00> : vector<512x8xf32>
    %48 = tpu.matmul %45, %47, %cst_27 {dimension_numbers = #tpu.dot_dimension_numbers<[1], [0], [0], [1], [0, 0, 1, 1], [], []>} : vector<512x4xf32>, vector<4x8xf32>, vector<512x8xf32> -> vector<512x8xf32>
    %49 = arith.addf %43, %48 : vector<512x8xf32>
    %50 = vector.extract_strided_slice %0 {offsets = [0, 2, 2, 0], sizes = [2, 16, 16, 4], strides = [1, 1, 1, 1]} : vector<2x18x18x4xf32> to vector<2x16x16x4xf32>
    %51 = vector.shape_cast %50 : vector<2x16x16x4xf32> to vector<512x4xf32>
    %c8 = arith.constant 8 : index
    %c0_28 = arith.constant 0 : index
    %c0_29 = arith.constant 0 : index
    %52 = vector.load %arg1[%c8, %c0_28, %c0_29] : memref<9x4x8xf32, #tpu.memory_space<vmem>>, vector<1x4x8xf32>
    %53 = vector.shape_cast %52 : vector<1x4x8xf32> to vector<4x8xf32>
    %cst_30 = arith.constant dense<0.000000e+00> : vector<512x8xf32>
    %54 = tpu.matmul %51, %53, %cst_30 {dimension_numbers = #tpu.dot_dimension_numbers<[1], [0], [0], [1], [0, 0, 1, 1], [], []>} : vector<512x4xf32>, vector<4x8xf32>, vector<512x8xf32> -> vector<512x8xf32>
    %55 = arith.addf %49, %54 : vector<512x8xf32>
    %c0_31 = arith.constant 0 : index
    %c0_32 = arith.constant 0 : index
    %56 = vector.load %arg2[%c0_31, %c0_32] : memref<1x8xf32, #tpu.memory_space<vmem>>, vector<1x8xf32>
    %57 = vector.broadcast %56 : vector<1x8xf32> to vector<512x8xf32>
    %58 = arith.addf %55, %57 : vector<512x8xf32>
    %cst_33 = arith.constant 0.000000e+00 : f32
    %59 = vector.broadcast %cst_33 : f32 to vector<512x8xf32>
    %60 = arith.maximumf %58, %59 : vector<512x8xf32>
    %61 = vector.shape_cast %60 : vector<512x8xf32> to vector<2x256x8xf32>
    %cst_34 = arith.constant dense<0.000000e+00> : vector<2x8xf32>
    %62 = vector.multi_reduction <add>, %61, %cst_34 [1] : vector<2x256x8xf32> to vector<2x8xf32>
    %cst_35 = arith.constant 3.906250e-03 : f32
    %63 = vector.broadcast %cst_35 : f32 to vector<2x8xf32>
    %64 = arith.mulf %62, %63 : vector<2x8xf32>
    %c0_36 = arith.constant 0 : index
    %c0_37 = arith.constant 0 : index
    %65 = vector.load %arg3[%c0_36, %c0_37] : memref<8x4xf32, #tpu.memory_space<vmem>>, vector<8x4xf32>
    %cst_38 = arith.constant dense<0.000000e+00> : vector<2x4xf32>
    %66 = tpu.matmul %64, %65, %cst_38 {dimension_numbers = #tpu.dot_dimension_numbers<[1], [0], [0], [1], [0, 0, 1, 1], [], []>} : vector<2x8xf32>, vector<8x4xf32>, vector<2x4xf32> -> vector<2x4xf32>
    %c0_39 = arith.constant 0 : index
    %c0_40 = arith.constant 0 : index
    %67 = vector.load %arg4[%c0_39, %c0_40] : memref<1x4xf32, #tpu.memory_space<vmem>>, vector<1x4xf32>
    %68 = vector.broadcast %67 : vector<1x4xf32> to vector<2x4xf32>
    %69 = arith.addf %66, %68 : vector<2x4xf32>
    %cst_41 = arith.constant 0.000000e+00 : f32
    %70 = vector.broadcast %cst_41 : f32 to vector<2x4xf32>
    %71 = arith.maximumf %69, %70 : vector<2x4xf32>
    %c0_42 = arith.constant 0 : index
    %c0_43 = arith.constant 0 : index
    %72 = vector.load %arg5[%c0_42, %c0_43] : memref<4x8xf32, #tpu.memory_space<vmem>>, vector<4x8xf32>
    %cst_44 = arith.constant dense<0.000000e+00> : vector<2x8xf32>
    %73 = tpu.matmul %71, %72, %cst_44 {dimension_numbers = #tpu.dot_dimension_numbers<[1], [0], [0], [1], [0, 0, 1, 1], [], []>} : vector<2x4xf32>, vector<4x8xf32>, vector<2x8xf32> -> vector<2x8xf32>
    %c0_45 = arith.constant 0 : index
    %c0_46 = arith.constant 0 : index
    %74 = vector.load %arg6[%c0_45, %c0_46] : memref<1x8xf32, #tpu.memory_space<vmem>>, vector<1x8xf32>
    %75 = vector.broadcast %74 : vector<1x8xf32> to vector<2x8xf32>
    %76 = arith.addf %73, %75 : vector<2x8xf32>
    %77 = arith.negf %76 : vector<2x8xf32>
    %78 = math.exp %77 : vector<2x8xf32>
    %cst_47 = arith.constant 1.000000e+00 : f32
    %79 = vector.broadcast %cst_47 : f32 to vector<2x8xf32>
    %80 = arith.addf %79, %78 : vector<2x8xf32>
    %81 = arith.divf %79, %80 : vector<2x8xf32>
    %82 = vector.shape_cast %81 : vector<2x8xf32> to vector<2x1x8xf32>
    %83 = vector.broadcast %82 : vector<2x1x8xf32> to vector<2x256x8xf32>
    %84 = arith.mulf %61, %83 : vector<2x256x8xf32>
    %cst_48 = arith.constant dense<0.000000e+00> : vector<2x8xf32>
    %85 = vector.multi_reduction <add>, %84, %cst_48 [1] : vector<2x256x8xf32> to vector<2x8xf32>
    %cst_49 = arith.constant 3.906250e-03 : f32
    %86 = vector.broadcast %cst_49 : f32 to vector<2x8xf32>
    %87 = arith.mulf %85, %86 : vector<2x8xf32>
    %c0_50 = arith.constant 0 : index
    %c0_51 = arith.constant 0 : index
    %88 = vector.load %arg7[%c0_50, %c0_51] : memref<8x128xf32, #tpu.memory_space<vmem>>, vector<8x128xf32>
    %cst_52 = arith.constant dense<0.000000e+00> : vector<2x128xf32>
    %89 = tpu.matmul %87, %88, %cst_52 {dimension_numbers = #tpu.dot_dimension_numbers<[1], [0], [0], [1], [0, 0, 1, 1], [], []>} : vector<2x8xf32>, vector<8x128xf32>, vector<2x128xf32> -> vector<2x128xf32>
    %c0_53 = arith.constant 0 : index
    %c0_54 = arith.constant 0 : index
    %90 = vector.load %arg8[%c0_53, %c0_54] : memref<1x128xf32, #tpu.memory_space<vmem>>, vector<1x128xf32>
    %91 = vector.broadcast %90 : vector<1x128xf32> to vector<2x128xf32>
    %92 = arith.addf %89, %91 : vector<2x128xf32>
    %c0_55 = arith.constant 0 : index
    %c0_56 = arith.constant 0 : index
    %93 = vector.load %arg10[%c0_55, %c0_56] : memref<2x128xf32, #tpu.memory_space<vmem>>, vector<2x128xf32>
    tpu.vector_store %arg10[%c0_55, %c0_56], %92 {strides = array<i32>} : memref<2x128xf32, #tpu.memory_space<vmem>>, vector<2x128xf32>,
    %94 = tpu.iota {dimensions = array<i32: 1>} : vector<2x128xi32>
    %c10_i32 = arith.constant 10 : i32
    %95 = vector.broadcast %c10_i32 : i32 to vector<2x128xi32>
    %96 = arith.cmpi slt, %94, %95 : vector<2x128xi32>
    %cst_57 = arith.constant -1.000000e+30 : f32
    %97 = vector.broadcast %cst_57 : f32 to vector<2x128xf32>
    %98 = arith.select %96, %92, %97 : vector<2x128xi1>, vector<2x128xf32>
    %cst_58 = arith.constant dense<0xFF800000> : vector<2xf32>
    %99 = vector.multi_reduction <maximumf>, %98, %cst_58 [1] : vector<2x128xf32> to vector<2xf32>
    %100 = vector.shape_cast %99 : vector<2xf32> to vector<2x1xf32>
    %101 = vector.broadcast %100 : vector<2x1xf32> to vector<2x128xf32>
    %102 = arith.subf %98, %101 : vector<2x128xf32>
    %103 = math.exp %102 : vector<2x128xf32>
    %cst_59 = arith.constant dense<0.000000e+00> : vector<2xf32>
    %104 = vector.multi_reduction <add>, %103, %cst_59 [1] : vector<2x128xf32> to vector<2xf32>
    %105 = vector.shape_cast %104 : vector<2xf32> to vector<2x1xf32>
    %106 = math.log %105 : vector<2x1xf32>
    %107 = vector.broadcast %106 : vector<2x1xf32> to vector<2x128xf32>
    %108 = arith.subf %102, %107 : vector<2x128xf32>
    %c0_60 = arith.constant 0 : index
    %c0_61 = arith.constant 0 : index
    %109 = vector.load %arg9[%c0_60, %c0_61] : memref<2x128xf32, #tpu.memory_space<vmem>>, vector<2x128xf32>
    %110 = arith.mulf %109, %108 : vector<2x128xf32>
    %111 = vector.shape_cast %110 : vector<2x128xf32> to vector<1x2x128xf32>
    %cst_62 = arith.constant dense<0.000000e+00> : vector<1xf32>
    %112 = vector.multi_reduction <add>, %111, %cst_62 [1, 2] : vector<1x2x128xf32> to vector<1xf32>
    %113 = vector.shape_cast %112 : vector<1xf32> to vector<1x1x1xf32>
    %114 = vector.extract %113[0, 0, 0] : f32 from vector<1x1x1xf32>
    %cst_63 = arith.constant 0.000000e+00 : f32
    %115 = arith.subf %cst_63, %114 : f32
    %cst_64 = arith.constant 5.000000e-01 : f32
    %116 = arith.mulf %115, %cst_64 : f32
    %c0_65 = arith.constant 0 : index
    %117 = memref.load %arg11[%c0_65] : memref<1xf32, #tpu.memory_space<smem>>
    memref.store %116, %arg11[%c0_65] : memref<1xf32, #tpu.memory_space<smem>>
    return
  }
}

</mosaic_0001>

<llo_original>
// kernel: tpu_custom_call.1
$region0: #{tpu_custom_call.1}
  #allocation0 [shape = 'u32[]', space=smem, size = 0x4, offset = 0x4, fixed_abs, tag = 'smem constant byte address 0x4 - core index']
  #allocation1 [shape = 'u32[144,128]{1,0:T(1,128)}', space=vmem, size = 0x12000, scoped, tag = 'internal scratch']
  %s0 = inlined_call_operand.vmem [shape: f32[2,18,18,4], index: 0, kind: input, shape index: {}]
  %s1 = inlined_call_operand.vmem [shape: f32[9,4,8], index: 1, kind: input, shape index: {}]
  %s2 = inlined_call_operand.vmem [shape: f32[1,8], index: 2, kind: input, shape index: {}]
  %s3 = inlined_call_operand.vmem [shape: f32[8,4], index: 3, kind: input, shape index: {}]
  %s4 = inlined_call_operand.vmem [shape: f32[1,4], index: 4, kind: input, shape index: {}]
  %s5 = inlined_call_operand.vmem [shape: f32[4,8], index: 5, kind: input, shape index: {}]
  %s6 = inlined_call_operand.vmem [shape: f32[1,8], index: 6, kind: input, shape index: {}]
  %s7 = inlined_call_operand.vmem [shape: f32[8,128], index: 7, kind: input, shape index: {}]
  %s8 = inlined_call_operand.vmem [shape: f32[1,128], index: 8, kind: input, shape index: {}]
  %s9 = inlined_call_operand.vmem [shape: f32[2,128], index: 9, kind: input, shape index: {}]
  %s10 = inlined_call_operand.hbm [shape: f32[2,128], index: 10, kind: output, shape index: {0}]
  %s11 = inlined_call_operand.hbm [shape: f32[1], index: 11, kind: output, shape index: {1}]
  %12 = xla_tuple %s10, %s11
  %s13 = sld [smem:[#allocation0]]
  $region58: #{tpu_custom_call.1} parent=0
    _
  %s15 = ssub.s32 1, %s13
  %s16 = scalar_select 0, %s15, %s13
  $region1: #{tpu_custom_call.1} parent=0
    #allocation2 [shape = 'u8[1024]{0}', space=vmem, size = 0x400, scoped, tag = 'output window, operand 0, single buffered']
    #allocation3 [shape = 's32[1]{0}', space=sflag, size = 0x4, scoped, tag = 'scoped memory for tpu_custom_call.1']
    #allocation4 [shape = 's32[1]{0}', space=sflag, size = 0x4, scoped, tag = 'scoped memory for tpu_custom_call.1']
    #allocation5 [shape = 'u8[512]{0}', space=smem, size = 0x200, scoped, tag = 'output window, operand 1, single buffered']
    %17 = vsyncpa [#allocation3], 0
    %18 = vsyncpa [#allocation4], 0
    // Predicated region
    $region2: #{tpu_custom_call.1} parent=1 // pred_check
      _
    $region3: #{tpu_custom_call.1} parent=1 // pred_check_branch
      %20 = sbr.rel (0) target = $region5
    $region4: #{tpu_custom_call.1} parent=1 // pred_region
      _
    $region5: #{tpu_custom_call.1} parent=1 // pred_fallthru
      _
    // Predicated region
    $region6: #{tpu_custom_call.1} parent=1 // pred_check
      _
    $region7: #{tpu_custom_call.1} parent=1 // pred_check_branch
      %22 = sbr.rel (0) target = $region9
    $region8: #{tpu_custom_call.1} parent=1 // pred_region
      _
    $region9: #{tpu_custom_call.1} parent=1 // pred_fallthru
      _
    // Predicated region
    $region10: #{tpu_custom_call.1} parent=1 // pred_check
      _
    $region11: #{tpu_custom_call.1} parent=1 // pred_check_branch
      %24 = sbr.rel (0) target = $region13
    $region12: #{tpu_custom_call.1} parent=1 // pred_region
      _
    $region13: #{tpu_custom_call.1} parent=1 // pred_fallthru
      _
    // Predicated region
    $region14: #{tpu_custom_call.1} parent=1 // pred_check
      _
    $region15: #{tpu_custom_call.1} parent=1 // pred_check_branch
      %26 = sbr.rel (0) target = $region17
    $region16: #{tpu_custom_call.1} parent=1 // pred_region
      _
    $region17: #{tpu_custom_call.1} parent=1 // pred_fallthru
      _
    // Predicated region
    $region18: #{tpu_custom_call.1} parent=1 // pred_check
      _
    $region19: #{tpu_custom_call.1} parent=1 // pred_check_branch
      %28 = sbr.rel (0) target = $region21
    $region20: #{tpu_custom_call.1} parent=1 // pred_region
      _
    $region21: #{tpu_custom_call.1} parent=1 // pred_fallthru
      _
    // Predicated region
    $region22: #{tpu_custom_call.1} parent=1 // pred_check
      _
    $region23: #{tpu_custom_call.1} parent=1 // pred_check_branch
      %30 = sbr.rel (0) target = $region25
    $region24: #{tpu_custom_call.1} parent=1 // pred_region
      _
    $region25: #{tpu_custom_call.1} parent=1 // pred_fallthru
      _
    // Predicated region
    $region26: #{tpu_custom_call.1} parent=1 // pred_check
      _
    $region27: #{tpu_custom_call.1} parent=1 // pred_check_branch
      %32 = sbr.rel (0) target = $region29
    $region28: #{tpu_custom_call.1} parent=1 // pred_region
      _
    $region29: #{tpu_custom_call.1} parent=1 // pred_fallthru
      _
    // Predicated region
    $region30: #{tpu_custom_call.1} parent=1 // pred_check
      _
    $region31: #{tpu_custom_call.1} parent=1 // pred_check_branch
      %34 = sbr.rel (0) target = $region33
    $region32: #{tpu_custom_call.1} parent=1 // pred_region
      _
    $region33: #{tpu_custom_call.1} parent=1 // pred_fallthru
      _
    // Predicated region
    $region34: #{tpu_custom_call.1} parent=1 // pred_check
      _
    $region35: #{tpu_custom_call.1} parent=1 // pred_check_branch
      %36 = sbr.rel (0) target = $region37
    $region36: #{tpu_custom_call.1} parent=1 // pred_region
      _
    $region37: #{tpu_custom_call.1} parent=1 // pred_fallthru
      _
    // Predicated region
    $region38: #{tpu_custom_call.1} parent=1 // pred_check
      _
    $region39: #{tpu_custom_call.1} parent=1 // pred_check_branch
      %38 = sbr.rel (0) target = $region41
    $region40: #{tpu_custom_call.1} parent=1 // pred_region
      _
    $region41: #{tpu_custom_call.1} parent=1 // pred_fallthru
      _
    %v39 = vld [vmem:[%s0] sm:$0xff]
    %v40 = vld [vmem:[%s0 + $0x8] sm:$0xff]
    %v41 = vld [vmem:[%s0 + $0x10] sm:$0x3]
    %v42 = vld [vmem:[%s0 + $0x18] sm:$0xff]
    %v43 = vld [vmem:[%s0 + $0x20] sm:$0xff]
    %v44 = vld [vmem:[%s0 + $0x28] sm:$0x3]
    %v45 = vld [vmem:[%s0 + $0x30] sm:$0xff]
    %v46 = vld [vmem:[%s0 + $0x38] sm:$0xff]
    %v47 = vld [vmem:[%s0 + $0x40] sm:$0x3]
    %v48 = vld [vmem:[%s0 + $0x48] sm:$0xff]
    %v49 = vld [vmem:[%s0 + $0x50] sm:$0xff]
    %v50 = vld [vmem:[%s0 + $0x58] sm:$0x3]
    %v51 = vld [vmem:[%s0 + $0x60] sm:$0xff]
    %v52 = vld [vmem:[%s0 + $0x68] sm:$0xff]
    %v53 = vld [vmem:[%s0 + $0x70] sm:$0x3]
    %v54 = vld [vmem:[%s0 + $0x78] sm:$0xff]
    %v55 = vld [vmem:[%s0 + $0x80] sm:$0xff]
    %v56 = vld [vmem:[%s0 + $0x88] sm:$0x3]
    %v57 = vld [vmem:[%s0 + $0x90] sm:$0xff]
    %v58 = vld [vmem:[%s0 + $0x98] sm:$0xff]
    %v59 = vld [vmem:[%s0 + $0xa0] sm:$0x3]
    %v60 = vld [vmem:[%s0 + $0xa8] sm:$0xff]
    %v61 = vld [vmem:[%s0 + $0xb0] sm:$0xff]
    %v62 = vld [vmem:[%s0 + $0xb8] sm:$0x3]
    %v63 = vld [vmem:[%s0 + $0xc0] sm:$0xff]
    %v64 = vld [vmem:[%s0 + $0xc8] sm:$0xff]
    %v65 = vld [vmem:[%s0 + $0xd0] sm:$0x3]
    %v66 = vld [vmem:[%s0 + $0xd8] sm:$0xff]
    %v67 = vld [vmem:[%s0 + $0xe0] sm:$0xff]
    %v68 = vld [vmem:[%s0 + $0xe8] sm:$0x3]
    %v69 = vld [vmem:[%s0 + $0xf0] sm:$0xff]
    %v70 = vld [vmem:[%s0 + $0xf8] sm:$0xff]
    %v71 = vld [vmem:[%s0 + $0x100] sm:$0x3]
    %v72 = vld [vmem:[%s0 + $0x108] sm:$0xff]
    %v73 = vld [vmem:[%s0 + $0x110] sm:$0xff]
    %v74 = vld [vmem:[%s0 + $0x118] sm:$0x3]
    %v75 = vld [vmem:[%s0 + $0x120] sm:$0xff]
    %v76 = vld [vmem:[%s0 + $0x128] sm:$0xff]
    %v77 = vld [vmem:[%s0 + $0x130] sm:$0x3]
    %v78 = vld [vmem:[%s0 + $0x138] sm:$0xff]
    %v79 = vld [vmem:[%s0 + $0x140] sm:$0xff]
    %v80 = vld [vmem:[%s0 + $0x148] sm:$0x3]
    %v81 = vld [vmem:[%s0 + $0x150] sm:$0xff]
    %v82 = vld [vmem:[%s0 + $0x158] sm:$0xff]
    %v83 = vld [vmem:[%s0 + $0x160] sm:$0x3]
    %v84 = vld [vmem:[%s0 + $0x168] sm:$0xff]
    %v85 = vld [vmem:[%s0 + $0x170] sm:$0xff]
    %v86 = vld [vmem:[%s0 + $0x178] sm:$0x3]
    %v87 = vld [vmem:[%s0 + $0x180] sm:$0xff]
    %v88 = vld [vmem:[%s0 + $0x188] sm:$0xff]
    %v89 = vld [vmem:[%s0 + $0x190] sm:$0x3]
    %v90 = vld [vmem:[%s0 + $0x198] sm:$0xff]
    %v91 = vld [vmem:[%s0 + $0x1a0] sm:$0xff]
    %v92 = vld [vmem:[%s0 + $0x1a8] sm:$0x3]
    %v93 = vld [vmem:[%s0 + $0x1b0] sm:$0xff]
    %v94 = vld [vmem:[%s0 + $0x1b8] sm:$0xff]
    %v95 = vld [vmem:[%s0 + $0x1c0] sm:$0x3]
    %v96 = vld [vmem:[%s0 + $0x1c8] sm:$0xff]
    %v97 = vld [vmem:[%s0 + $0x1d0] sm:$0xff]
    %v98 = vld [vmem:[%s0 + $0x1d8] sm:$0x3]
    %v99 = vld [vmem:[%s0 + $0x1e0] sm:$0xff]
    %v100 = vld [vmem:[%s0 + $0x1e8] sm:$0xff]
    %v101 = vld [vmem:[%s0 + $0x1f0] sm:$0x3]
    %v102 = vld [vmem:[%s0 + $0x1f8] sm:$0xff]
    %v103 = vld [vmem:[%s0 + $0x200] sm:$0xff]
    %v104 = vld [vmem:[%s0 + $0x208] sm:$0x3]
    %v105 = vld [vmem:[%s0 + $0x210] sm:$0xff]
    %v106 = vld [vmem:[%s0 + $0x218] sm:$0xff]
    %v107 = vld [vmem:[%s0 + $0x220] sm:$0x3]
    %v108 = vld [vmem:[%s0 + $0x228] sm:$0xff]
    %v109 = vld [vmem:[%s0 + $0x230] sm:$0xff]
    %v110 = vld [vmem:[%s0 + $0x238] sm:$0x3]
    %v111 = vld [vmem:[%s0 + $0x240] sm:$0xff]
    %v112 = vld [vmem:[%s0 + $0x248] sm:$0xff]
    %v113 = vld [vmem:[%s0 + $0x250] sm:$0x3]
    %v114 = vld [vmem:[%s0 + $0x258] sm:$0xff]
    %v115 = vld [vmem:[%s0 + $0x260] sm:$0xff]
    %v116 = vld [vmem:[%s0 + $0x268] sm:$0x3]
    %v117 = vld [vmem:[%s0 + $0x270] sm:$0xff]
    %v118 = vld [vmem:[%s0 + $0x278] sm:$0xff]
    %v119 = vld [vmem:[%s0 + $0x280] sm:$0x3]
    %v120 = vld [vmem:[%s0 + $0x288] sm:$0xff]
    %v121 = vld [vmem:[%s0 + $0x290] sm:$0xff]
    %v122 = vld [vmem:[%s0 + $0x298] sm:$0x3]
    %v123 = vld [vmem:[%s0 + $0x2a0] sm:$0xff]
    %v124 = vld [vmem:[%s0 + $0x2a8] sm:$0xff]
    %v125 = vld [vmem:[%s0 + $0x2b0] sm:$0x3]
    %v126 = vld [vmem:[%s0 + $0x2b8] sm:$0xff]
    %v127 = vld [vmem:[%s0 + $0x2c0] sm:$0xff]
    %v128 = vld [vmem:[%s0 + $0x2c8] sm:$0x3]
    %v129 = vld [vmem:[%s0 + $0x2d0] sm:$0xff]
    %v130 = vld [vmem:[%s0 + $0x2d8] sm:$0xff]
    %v131 = vld [vmem:[%s0 + $0x2e0] sm:$0x3]
    %v132 = vld [vmem:[%s0 + $0x2e8] sm:$0xff]
    %v133 = vld [vmem:[%s0 + $0x2f0] sm:$0xff]
    %v134 = vld [vmem:[%s0 + $0x2f8] sm:$0x3]
    %v135 = vld [vmem:[%s0 + $0x300] sm:$0xff]
    %v136 = vld [vmem:[%s0 + $0x308] sm:$0xff]
    %v137 = vld [vmem:[%s0 + $0x310] sm:$0x3]
    %v138 = vld [vmem:[%s0 + $0x318] sm:$0xff]
    %v139 = vld [vmem:[%s0 + $0x320] sm:$0xff]
    %v140 = vld [vmem:[%s0 + $0x328] sm:$0x3]
    %v141 = vld [vmem:[%s0 + $0x330] sm:$0xff]
    %v142 = vld [vmem:[%s0 + $0x338] sm:$0xff]
    %v143 = vld [vmem:[%s0 + $0x340] sm:$0x3]
    %v144 = vld [vmem:[%s0 + $0x348] sm:$0xff]
    %v145 = vld [vmem:[%s0 + $0x350] sm:$0xff]
    %v146 = vld [vmem:[%s0 + $0x358] sm:$0x3]
    %v147 = vld [vmem:[%s1] sm:$0xf]
    %vm244 = vcmask 1046528
    %v245 = vrot.slane %v39, 1
    %v246 = vrot.slane %v40, 1
    %v247 = vsel %vm244, %v245, %v246
    %v248 = vrot.slane %v41, 1
    %v249 = vsel %vm244, %v246, %v248
    %v250 = vrot.slane %v42, 1
    %v251 = vrot.slane %v43, 1
    %v252 = vsel %vm244, %v250, %v251
    %v253 = vrot.slane %v44, 1
    %v254 = vsel %vm244, %v251, %v253
    %v255 = vrot.slane %v45, 1
    %v256 = vrot.slane %v46, 1
    %v257 = vsel %vm244, %v255, %v256
    %v258 = vrot.slane %v47, 1
    %v259 = vsel %vm244, %v256, %v258
    %v260 = vrot.slane %v48, 1
    %v261 = vrot.slane %v49, 1
    %v262 = vsel %vm244, %v260, %v261
    %v263 = vrot.slane %v50, 1
    %v264 = vsel %vm244, %v261, %v263
    %v265 = vrot.slane %v51, 1
    %v266 = vrot.slane %v52, 1
    %v267 = vsel %vm244, %v265, %v266
    %v268 = vrot.slane %v53, 1
    %v269 = vsel %vm244, %v266, %v268
    %v270 = vrot.slane %v54, 1
    %v271 = vrot.slane %v55, 1
    %v272 = vsel %vm244, %v270, %v271
    %v273 = vrot.slane %v56, 1
    %v274 = vsel %vm244, %v271, %v273
    %v275 = vrot.slane %v57, 1
    %v276 = vrot.slane %v58, 1
    %v277 = vsel %vm244, %v275, %v276
    %v278 = vrot.slane %v59, 1
    %v279 = vsel %vm244, %v276, %v278
    %v280 = vrot.slane %v60, 1
    %v281 = vrot.slane %v61, 1
    %v282 = vsel %vm244, %v280, %v281
    %v283 = vrot.slane %v62, 1
    %v284 = vsel %vm244, %v281, %v283
    %v285 = vrot.slane %v63, 1
    %v286 = vrot.slane %v64, 1
    %v287 = vsel %vm244, %v285, %v286
    %v288 = vrot.slane %v65, 1
    %v289 = vsel %vm244, %v286, %v288
    %v290 = vrot.slane %v66, 1
    %v291 = vrot.slane %v67, 1
    %v292 = vsel %vm244, %v290, %v291
    %v293 = vrot.slane %v68, 1
    %v294 = vsel %vm244, %v291, %v293
    %v295 = vrot.slane %v69, 1
    %v296 = vrot.slane %v70, 1
    %v297 = vsel %vm244, %v295, %v296
    %v298 = vrot.slane %v71, 1
    %v299 = vsel %vm244, %v296, %v298
    %v300 = vrot.slane %v72, 1
    %v301 = vrot.slane %v73, 1
    %v302 = vsel %vm244, %v300, %v301
    %v303 = vrot.slane %v74, 1
    %v304 = vsel %vm244, %v301, %v303
    %v305 = vrot.slane %v75, 1
    %v306 = vrot.slane %v76, 1
    %v307 = vsel %vm244, %v305, %v306
    %v308 = vrot.slane %v77, 1
    %v309 = vsel %vm244, %v306, %v308
    %v310 = vrot.slane %v78, 1
    %v311 = vrot.slane %v79, 1
    %v312 = vsel %vm244, %v310, %v311
    %v313 = vrot.slane %v80, 1
    %v314 = vsel %vm244, %v311, %v313
    %v315 = vrot.slane %v81, 1
    %v316 = vrot.slane %v82, 1
    %v317 = vsel %vm244, %v315, %v316
    %v318 = vrot.slane %v83, 1
    %v319 = vsel %vm244, %v316, %v318
    %v320 = vrot.slane %v84, 1
    %v321 = vrot.slane %v85, 1
    %v322 = vsel %vm244, %v320, %v321
    %v323 = vrot.slane %v86, 1
    %v324 = vsel %vm244, %v321, %v323
    %v325 = vrot.slane %v93, 1
    %v326 = vrot.slane %v94, 1
    %v327 = vsel %vm244, %v325, %v326
    %v328 = vrot.slane %v95, 1
    %v329 = vsel %vm244, %v326, %v328
    %v330 = vrot.slane %v96, 1
    %v331 = vrot.slane %v97, 1
    %v332 = vsel %vm244, %v330, %v331
    %v333 = vrot.slane %v98, 1
    %v334 = vsel %vm244, %v331, %v333
    %v335 = vrot.slane %v99, 1
    %v336 = vrot.slane %v100, 1
    %v337 = vsel %vm244, %v335, %v336
    %v338 = vrot.slane %v101, 1
    %v339 = vsel %vm244, %v336, %v338
    %v340 = vrot.slane %v102, 1
    %v341 = vrot.slane %v103, 1
    %v342 = vsel %vm244, %v340, %v341
    %v343 = vrot.slane %v104, 1
    %v344 = vsel %vm244, %v341, %v343
    %v345 = vrot.slane %v105, 1
    %v346 = vrot.slane %v106, 1
    %v347 = vsel %vm244, %v345, %v346
    %v348 = vrot.slane %v107, 1
    %v349 = vsel %vm244, %v346, %v348
    %v350 = vrot.slane %v108, 1
    %v351 = vrot.slane %v109, 1
    %v352 = vsel %vm244, %v350, %v351
    %v353 = vrot.slane %v110, 1
    %v354 = vsel %vm244, %v351, %v353
    %v355 = vrot.slane %v111, 1
    %v356 = vrot.slane %v112, 1
    %v357 = vsel %vm244, %v355, %v356
    %v358 = vrot.slane %v113, 1
    %v359 = vsel %vm244, %v356, %v358
    %v360 = vrot.slane %v114, 1
    %v361 = vrot.slane %v115, 1
    %v362 = vsel %vm244, %v360, %v361
    %v363 = vrot.slane %v116, 1
    %v364 = vsel %vm244, %v361, %v363
    %v365 = vrot.slane %v117, 1
    %v366 = vrot.slane %v118, 1
    %v367 = vsel %vm244, %v365, %v366
    %v368 = vrot.slane %v119, 1
    %v369 = vsel %vm244, %v366, %v368
    %v370 = vrot.slane %v120, 1
    %v371 = vrot.slane %v121, 1
    %v372 = vsel %vm244, %v370, %v371
    %v373 = vrot.slane %v122, 1
    %v374 = vsel %vm244, %v371, %v373
    %v375 = vrot.slane %v123, 1
    %v376 = vrot.slane %v124, 1
    %v377 = vsel %vm244, %v375, %v376
    %v378 = vrot.slane %v125, 1
    %v379 = vsel %vm244, %v376, %v378
    %v380 = vrot.slane %v126, 1
    %v381 = vrot.slane %v127, 1
    %v382 = vsel %vm244, %v380, %v381
    %v383 = vrot.slane %v128, 1
    %v384 = vsel %vm244, %v381, %v383
    %v385 = vrot.slane %v129, 1
    %v386 = vrot.slane %v130, 1
    %v387 = vsel %vm244, %v385, %v386
    %v388 = vrot.slane %v131, 1
    %v389 = vsel %vm244, %v386, %v388
    %v390 = vrot.slane %v132, 1
    %v391 = vrot.slane %v133, 1
    %v392 = vsel %vm244, %v390, %v391
    %v393 = vrot.slane %v134, 1
    %v394 = vsel %vm244, %v391, %v393
    %v395 = vrot.slane %v135, 1
    %v396 = vrot.slane %v136, 1
    %v397 = vsel %vm244, %v395, %v396
    %v398 = vrot.slane %v137, 1
    %v399 = vsel %vm244, %v396, %v398
    %v400 = vrot.slane %v138, 1
    %v401 = vrot.slane %v139, 1
    %v402 = vsel %vm244, %v400, %v401
    %v403 = vrot.slane %v140, 1
    %v404 = vsel %vm244, %v401, %v403
    %s405 = scalar_lea.vmem %s1, 4
    %v406 = vld [vmem:[%s405] sm:$0xf]
    %vm407 = vcmask 31744
    %v408 = vsel %vm407, %v247, 0
    %v410 = vsel %vm407, %v249, 0
    %v412 = vsel %vm407, %v252, 0
    %v414 = vsel %vm407, %v254, 0
    %v416 = vsel %vm407, %v257, 0
    %v418 = vsel %vm407, %v259, 0
    %v420 = vsel %vm407, %v262, 0
    %v422 = vsel %vm407, %v264, 0
    %v424 = vsel %vm407, %v267, 0
    %v426 = vsel %vm407, %v269, 0
    %v428 = vsel %vm407, %v272, 0
    %v430 = vsel %vm407, %v274, 0
    %v432 = vsel %vm407, %v277, 0
    %v434 = vsel %vm407, %v279, 0
    %v436 = vsel %vm407, %v282, 0
    %v438 = vsel %vm407, %v284, 0
    %v440 = vsel %vm407, %v287, 0
    %v442 = vsel %vm407, %v289, 0
    %v444 = vsel %vm407, %v292, 0
    %v446 = vsel %vm407, %v294, 0
    %v448 = vsel %vm407, %v297, 0
    %v450 = vsel %vm407, %v299, 0
    %v452 = vsel %vm407, %v302, 0
    %v454 = vsel %vm407, %v304, 0
    %v456 = vsel %vm407, %v307, 0
    %v458 = vsel %vm407, %v309, 0
    %v460 = vsel %vm407, %v312, 0
    %v462 = vsel %vm407, %v314, 0
    %v464 = vsel %vm407, %v317, 0
    %v466 = vsel %vm407, %v319, 0
    %v468 = vsel %vm407, %v322, 0
    %v470 = vsel %vm407, %v324, 0
    %v472 = vsel %vm407, %v327, 0
    %v474 = vsel %vm407, %v329, 0
    %v476 = vsel %vm407, %v332, 0
    %v478 = vsel %vm407, %v334, 0
    %v480 = vsel %vm407, %v337, 0
    %v482 = vsel %vm407, %v339, 0
    %v484 = vsel %vm407, %v342, 0
    %v486 = vsel %vm407, %v344, 0
    %v488 = vsel %vm407, %v347, 0
    %v490 = vsel %vm407, %v349, 0
    %v492 = vsel %vm407, %v352, 0
    %v494 = vsel %vm407, %v354, 0
    %v496 = vsel %vm407, %v357, 0
    %v498 = vsel %vm407, %v359, 0
    %v500 = vsel %vm407, %v362, 0
    %v502 = vsel %vm407, %v364, 0
    %v504 = vsel %vm407, %v367, 0
    %v506 = vsel %vm407, %v369, 0
    %v508 = vsel %vm407, %v372, 0
    %v510 = vsel %vm407, %v374, 0
    %v512 = vsel %vm407, %v377, 0
    %v514 = vsel %vm407, %v379, 0
    %v516 = vsel %vm407, %v382, 0
    %v518 = vsel %vm407, %v384, 0
    %v520 = vsel %vm407, %v387, 0
    %v522 = vsel %vm407, %v389, 0
    %v524 = vsel %vm407, %v392, 0
    %v526 = vsel %vm407, %v394, 0
    %v528 = vsel %vm407, %v397, 0
    %v530 = vsel %vm407, %v399, 0
    %v532 = vsel %vm407, %v402, 0
    %v534 = vsel %vm407, %v404, 0
    %vm536 = vcmask 1043456
    %v538 = vsel %vm536, %v406, 0
    %540 = vmatprep.subr.mxu0 0.0
    %541 = vmatpush1.msra.mxu0 0.0
    %542 = vmatprep.subr.mxu0 0.0
    %543 = vmatpush1.msra.mxu0 0.0
    %544 = vmatprep.subr.mxu0 0.0
    %545 = vmatpush1.msra.mxu0 0.0
    %546 = vmatprep.subr.mxu0 0.0
    %547 = vmatpush1.msra.mxu0 0.0
    %548 = vmatprep.subr.mxu0 0.0
    %549 = vmatpush1.msra.mxu0 0.0
    %550 = vmatprep.subr.mxu0 0.0
    %551 = vmatpush1.msra.mxu0 0.0
    %552 = vmatprep.subr.mxu0 0.0
    %553 = vmatpush1.msra.mxu0 0.0
    %554 = vmatprep.subr.mxu0 0.0
    %555 = vmatpush1.msra.mxu0 0.0
    %556 = vmatprep.subr.mxu0 0.0
    %557 = vmatpush1.msra.mxu0 0.0
    %558 = vmatprep.subr.mxu0 0.0
    %559 = vmatpush1.msra.mxu0 0.0
    %560 = vmatprep.subr.mxu0 0.0
    %561 = vmatpush1.msra.mxu0 0.0
    %562 = vmatprep.subr.mxu0 0.0
    %563 = vmatpush1.msra.mxu0 0.0
    %564 = vmatprep.subr.mxu0 0.0
    %565 = vmatpush1.msra.mxu0 0.0
    %566 = vmatprep.subr.mxu0 0.0
    %567 = vmatpush1.msra.mxu0 0.0
    %568 = vmatprep.subr.mxu0 0.0
    %569 = vmatpush1.msra.mxu0 0.0
    %570 = vmatprep.subr.mxu0 0.0
    %571 = vmatpush1.msra.mxu0 %v538
    %572 = vmatprep.subr.mxu0 0.0
    %573 = vmatpush2.msra.mxu0 0.0
    %574 = vmatprep.subr.mxu0 0.0
    %575 = vmatpush2.msra.mxu0 0.0
    %576 = vmatprep.subr.mxu0 0.0
    %577 = vmatpush2.msra.mxu0 0.0
    %578 = vmatprep.subr.mxu0 0.0
    %579 = vmatpush2.msra.mxu0 0.0
    %580 = vmatprep.subr.mxu0 0.0
    %581 = vmatpush2.msra.mxu0 0.0
    %582 = vmatprep.subr.mxu0 0.0
    %583 = vmatpush2.msra.mxu0 0.0
    %584 = vmatprep.subr.mxu0 0.0
    %585 = vmatpush2.msra.mxu0 0.0
    %586 = vmatprep.subr.mxu0 0.0
    %587 = vmatpush2.msra.mxu0 0.0
    %588 = vmatprep.subr.mxu0 0.0
    %589 = vmatpush2.msra.mxu0 0.0
    %590 = vmatprep.subr.mxu0 0.0
    %591 = vmatpush2.msra.mxu0 0.0
    %592 = vmatprep.subr.mxu0 0.0
    %593 = vmatpush2.msra.mxu0 0.0
    %594 = vmatprep.subr.mxu0 0.0
    %595 = vmatpush2.msra.mxu0 0.0
    %596 = vmatprep.subr.mxu0 0.0
    %597 = vmatpush2.msra.mxu0 0.0
    %598 = vmatprep.subr.mxu0 0.0
    %599 = vmatpush2.msra.mxu0 0.0
    %600 = vmatprep.subr.mxu0 0.0
    %601 = vmatpush2.msra.mxu0 0.0
    %602 = vmatprep.subr.mxu0 0.0
    %603 = vmatpush2.msra.mxu0 0.0
    %604 = vmatprep.mubr.f32.mxu0 0.0
    %605 = vmatmul.mubr.f32.gmra.mxu0 %v408
    %v606 = vpop.f32.mrf.mxu0
    %v607 = vadd.f32 0.0, %v606
    %v608 = vpop.f32.mrf.mxu0
    %609 = vmatprep.mubr.f32.mxu0 0.0
    %610 = vmatmul.mubr.f32.gmra.mxu0 %v410
    %v611 = vpop.f32.mrf.mxu0
    %v612 = vadd.f32 0.0, %v611
    %v613 = vpop.f32.mrf.mxu0
    %614 = vmatprep.mubr.f32.mxu0 0.0
    %615 = vmatmul.mubr.f32.gmra.mxu0 %v412
    %v616 = vpop.f32.mrf.mxu0
    %v617 = vadd.f32 0.0, %v616
    %v618 = vpop.f32.mrf.mxu0
    %619 = vmatprep.mubr.f32.mxu0 0.0
    %620 = vmatmul.mubr.f32.gmra.mxu0 %v414
    %v621 = vpop.f32.mrf.mxu0
    %v622 = vadd.f32 0.0, %v621
    %v623 = vpop.f32.mrf.mxu0
    %624 = vmatprep.mubr.f32.mxu0 0.0
    %625 = vmatmul.mubr.f32.gmra.mxu0 %v416
    %v626 = vpop.f32.mrf.mxu0
    %v627 = vadd.f32 0.0, %v626
    %v628 = vpop.f32.mrf.mxu0
    %629 = vmatprep.mubr.f32.mxu0 0.0
    %630 = vmatmul.mubr.f32.gmra.mxu0 %v418
    %v631 = vpop.f32.mrf.mxu0
    %v632 = vadd.f32 0.0, %v631
    %v633 = vpop.f32.mrf.mxu0
    %634 = vmatprep.mubr.f32.mxu0 0.0
    %635 = vmatmul.mubr.f32.gmra.mxu0 %v420
    %v636 = vpop.f32.mrf.mxu0
    %v637 = vadd.f32 0.0, %v636
    %v638 = vpop.f32.mrf.mxu0
    %639 = vmatprep.mubr.f32.mxu0 0.0
    %640 = vmatmul.mubr.f32.gmra.mxu0 %v422
    %v641 = vpop.f32.mrf.mxu0
    %v642 = vadd.f32 0.0, %v641
    %v643 = vpop.f32.mrf.mxu0
    %644 = vmatprep.mubr.f32.mxu0 0.0
    %645 = vmatmul.mubr.f32.gmra.mxu0 %v424
    %v646 = vpop.f32.mrf.mxu0
    %v647 = vadd.f32 0.0, %v646
    %v648 = vpop.f32.mrf.mxu0
    %649 = vmatprep.mubr.f32.mxu0 0.0
    %650 = vmatmul.mubr.f32.gmra.mxu0 %v426
    %v651 = vpop.f32.mrf.mxu0
    %v652 = vadd.f32 0.0, %v651
    %v653 = vpop.f32.mrf.mxu0
    %654 = vmatprep.mubr.f32.mxu0 0.0
    %655 = vmatmul.mubr.f32.gmra.mxu0 %v428
    %v656 = vpop.f32.mrf.mxu0
    %v657 = vadd.f32 0.0, %v656
    %v658 = vpop.f32.mrf.mxu0
    %659 = vmatprep.mubr.f32.mxu0 0.0
    %660 = vmatmul.mubr.f32.gmra.mxu0 %v430
    %v661 = vpop.f32.mrf.mxu0
    %v662 = vadd.f32 0.0, %v661
    %v663 = vpop.f32.mrf.mxu0
    %664 = vmatprep.mubr.f32.mxu0 0.0
    %665 = vmatmul.mubr.f32.gmra.mxu0 %v432
    %v666 = vpop.f32.mrf.mxu0
    %v667 = vadd.f32 0.0, %v666
    %v668 = vpop.f32.mrf.mxu0
    %669 = vmatprep.mubr.f32.mxu0 0.0
    %670 = vmatmul.mubr.f32.gmra.mxu0 %v434
    %v671 = vpop.f32.mrf.mxu0
    %v672 = vadd.f32 0.0, %v671
    %v673 = vpop.f32.mrf.mxu0
    %674 = vmatprep.mubr.f32.mxu0 0.0
    %675 = vmatmul.mubr.f32.gmra.mxu0 %v436
    %v676 = vpop.f32.mrf.mxu0
    %v677 = vadd.f32 0.0, %v676
    %v678 = vpop.f32.mrf.mxu0
    %679 = vmatprep.mubr.f32.mxu0 0.0
    %680 = vmatmul.mubr.f32.gmra.mxu0 %v438
    %v681 = vpop.f32.mrf.mxu0
    %v682 = vadd.f32 0.0, %v681
    %v683 = vpop.f32.mrf.mxu0
    %684 = vmatprep.mubr.f32.mxu0 0.0
    %685 = vmatmul.mubr.f32.gmra.mxu0 %v440
    %v686 = vpop.f32.mrf.mxu0
    %v687 = vadd.f32 0.0, %v686
    %v688 = vpop.f32.mrf.mxu0
    %689 = vmatprep.mubr.f32.mxu0 0.0
    %690 = vmatmul.mubr.f32.gmra.mxu0 %v442
    %v691 = vpop.f32.mrf.mxu0
    %v692 = vadd.f32 0.0, %v691
    %v693 = vpop.f32.mrf.mxu0
    %694 = vmatprep.mubr.f32.mxu0 0.0
    %695 = vmatmul.mubr.f32.gmra.mxu0 %v444
    %v696 = vpop.f32.mrf.mxu0
    %v697 = vadd.f32 0.0, %v696
    %v698 = vpop.f32.mrf.mxu0
    %699 = vmatprep.mubr.f32.mxu0 0.0
    %700 = vmatmul.mubr.f32.gmra.mxu0 %v446
    %v701 = vpop.f32.mrf.mxu0
    %v702 = vadd.f32 0.0, %v701
    %v703 = vpop.f32.mrf.mxu0
    %704 = vmatprep.mubr.f32.mxu0 0.0
    %705 = vmatmul.mubr.f32.gmra.mxu0 %v448
    %v706 = vpop.f32.mrf.mxu0
    %v707 = vadd.f32 0.0, %v706
    %v708 = vpop.f32.mrf.mxu0
    %709 = vmatprep.mubr.f32.mxu0 0.0
    %710 = vmatmul.mubr.f32.gmra.mxu0 %v450
    %v711 = vpop.f32.mrf.mxu0
    %v712 = vadd.f32 0.0, %v711
    %v713 = vpop.f32.mrf.mxu0
    %714 = vmatprep.mubr.f32.mxu0 0.0
    %715 = vmatmul.mubr.f32.gmra.mxu0 %v452
    %v716 = vpop.f32.mrf.mxu0
    %v717 = vadd.f32 0.0, %v716
    %v718 = vpop.f32.mrf.mxu0
    %719 = vmatprep.mubr.f32.mxu0 0.0
    %720 = vmatmul.mubr.f32.gmra.mxu0 %v454
    %v721 = vpop.f32.mrf.mxu0
    %v722 = vadd.f32 0.0, %v721
    %v723 = vpop.f32.mrf.mxu0
    %724 = vmatprep.mubr.f32.mxu0 0.0
    %725 = vmatmul.mubr.f32.gmra.mxu0 %v456
    %v726 = vpop.f32.mrf.mxu0
    %v727 = vadd.f32 0.0, %v726
    %v728 = vpop.f32.mrf.mxu0
    %729 = vmatprep.mubr.f32.mxu0 0.0
    %730 = vmatmul.mubr.f32.gmra.mxu0 %v458
    %v731 = vpop.f32.mrf.mxu0
    %v732 = vadd.f32 0.0, %v731
    %v733 = vpop.f32.mrf.mxu0
    %734 = vmatprep.mubr.f32.mxu0 0.0
    %735 = vmatmul.mubr.f32.gmra.mxu0 %v460
    %v736 = vpop.f32.mrf.mxu0
    %v737 = vadd.f32 0.0, %v736
    %v738 = vpop.f32.mrf.mxu0
    %739 = vmatprep.mubr.f32.mxu0 0.0
    %740 = vmatmul.mubr.f32.gmra.mxu0 %v462
    %v741 = vpop.f32.mrf.mxu0
    %v742 = vadd.f32 0.0, %v741
    %v743 = vpop.f32.mrf.mxu0
    %744 = vmatprep.mubr.f32.mxu0 0.0
    %745 = vmatmul.mubr.f32.gmra.mxu0 %v464
    %v746 = vpop.f32.mrf.mxu0
    %v747 = vadd.f32 0.0, %v746
    %v748 = vpop.f32.mrf.mxu0
    %749 = vmatprep.mubr.f32.mxu0 0.0
    %750 = vmatmul.mubr.f32.gmra.mxu0 %v466
    %v751 = vpop.f32.mrf.mxu0
    %v752 = vadd.f32 0.0, %v751
    %v753 = vpop.f32.mrf.mxu0
    %754 = vmatprep.mubr.f32.mxu0 0.0
    %755 = vmatmul.mubr.f32.gmra.mxu0 %v468
    %v756 = vpop.f32.mrf.mxu0
    %v757 = vadd.f32 0.0, %v756
    %v758 = vpop.f32.mrf.mxu0
    %759 = vmatprep.mubr.f32.mxu0 0.0
    %760 = vmatmul.mubr.f32.gmra.mxu0 %v470
    %v761 = vpop.f32.mrf.mxu0
    %v762 = vadd.f32 0.0, %v761
    %v763 = vpop.f32.mrf.mxu0
    %764 = vmatprep.mubr.f32.mxu0 0.0
    %765 = vmatmul.mubr.f32.gmra.mxu0 %v472
    %v766 = vpop.f32.mrf.mxu0
    %v767 = vadd.f32 0.0, %v766
    %v768 = vpop.f32.mrf.mxu0
    %769 = vmatprep.mubr.f32.mxu0 0.0
    %770 = vmatmul.mubr.f32.gmra.mxu0 %v474
    %v771 = vpop.f32.mrf.mxu0
    %v772 = vadd.f32 0.0, %v771
    %v773 = vpop.f32.mrf.mxu0
    %774 = vmatprep.mubr.f32.mxu0 0.0
    %775 = vmatmul.mubr.f32.gmra.mxu0 %v476
    %v776 = vpop.f32.mrf.mxu0
    %v777 = vadd.f32 0.0, %v776
    %v778 = vpop.f32.mrf.mxu0
    %779 = vmatprep.mubr.f32.mxu0 0.0
    %780 = vmatmul.mubr.f32.gmra.mxu0 %v478
    %v781 = vpop.f32.mrf.mxu0
    %v782 = vadd.f32 0.0, %v781
    %v783 = vpop.f32.mrf.mxu0
    %784 = vmatprep.mubr.f32.mxu0 0.0
    %785 = vmatmul.mubr.f32.gmra.mxu0 %v480
    %v786 = vpop.f32.mrf.mxu0
    %v787 = vadd.f32 0.0, %v786
    %v788 = vpop.f32.mrf.mxu0
    %789 = vmatprep.mubr.f32.mxu0 0.0
    %790 = vmatmul.mubr.f32.gmra.mxu0 %v482
    %v791 = vpop.f32.mrf.mxu0
    %v792 = vadd.f32 0.0, %v791
    %v793 = vpop.f32.mrf.mxu0
    %794 = vmatprep.mubr.f32.mxu0 0.0
    %795 = vmatmul.mubr.f32.gmra.mxu0 %v484
    %v796 = vpop.f32.mrf.mxu0
    %v797 = vadd.f32 0.0, %v796
    %v798 = vpop.f32.mrf.mxu0
    %799 = vmatprep.mubr.f32.mxu0 0.0
    %800 = vmatmul.mubr.f32.gmra.mxu0 %v486
    %v801 = vpop.f32.mrf.mxu0
    %v802 = vadd.f32 0.0, %v801
    %v803 = vpop.f32.mrf.mxu0
    %804 = vmatprep.mubr.f32.mxu0 0.0
    %805 = vmatmul.mubr.f32.gmra.mxu0 %v488
    %v806 = vpop.f32.mrf.mxu0
    %v807 = vadd.f32 0.0, %v806
    %v808 = vpop.f32.mrf.mxu0
    %809 = vmatprep.mubr.f32.mxu0 0.0
    %810 = vmatmul.mubr.f32.gmra.mxu0 %v490
    %v811 = vpop.f32.mrf.mxu0
    %v812 = vadd.f32 0.0, %v811
    %v813 = vpop.f32.mrf.mxu0
    %814 = vmatprep.mubr.f32.mxu0 0.0
    %815 = vmatmul.mubr.f32.gmra.mxu0 %v492
    %v816 = vpop.f32.mrf.mxu0
    %v817 = vadd.f32 0.0, %v816
    %v818 = vpop.f32.mrf.mxu0
    %819 = vmatprep.mubr.f32.mxu0 0.0
    %820 = vmatmul.mubr.f32.gmra.mxu0 %v494
    %v821 = vpop.f32.mrf.mxu0
    %v822 = vadd.f32 0.0, %v821
    %v823 = vpop.f32.mrf.mxu0
    %824 = vmatprep.mubr.f32.mxu0 0.0
    %825 = vmatmul.mubr.f32.gmra.mxu0 %v496
    %v826 = vpop.f32.mrf.mxu0
    %v827 = vadd.f32 0.0, %v826
    %v828 = vpop.f32.mrf.mxu0
    %829 = vmatprep.mubr.f32.mxu0 0.0
    %830 = vmatmul.mubr.f32.gmra.mxu0 %v498
    %v831 = vpop.f32.mrf.mxu0
    %v832 = vadd.f32 0.0, %v831
    %v833 = vpop.f32.mrf.mxu0
    %834 = vmatprep.mubr.f32.mxu0 0.0
    %835 = vmatmul.mubr.f32.gmra.mxu0 %v500
    %v836 = vpop.f32.mrf.mxu0
    %v837 = vadd.f32 0.0, %v836
    %v838 = vpop.f32.mrf.mxu0
    %839 = vmatprep.mubr.f32.mxu0 0.0
    %840 = vmatmul.mubr.f32.gmra.mxu0 %v502
    %v841 = vpop.f32.mrf.mxu0
    %v842 = vadd.f32 0.0, %v841
    %v843 = vpop.f32.mrf.mxu0
    %844 = vmatprep.mubr.f32.mxu0 0.0
    %845 = vmatmul.mubr.f32.gmra.mxu0 %v504
    %v846 = vpop.f32.mrf.mxu0
    %v847 = vadd.f32 0.0, %v846
    %v848 = vpop.f32.mrf.mxu0
    %849 = vmatprep.mubr.f32.mxu0 0.0
    %850 = vmatmul.mubr.f32.gmra.mxu0 %v506
    %v851 = vpop.f32.mrf.mxu0
    %v852 = vadd.f32 0.0, %v851
    %v853 = vpop.f32.mrf.mxu0
    %854 = vmatprep.mubr.f32.mxu0 0.0
    %855 = vmatmul.mubr.f32.gmra.mxu0 %v508
    %v856 = vpop.f32.mrf.mxu0
    %v857 = vadd.f32 0.0, %v856
    %v858 = vpop.f32.mrf.mxu0
    %859 = vmatprep.mubr.f32.mxu0 0.0
    %860 = vmatmul.mubr.f32.gmra.mxu0 %v510
    %v861 = vpop.f32.mrf.mxu0
    %v862 = vadd.f32 0.0, %v861
    %v863 = vpop.f32.mrf.mxu0
    %864 = vmatprep.mubr.f32.mxu0 0.0
    %865 = vmatmul.mubr.f32.gmra.mxu0 %v512
    %v866 = vpop.f32.mrf.mxu0
    %v867 = vadd.f32 0.0, %v866
    %v868 = vpop.f32.mrf.mxu0
    %869 = vmatprep.mubr.f32.mxu0 0.0
    %870 = vmatmul.mubr.f32.gmra.mxu0 %v514
    %v871 = vpop.f32.mrf.mxu0
    %v872 = vadd.f32 0.0, %v871
    %v873 = vpop.f32.mrf.mxu0
    %874 = vmatprep.mubr.f32.mxu0 0.0
    %875 = vmatmul.mubr.f32.gmra.mxu0 %v516
    %v876 = vpop.f32.mrf.mxu0
    %v877 = vadd.f32 0.0, %v876
    %v878 = vpop.f32.mrf.mxu0
    %879 = vmatprep.mubr.f32.mxu0 0.0
    %880 = vmatmul.mubr.f32.gmra.mxu0 %v518
    %v881 = vpop.f32.mrf.mxu0
    %v882 = vadd.f32 0.0, %v881
    %v883 = vpop.f32.mrf.mxu0
    %884 = vmatprep.mubr.f32.mxu0 0.0
    %885 = vmatmul.mubr.f32.gmra.mxu0 %v520
    %v886 = vpop.f32.mrf.mxu0
    %v887 = vadd.f32 0.0, %v886
    %v888 = vpop.f32.mrf.mxu0
    %889 = vmatprep.mubr.f32.mxu0 0.0
    %890 = vmatmul.mubr.f32.gmra.mxu0 %v522
    %v891 = vpop.f32.mrf.mxu0
    %v892 = vadd.f32 0.0, %v891
    %v893 = vpop.f32.mrf.mxu0
    %894 = vmatprep.mubr.f32.mxu0 0.0
    %895 = vmatmul.mubr.f32.gmra.mxu0 %v524
    %v896 = vpop.f32.mrf.mxu0
    %v897 = vadd.f32 0.0, %v896
    %v898 = vpop.f32.mrf.mxu0
    %899 = vmatprep.mubr.f32.mxu0 0.0
    %900 = vmatmul.mubr.f32.gmra.mxu0 %v526
    %v901 = vpop.f32.mrf.mxu0
    %v902 = vadd.f32 0.0, %v901
    %v903 = vpop.f32.mrf.mxu0
    %904 = vmatprep.mubr.f32.mxu0 0.0
    %905 = vmatmul.mubr.f32.gmra.mxu0 %v528
    %v906 = vpop.f32.mrf.mxu0
    %v907 = vadd.f32 0.0, %v906
    %v908 = vpop.f32.mrf.mxu0
    %909 = vmatprep.mubr.f32.mxu0 0.0
    %910 = vmatmul.mubr.f32.gmra.mxu0 %v530
    %v911 = vpop.f32.mrf.mxu0
    %v912 = vadd.f32 0.0, %v911
    %v913 = vpop.f32.mrf.mxu0
    %914 = vmatprep.mubr.f32.mxu0 0.0
    %915 = vmatmul.mubr.f32.gmra.mxu0 %v532
    %v916 = vpop.f32.mrf.mxu0
    %v917 = vadd.f32 0.0, %v916
    %v918 = vpop.f32.mrf.mxu0
    %919 = vmatprep.mubr.f32.mxu0 0.0
    %920 = vmatmul.mubr.f32.gmra.mxu0 %v534
    %v921 = vpop.f32.mrf.mxu0
    %v922 = vadd.f32 0.0, %v921
    %v923 = vpop.f32.mrf.mxu0
    %924 = vdwg.mxu0
    %v925 = vsel %vm407, %v39, 0
    %v927 = vsel %vm407, %v40, 0
    %v929 = vsel %vm407, %v42, 0
    %v931 = vsel %vm407, %v43, 0
    %v933 = vsel %vm407, %v45, 0
    %v935 = vsel %vm407, %v46, 0
    %v937 = vsel %vm407, %v48, 0
    %v939 = vsel %vm407, %v49, 0
    %v941 = vsel %vm407, %v51, 0
    %v943 = vsel %vm407, %v52, 0
    %v945 = vsel %vm407, %v54, 0
    %v947 = vsel %vm407, %v55, 0
    %v949 = vsel %vm407, %v57, 0
    %v951 = vsel %vm407, %v58, 0
    %v953 = vsel %vm407, %v60, 0
    %v955 = vsel %vm407, %v61, 0
    %v957 = vsel %vm407, %v63, 0
    %v959 = vsel %vm407, %v64, 0
    %v961 = vsel %vm407, %v66, 0
    %v963 = vsel %vm407, %v67, 0
    %v965 = vsel %vm407, %v69, 0
    %v967 = vsel %vm407, %v70, 0
    %v969 = vsel %vm407, %v72, 0
    %v971 = vsel %vm407, %v73, 0
    %v973 = vsel %vm407, %v75, 0
    %v975 = vsel %vm407, %v76, 0
    %v977 = vsel %vm407, %v78, 0
    %v979 = vsel %vm407, %v79, 0
    %v981 = vsel %vm407, %v81, 0
    %v983 = vsel %vm407, %v82, 0
    %v985 = vsel %vm407, %v84, 0
    %v987 = vsel %vm407, %v85, 0
    %v989 = vsel %vm407, %v93, 0
    %v991 = vsel %vm407, %v94, 0
    %v993 = vsel %vm407, %v96, 0
    %v995 = vsel %vm407, %v97, 0
    %v997 = vsel %vm407, %v99, 0
    %v999 = vsel %vm407, %v100, 0
    %v1001 = vsel %vm407, %v102, 0
    %v1003 = vsel %vm407, %v103, 0
    %v1005 = vsel %vm407, %v105, 0
    %v1007 = vsel %vm407, %v106, 0
    %v1009 = vsel %vm407, %v108, 0
    %v1011 = vsel %vm407, %v109, 0
    %v1013 = vsel %vm407, %v111, 0
    %v1015 = vsel %vm407, %v112, 0
    %v1017 = vsel %vm407, %v114, 0
    %v1019 = vsel %vm407, %v115, 0
    %v1021 = vsel %vm407, %v117, 0
    %v1023 = vsel %vm407, %v118, 0
    %v1025 = vsel %vm407, %v120, 0
    %v1027 = vsel %vm407, %v121, 0
    %v1029 = vsel %vm407, %v123, 0
    %v1031 = vsel %vm407, %v124, 0
    %v1033 = vsel %vm407, %v126, 0
    %v1035 = vsel %vm407, %v127, 0
    %v1037 = vsel %vm407, %v129, 0
    %v1039 = vsel %vm407, %v130, 0
    %v1041 = vsel %vm407, %v132, 0
    %v1043 = vsel %vm407, %v133, 0
    %v1045 = vsel %vm407, %v135, 0
    %v1047 = vsel %vm407, %v136, 0
    %v1049 = vsel %vm407, %v138, 0
    %v1051 = vsel %vm407, %v139, 0
    %v1054 = vsel %vm536, %v147, 0
    %1056 = vmatprep.subr.mxu0 0.0
    %1057 = vmatpush1.msra.mxu0 0.0
    %1058 = vmatprep.subr.mxu0 0.0
    %1059 = vmatpush1.msra.mxu0 0.0
    %1060 = vmatprep.subr.mxu0 0.0
    %1061 = vmatpush1.msra.mxu0 0.0
    %1062 = vmatprep.subr.mxu0 0.0
    %1063 = vmatpush1.msra.mxu0 0.0
    %1064 = vmatprep.subr.mxu0 0.0
    %1065 = vmatpush1.msra.mxu0 0.0
    %1066 = vmatprep.subr.mxu0 0.0
    %1067 = vmatpush1.msra.mxu0 0.0
    %1068 = vmatprep.subr.mxu0 0.0
    %1069 = vmatpush1.msra.mxu0 0.0
    %1070 = vmatprep.subr.mxu0 0.0
    %1071 = vmatpush1.msra.mxu0 0.0
    %1072 = vmatprep.subr.mxu0 0.0
    %1073 = vmatpush1.msra.mxu0 0.0
    %1074 = vmatprep.subr.mxu0 0.0
    %1075 = vmatpush1.msra.mxu0 0.0
    %1076 = vmatprep.subr.mxu0 0.0
    %1077 = vmatpush1.msra.mxu0 0.0
    %1078 = vmatprep.subr.mxu0 0.0
    %1079 = vmatpush1.msra.mxu0 0.0
    %1080 = vmatprep.subr.mxu0 0.0
    %1081 = vmatpush1.msra.mxu0 0.0
    %1082 = vmatprep.subr.mxu0 0.0
    %1083 = vmatpush1.msra.mxu0 0.0
    %1084 = vmatprep.subr.mxu0 0.0
    %1085 = vmatpush1.msra.mxu0 0.0
    %1086 = vmatprep.subr.mxu0 0.0
    %1087 = vmatpush1.msra.mxu0 %v1054
    %1088 = vmatprep.subr.mxu0 0.0
    %1089 = vmatpush2.msra.mxu0 0.0
    %1090 = vmatprep.subr.mxu0 0.0
    %1091 = vmatpush2.msra.mxu0 0.0
    %1092 = vmatprep.subr.mxu0 0.0
    %1093 = vmatpush2.msra.mxu0 0.0
    %1094 = vmatprep.subr.mxu0 0.0
    %1095 = vmatpush2.msra.mxu0 0.0
    %1096 = vmatprep.subr.mxu0 0.0
    %1097 = vmatpush2.msra.mxu0 0.0
    %1098 = vmatprep.subr.mxu0 0.0
    %1099 = vmatpush2.msra.mxu0 0.0
    %1100 = vmatprep.subr.mxu0 0.0
    %1101 = vmatpush2.msra.mxu0 0.0
    %1102 = vmatprep.subr.mxu0 0.0
    %1103 = vmatpush2.msra.mxu0 0.0
    %1104 = vmatprep.subr.mxu0 0.0
    %1105 = vmatpush2.msra.mxu0 0.0
    %1106 = vmatprep.subr.mxu0 0.0
    %1107 = vmatpush2.msra.mxu0 0.0
    %1108 = vmatprep.subr.mxu0 0.0
    %1109 = vmatpush2.msra.mxu0 0.0
    %1110 = vmatprep.subr.mxu0 0.0
    %1111 = vmatpush2.msra.mxu0 0.0
    %1112 = vmatprep.subr.mxu0 0.0
    %1113 = vmatpush2.msra.mxu0 0.0
    %1114 = vmatprep.subr.mxu0 0.0
    %1115 = vmatpush2.msra.mxu0 0.0
    %1116 = vmatprep.subr.mxu0 0.0
    %1117 = vmatpush2.msra.mxu0 0.0
    %1118 = vmatprep.subr.mxu0 0.0
    %1119 = vmatpush2.msra.mxu0 0.0
    %1120 = vmatprep.mubr.f32.mxu0 0.0
    %1121 = vmatmul.mubr.f32.gmra.mxu0 %v925
    %v1122 = vpop.f32.mrf.mxu0
    %v1123 = vadd.f32 %v607, %v1122
    %v1124 = vpop.f32.mrf.mxu0
    %1125 = vmatprep.mubr.f32.mxu0 0.0
    %1126 = vmatmul.mubr.f32.gmra.mxu0 %v927
    %v1127 = vpop.f32.mrf.mxu0
    %v1128 = vadd.f32 %v612, %v1127
    %v1129 = vpop.f32.mrf.mxu0
    %1130 = vmatprep.mubr.f32.mxu0 0.0
    %1131 = vmatmul.mubr.f32.gmra.mxu0 %v929
    %v1132 = vpop.f32.mrf.mxu0
    %v1133 = vadd.f32 %v617, %v1132
    %v1134 = vpop.f32.mrf.mxu0
    %1135 = vmatprep.mubr.f32.mxu0 0.0
    %1136 = vmatmul.mubr.f32.gmra.mxu0 %v931
    %v1137 = vpop.f32.mrf.mxu0
    %v1138 = vadd.f32 %v622, %v1137
    %v1139 = vpop.f32.mrf.mxu0
    %1140 = vmatprep.mubr.f32.mxu0 0.0
    %1141 = vmatmul.mubr.f32.gmra.mxu0 %v933
    %v1142 = vpop.f32.mrf.mxu0
    %v1143 = vadd.f32 %v627, %v1142
    %v1144 = vpop.f32.mrf.mxu0
    %1145 = vmatprep.mubr.f32.mxu0 0.0
    %1146 = vmatmul.mubr.f32.gmra.mxu0 %v935
    %v1147 = vpop.f32.mrf.mxu0
    %v1148 = vadd.f32 %v632, %v1147
    %v1149 = vpop.f32.mrf.mxu0
    %1150 = vmatprep.mubr.f32.mxu0 0.0
    %1151 = vmatmul.mubr.f32.gmra.mxu0 %v937
    %v1152 = vpop.f32.mrf.mxu0
    %v1153 = vadd.f32 %v637, %v1152
    %v1154 = vpop.f32.mrf.mxu0
    %1155 = vmatprep.mubr.f32.mxu0 0.0
    %1156 = vmatmul.mubr.f32.gmra.mxu0 %v939
    %v1157 = vpop.f32.mrf.mxu0
    %v1158 = vadd.f32 %v642, %v1157
    %v1159 = vpop.f32.mrf.mxu0
    %1160 = vmatprep.mubr.f32.mxu0 0.0
    %1161 = vmatmul.mubr.f32.gmra.mxu0 %v941
    %v1162 = vpop.f32.mrf.mxu0
    %v1163 = vadd.f32 %v647, %v1162
    %v1164 = vpop.f32.mrf.mxu0
    %1165 = vmatprep.mubr.f32.mxu0 0.0
    %1166 = vmatmul.mubr.f32.gmra.mxu0 %v943
    %v1167 = vpop.f32.mrf.mxu0
    %v1168 = vadd.f32 %v652, %v1167
    %v1169 = vpop.f32.mrf.mxu0
    %1170 = vmatprep.mubr.f32.mxu0 0.0
    %1171 = vmatmul.mubr.f32.gmra.mxu0 %v945
    %v1172 = vpop.f32.mrf.mxu0
    %v1173 = vadd.f32 %v657, %v1172
    %v1174 = vpop.f32.mrf.mxu0
    %1175 = vmatprep.mubr.f32.mxu0 0.0
    %1176 = vmatmul.mubr.f32.gmra.mxu0 %v947
    %v1177 = vpop.f32.mrf.mxu0
    %v1178 = vadd.f32 %v662, %v1177
    %v1179 = vpop.f32.mrf.mxu0
    %1180 = vmatprep.mubr.f32.mxu0 0.0
    %1181 = vmatmul.mubr.f32.gmra.mxu0 %v949
    %v1182 = vpop.f32.mrf.mxu0
    %v1183 = vadd.f32 %v667, %v1182
    %v1184 = vpop.f32.mrf.mxu0
    %1185 = vmatprep.mubr.f32.mxu0 0.0
    %1186 = vmatmul.mubr.f32.gmra.mxu0 %v951
    %v1187 = vpop.f32.mrf.mxu0
    %v1188 = vadd.f32 %v672, %v1187
    %v1189 = vpop.f32.mrf.mxu0
    %1190 = vmatprep.mubr.f32.mxu0 0.0
    %1191 = vmatmul.mubr.f32.gmra.mxu0 %v953
    %v1192 = vpop.f32.mrf.mxu0
    %v1193 = vadd.f32 %v677, %v1192
    %v1194 = vpop.f32.mrf.mxu0
    %1195 = vmatprep.mubr.f32.mxu0 0.0
    %1196 = vmatmul.mubr.f32.gmra.mxu0 %v955
    %v1197 = vpop.f32.mrf.mxu0
    %v1198 = vadd.f32 %v682, %v1197
    %v1199 = vpop.f32.mrf.mxu0
    %1200 = vmatprep.mubr.f32.mxu0 0.0
    %1201 = vmatmul.mubr.f32.gmra.mxu0 %v957
    %v1202 = vpop.f32.mrf.mxu0
    %v1203 = vadd.f32 %v687, %v1202
    %v1204 = vpop.f32.mrf.mxu0
    %1205 = vmatprep.mubr.f32.mxu0 0.0
    %1206 = vmatmul.mubr.f32.gmra.mxu0 %v959
    %v1207 = vpop.f32.mrf.mxu0
    %v1208 = vadd.f32 %v692, %v1207
    %v1209 = vpop.f32.mrf.mxu0
    %1210 = vmatprep.mubr.f32.mxu0 0.0
    %1211 = vmatmul.mubr.f32.gmra.mxu0 %v961
    %v1212 = vpop.f32.mrf.mxu0
    %v1213 = vadd.f32 %v697, %v1212
    %v1214 = vpop.f32.mrf.mxu0
    %1215 = vmatprep.mubr.f32.mxu0 0.0
    %1216 = vmatmul.mubr.f32.gmra.mxu0 %v963
    %v1217 = vpop.f32.mrf.mxu0
    %v1218 = vadd.f32 %v702, %v1217
    %v1219 = vpop.f32.mrf.mxu0
    %1220 = vmatprep.mubr.f32.mxu0 0.0
    %1221 = vmatmul.mubr.f32.gmra.mxu0 %v965
    %v1222 = vpop.f32.mrf.mxu0
    %v1223 = vadd.f32 %v707, %v1222
    %v1224 = vpop.f32.mrf.mxu0
    %1225 = vmatprep.mubr.f32.mxu0 0.0
    %1226 = vmatmul.mubr.f32.gmra.mxu0 %v967
    %v1227 = vpop.f32.mrf.mxu0
    %v1228 = vadd.f32 %v712, %v1227
    %v1229 = vpop.f32.mrf.mxu0
    %1230 = vmatprep.mubr.f32.mxu0 0.0
    %1231 = vmatmul.mubr.f32.gmra.mxu0 %v969
    %v1232 = vpop.f32.mrf.mxu0
    %v1233 = vadd.f32 %v717, %v1232
    %v1234 = vpop.f32.mrf.mxu0
    %1235 = vmatprep.mubr.f32.mxu0 0.0
    %1236 = vmatmul.mubr.f32.gmra.mxu0 %v971
    %v1237 = vpop.f32.mrf.mxu0
    %v1238 = vadd.f32 %v722, %v1237
    %v1239 = vpop.f32.mrf.mxu0
    %1240 = vmatprep.mubr.f32.mxu0 0.0
    %1241 = vmatmul.mubr.f32.gmra.mxu0 %v973
    %v1242 = vpop.f32.mrf.mxu0
    %v1243 = vadd.f32 %v727, %v1242
    %v1244 = vpop.f32.mrf.mxu0
    %1245 = vmatprep.mubr.f32.mxu0 0.0
    %1246 = vmatmul.mubr.f32.gmra.mxu0 %v975
    %v1247 = vpop.f32.mrf.mxu0
    %v1248 = vadd.f32 %v732, %v1247
    %v1249 = vpop.f32.mrf.mxu0
    %1250 = vmatprep.mubr.f32.mxu0 0.0
    %1251 = vmatmul.mubr.f32.gmra.mxu0 %v977
    %v1252 = vpop.f32.mrf.mxu0
    %v1253 = vadd.f32 %v737, %v1252
    %v1254 = vpop.f32.mrf.mxu0
    %1255 = vmatprep.mubr.f32.mxu0 0.0
    %1256 = vmatmul.mubr.f32.gmra.mxu0 %v979
    %v1257 = vpop.f32.mrf.mxu0
    %v1258 = vadd.f32 %v742, %v1257
    %v1259 = vpop.f32.mrf.mxu0
    %1260 = vmatprep.mubr.f32.mxu0 0.0
    %1261 = vmatmul.mubr.f32.gmra.mxu0 %v981
    %v1262 = vpop.f32.mrf.mxu0
    %v1263 = vadd.f32 %v747, %v1262
    %v1264 = vpop.f32.mrf.mxu0
    %1265 = vmatprep.mubr.f32.mxu0 0.0
    %1266 = vmatmul.mubr.f32.gmra.mxu0 %v983
    %v1267 = vpop.f32.mrf.mxu0
    %v1268 = vadd.f32 %v752, %v1267
    %v1269 = vpop.f32.mrf.mxu0
    %1270 = vmatprep.mubr.f32.mxu0 0.0
    %1271 = vmatmul.mubr.f32.gmra.mxu0 %v985
    %v1272 = vpop.f32.mrf.mxu0
    %v1273 = vadd.f32 %v757, %v1272
    %v1274 = vpop.f32.mrf.mxu0
    %1275 = vmatprep.mubr.f32.mxu0 0.0
    %1276 = vmatmul.mubr.f32.gmra.mxu0 %v987
    %v1277 = vpop.f32.mrf.mxu0
    %v1278 = vadd.f32 %v762, %v1277
    %v1279 = vpop.f32.mrf.mxu0
    %1280 = vmatprep.mubr.f32.mxu0 0.0
    %1281 = vmatmul.mubr.f32.gmra.mxu0 %v989
    %v1282 = vpop.f32.mrf.mxu0
    %v1283 = vadd.f32 %v767, %v1282
    %v1284 = vpop.f32.mrf.mxu0
    %1285 = vmatprep.mubr.f32.mxu0 0.0
    %1286 = vmatmul.mubr.f32.gmra.mxu0 %v991
    %v1287 = vpop.f32.mrf.mxu0
    %v1288 = vadd.f32 %v772, %v1287
    %v1289 = vpop.f32.mrf.mxu0
    %1290 = vmatprep.mubr.f32.mxu0 0.0
    %1291 = vmatmul.mubr.f32.gmra.mxu0 %v993
    %v1292 = vpop.f32.mrf.mxu0
    %v1293 = vadd.f32 %v777, %v1292
    %v1294 = vpop.f32.mrf.mxu0
    %1295 = vmatprep.mubr.f32.mxu0 0.0
    %1296 = vmatmul.mubr.f32.gmra.mxu0 %v995
    %v1297 = vpop.f32.mrf.mxu0
    %v1298 = vadd.f32 %v782, %v1297
    %v1299 = vpop.f32.mrf.mxu0
    %1300 = vmatprep.mubr.f32.mxu0 0.0
    %1301 = vmatmul.mubr.f32.gmra.mxu0 %v997
    %v1302 = vpop.f32.mrf.mxu0
    %v1303 = vadd.f32 %v787, %v1302
    %v1304 = vpop.f32.mrf.mxu0
    %1305 = vmatprep.mubr.f32.mxu0 0.0
    %1306 = vmatmul.mubr.f32.gmra.mxu0 %v999
    %v1307 = vpop.f32.mrf.mxu0
    %v1308 = vadd.f32 %v792, %v1307
    %v1309 = vpop.f32.mrf.mxu0
    %1310 = vmatprep.mubr.f32.mxu0 0.0
    %1311 = vmatmul.mubr.f32.gmra.mxu0 %v1001
    %v1312 = vpop.f32.mrf.mxu0
    %v1313 = vadd.f32 %v797, %v1312
    %v1314 = vpop.f32.mrf.mxu0
    %1315 = vmatprep.mubr.f32.mxu0 0.0
    %1316 = vmatmul.mubr.f32.gmra.mxu0 %v1003
    %v1317 = vpop.f32.mrf.mxu0
    %v1318 = vadd.f32 %v802, %v1317
    %v1319 = vpop.f32.mrf.mxu0
    %1320 = vmatprep.mubr.f32.mxu0 0.0
    %1321 = vmatmul.mubr.f32.gmra.mxu0 %v1005
    %v1322 = vpop.f32.mrf.mxu0
    %v1323 = vadd.f32 %v807, %v1322
    %v1324 = vpop.f32.mrf.mxu0
    %1325 = vmatprep.mubr.f32.mxu0 0.0
    %1326 = vmatmul.mubr.f32.gmra.mxu0 %v1007
    %v1327 = vpop.f32.mrf.mxu0
    %v1328 = vadd.f32 %v812, %v1327
    %v1329 = vpop.f32.mrf.mxu0
    %1330 = vmatprep.mubr.f32.mxu0 0.0
    %1331 = vmatmul.mubr.f32.gmra.mxu0 %v1009
    %v1332 = vpop.f32.mrf.mxu0
    %v1333 = vadd.f32 %v817, %v1332
    %v1334 = vpop.f32.mrf.mxu0
    %1335 = vmatprep.mubr.f32.mxu0 0.0
    %1336 = vmatmul.mubr.f32.gmra.mxu0 %v1011
    %v1337 = vpop.f32.mrf.mxu0
    %v1338 = vadd.f32 %v822, %v1337
    %v1339 = vpop.f32.mrf.mxu0
    %1340 = vmatprep.mubr.f32.mxu0 0.0
    %1341 = vmatmul.mubr.f32.gmra.mxu0 %v1013
    %v1342 = vpop.f32.mrf.mxu0
    %v1343 = vadd.f32 %v827, %v1342
    %v1344 = vpop.f32.mrf.mxu0
    %1345 = vmatprep.mubr.f32.mxu0 0.0
    %1346 = vmatmul.mubr.f32.gmra.mxu0 %v1015
    %v1347 = vpop.f32.mrf.mxu0
    %v1348 = vadd.f32 %v832, %v1347
    %v1349 = vpop.f32.mrf.mxu0
    %1350 = vmatprep.mubr.f32.mxu0 0.0
    %1351 = vmatmul.mubr.f32.gmra.mxu0 %v1017
    %v1352 = vpop.f32.mrf.mxu0
    %v1353 = vadd.f32 %v837, %v1352
    %v1354 = vpop.f32.mrf.mxu0
    %1355 = vmatprep.mubr.f32.mxu0 0.0
    %1356 = vmatmul.mubr.f32.gmra.mxu0 %v1019
    %v1357 = vpop.f32.mrf.mxu0
    %v1358 = vadd.f32 %v842, %v1357
    %v1359 = vpop.f32.mrf.mxu0
    %1360 = vmatprep.mubr.f32.mxu0 0.0
    %1361 = vmatmul.mubr.f32.gmra.mxu0 %v1021
    %v1362 = vpop.f32.mrf.mxu0
    %v1363 = vadd.f32 %v847, %v1362
    %v1364 = vpop.f32.mrf.mxu0
    %1365 = vmatprep.mubr.f32.mxu0 0.0
    %1366 = vmatmul.mubr.f32.gmra.mxu0 %v1023
    %v1367 = vpop.f32.mrf.mxu0
    %v1368 = vadd.f32 %v852, %v1367
    %v1369 = vpop.f32.mrf.mxu0
    %1370 = vmatprep.mubr.f32.mxu0 0.0
    %1371 = vmatmul.mubr.f32.gmra.mxu0 %v1025
    %v1372 = vpop.f32.mrf.mxu0
    %v1373 = vadd.f32 %v857, %v1372
    %v1374 = vpop.f32.mrf.mxu0
    %1375 = vmatprep.mubr.f32.mxu0 0.0
    %1376 = vmatmul.mubr.f32.gmra.mxu0 %v1027
    %v1377 = vpop.f32.mrf.mxu0
    %v1378 = vadd.f32 %v862, %v1377
    %v1379 = vpop.f32.mrf.mxu0
    %1380 = vmatprep.mubr.f32.mxu0 0.0
    %1381 = vmatmul.mubr.f32.gmra.mxu0 %v1029
    %v1382 = vpop.f32.mrf.mxu0
    %v1383 = vadd.f32 %v867, %v1382
    %v1384 = vpop.f32.mrf.mxu0
    %1385 = vmatprep.mubr.f32.mxu0 0.0
    %1386 = vmatmul.mubr.f32.gmra.mxu0 %v1031
    %v1387 = vpop.f32.mrf.mxu0
    %v1388 = vadd.f32 %v872, %v1387
    %v1389 = vpop.f32.mrf.mxu0
    %1390 = vmatprep.mubr.f32.mxu0 0.0
    %1391 = vmatmul.mubr.f32.gmra.mxu0 %v1033
    %v1392 = vpop.f32.mrf.mxu0
    %v1393 = vadd.f32 %v877, %v1392
    %v1394 = vpop.f32.mrf.mxu0
    %1395 = vmatprep.mubr.f32.mxu0 0.0
    %1396 = vmatmul.mubr.f32.gmra.mxu0 %v1035
    %v1397 = vpop.f32.mrf.mxu0
    %v1398 = vadd.f32 %v882, %v1397
    %v1399 = vpop.f32.mrf.mxu0
    %1400 = vmatprep.mubr.f32.mxu0 0.0
    %1401 = vmatmul.mubr.f32.gmra.mxu0 %v1037
    %v1402 = vpop.f32.mrf.mxu0
    %v1403 = vadd.f32 %v887, %v1402
    %v1404 = vpop.f32.mrf.mxu0
    %1405 = vmatprep.mubr.f32.mxu0 0.0
    %1406 = vmatmul.mubr.f32.gmra.mxu0 %v1039
    %v1407 = vpop.f32.mrf.mxu0
    %v1408 = vadd.f32 %v892, %v1407
    %v1409 = vpop.f32.mrf.mxu0
    %1410 = vmatprep.mubr.f32.mxu0 0.0
    %1411 = vmatmul.mubr.f32.gmra.mxu0 %v1041
    %v1412 = vpop.f32.mrf.mxu0
    %v1413 = vadd.f32 %v897, %v1412
    %v1414 = vpop.f32.mrf.mxu0
    %1415 = vmatprep.mubr.f32.mxu0 0.0
    %1416 = vmatmul.mubr.f32.gmra.mxu0 %v1043
    %v1417 = vpop.f32.mrf.mxu0
    %v1418 = vadd.f32 %v902, %v1417
    %v1419 = vpop.f32.mrf.mxu0
    %1420 = vmatprep.mubr.f32.mxu0 0.0
    %1421 = vmatmul.mubr.f32.gmra.mxu0 %v1045
    %v1422 = vpop.f32.mrf.mxu0
    %v1423 = vadd.f32 %v907, %v1422
    %v1424 = vpop.f32.mrf.mxu0
    %1425 = vmatprep.mubr.f32.mxu0 0.0
    %1426 = vmatmul.mubr.f32.gmra.mxu0 %v1047
    %v1427 = vpop.f32.mrf.mxu0
    %v1428 = vadd.f32 %v912, %v1427
    %v1429 = vpop.f32.mrf.mxu0
    %1430 = vmatprep.mubr.f32.mxu0 0.0
    %1431 = vmatmul.mubr.f32.gmra.mxu0 %v1049
    %v1432 = vpop.f32.mrf.mxu0
    %v1433 = vadd.f32 %v917, %v1432
    %v1434 = vpop.f32.mrf.mxu0
    %1435 = vmatprep.mubr.f32.mxu0 0.0
    %1436 = vmatmul.mubr.f32.gmra.mxu0 %v1051
    %v1437 = vpop.f32.mrf.mxu0
    %v1438 = vadd.f32 %v922, %v1437
    %v1439 = vpop.f32.mrf.mxu0
    %1440 = vdwg.mxu0
    %vm1441 = vcmask 1045504
    %v1442 = vrot.slane %v39, 2
    %v1443 = vrot.slane %v40, 2
    %v1444 = vsel %vm1441, %v1442, %v1443
    %v1445 = vrot.slane %v41, 2
    %v1446 = vsel %vm1441, %v1443, %v1445
    %v1447 = vrot.slane %v42, 2
    %v1448 = vrot.slane %v43, 2
    %v1449 = vsel %vm1441, %v1447, %v1448
    %v1450 = vrot.slane %v44, 2
    %v1451 = vsel %vm1441, %v1448, %v1450
    %v1452 = vrot.slane %v45, 2
    %v1453 = vrot.slane %v46, 2
    %v1454 = vsel %vm1441, %v1452, %v1453
    %v1455 = vrot.slane %v47, 2
    %v1456 = vsel %vm1441, %v1453, %v1455
    %v1457 = vrot.slane %v48, 2
    %v1458 = vrot.slane %v49, 2
    %v1459 = vsel %vm1441, %v1457, %v1458
    %v1460 = vrot.slane %v50, 2
    %v1461 = vsel %vm1441, %v1458, %v1460
    %v1462 = vrot.slane %v51, 2
    %v1463 = vrot.slane %v52, 2
    %v1464 = vsel %vm1441, %v1462, %v1463
    %v1465 = vrot.slane %v53, 2
    %v1466 = vsel %vm1441, %v1463, %v1465
    %v1467 = vrot.slane %v54, 2
    %v1468 = vrot.slane %v55, 2
    %v1469 = vsel %vm1441, %v1467, %v1468
    %v1470 = vrot.slane %v56, 2
    %v1471 = vsel %vm1441, %v1468, %v1470
    %v1472 = vrot.slane %v57, 2
    %v1473 = vrot.slane %v58, 2
    %v1474 = vsel %vm1441, %v1472, %v1473
    %v1475 = vrot.slane %v59, 2
    %v1476 = vsel %vm1441, %v1473, %v1475
    %v1477 = vrot.slane %v60, 2
    %v1478 = vrot.slane %v61, 2
    %v1479 = vsel %vm1441, %v1477, %v1478
    %v1480 = vrot.slane %v62, 2
    %v1481 = vsel %vm1441, %v1478, %v1480
    %v1482 = vrot.slane %v63, 2
    %v1483 = vrot.slane %v64, 2
    %v1484 = vsel %vm1441, %v1482, %v1483
    %v1485 = vrot.slane %v65, 2
    %v1486 = vsel %vm1441, %v1483, %v1485
    %v1487 = vrot.slane %v66, 2
    %v1488 = vrot.slane %v67, 2
    %v1489 = vsel %vm1441, %v1487, %v1488
    %v1490 = vrot.slane %v68, 2
    %v1491 = vsel %vm1441, %v1488, %v1490
    %v1492 = vrot.slane %v69, 2
    %v1493 = vrot.slane %v70, 2
    %v1494 = vsel %vm1441, %v1492, %v1493
    %v1495 = vrot.slane %v71, 2
    %v1496 = vsel %vm1441, %v1493, %v1495
    %v1497 = vrot.slane %v72, 2
    %v1498 = vrot.slane %v73, 2
    %v1499 = vsel %vm1441, %v1497, %v1498
    %v1500 = vrot.slane %v74, 2
    %v1501 = vsel %vm1441, %v1498, %v1500
    %v1502 = vrot.slane %v75, 2
    %v1503 = vrot.slane %v76, 2
    %v1504 = vsel %vm1441, %v1502, %v1503
    %v1505 = vrot.slane %v77, 2
    %v1506 = vsel %vm1441, %v1503, %v1505
    %v1507 = vrot.slane %v78, 2
    %v1508 = vrot.slane %v79, 2
    %v1509 = vsel %vm1441, %v1507, %v1508
    %v1510 = vrot.slane %v80, 2
    %v1511 = vsel %vm1441, %v1508, %v1510
    %v1512 = vrot.slane %v81, 2
    %v1513 = vrot.slane %v82, 2
    %v1514 = vsel %vm1441, %v1512, %v1513
    %v1515 = vrot.slane %v83, 2
    %v1516 = vsel %vm1441, %v1513, %v1515
    %v1517 = vrot.slane %v84, 2
    %v1518 = vrot.slane %v85, 2
    %v1519 = vsel %vm1441, %v1517, %v1518
    %v1520 = vrot.slane %v86, 2
    %v1521 = vsel %vm1441, %v1518, %v1520
    %v1522 = vrot.slane %v93, 2
    %v1523 = vrot.slane %v94, 2
    %v1524 = vsel %vm1441, %v1522, %v1523
    %v1525 = vrot.slane %v95, 2
    %v1526 = vsel %vm1441, %v1523, %v1525
    %v1527 = vrot.slane %v96, 2
    %v1528 = vrot.slane %v97, 2
    %v1529 = vsel %vm1441, %v1527, %v1528
    %v1530 = vrot.slane %v98, 2
    %v1531 = vsel %vm1441, %v1528, %v1530
    %v1532 = vrot.slane %v99, 2
    %v1533 = vrot.slane %v100, 2
    %v1534 = vsel %vm1441, %v1532, %v1533
    %v1535 = vrot.slane %v101, 2
    %v1536 = vsel %vm1441, %v1533, %v1535
    %v1537 = vrot.slane %v102, 2
    %v1538 = vrot.slane %v103, 2
    %v1539 = vsel %vm1441, %v1537, %v1538
    %v1540 = vrot.slane %v104, 2
    %v1541 = vsel %vm1441, %v1538, %v1540
    %v1542 = vrot.slane %v105, 2
    %v1543 = vrot.slane %v106, 2
    %v1544 = vsel %vm1441, %v1542, %v1543
    %v1545 = vrot.slane %v107, 2
    %v1546 = vsel %vm1441, %v1543, %v1545
    %v1547 = vrot.slane %v108, 2
    %v1548 = vrot.slane %v109, 2
    %v1549 = vsel %vm1441, %v1547, %v1548
    %v1550 = vrot.slane %v110, 2
    %v1551 = vsel %vm1441, %v1548, %v1550
    %v1552 = vrot.slane %v111, 2
    %v1553 = vrot.slane %v112, 2
    %v1554 = vsel %vm1441, %v1552, %v1553
    %v1555 = vrot.slane %v113, 2
    %v1556 = vsel %vm1441, %v1553, %v1555
    %v1557 = vrot.slane %v114, 2
    %v1558 = vrot.slane %v115, 2
    %v1559 = vsel %vm1441, %v1557, %v1558
    %v1560 = vrot.slane %v116, 2
    %v1561 = vsel %vm1441, %v1558, %v1560
    %v1562 = vrot.slane %v117, 2
    %v1563 = vrot.slane %v118, 2
    %v1564 = vsel %vm1441, %v1562, %v1563
    %v1565 = vrot.slane %v119, 2
    %v1566 = vsel %vm1441, %v1563, %v1565
    %v1567 = vrot.slane %v120, 2
    %v1568 = vrot.slane %v121, 2
    %v1569 = vsel %vm1441, %v1567, %v1568
    %v1570 = vrot.slane %v122, 2
    %v1571 = vsel %vm1441, %v1568, %v1570
    %v1572 = vrot.slane %v123, 2
    %v1573 = vrot.slane %v124, 2
    %v1574 = vsel %vm1441, %v1572, %v1573
    %v1575 = vrot.slane %v125, 2
    %v1576 = vsel %vm1441, %v1573, %v1575
    %v1577 = vrot.slane %v126, 2
    %v1578 = vrot.slane %v127, 2
    %v1579 = vsel %vm1441, %v1577, %v1578
    %v1580 = vrot.slane %v128, 2
    %v1581 = vsel %vm1441, %v1578, %v1580
    %v1582 = vrot.slane %v129, 2
    %v1583 = vrot.slane %v130, 2
    %v1584 = vsel %vm1441, %v1582, %v1583
    %v1585 = vrot.slane %v131, 2
    %v1586 = vsel %vm1441, %v1583, %v1585
    %v1587 = vrot.slane %v132, 2
    %v1588 = vrot.slane %v133, 2
    %v1589 = vsel %vm1441, %v1587, %v1588
    %v1590 = vrot.slane %v134, 2
    %v1591 = vsel %vm1441, %v1588, %v1590
    %v1592 = vrot.slane %v135, 2
    %v1593 = vrot.slane %v136, 2
    %v1594 = vsel %vm1441, %v1592, %v1593
    %v1595 = vrot.slane %v137, 2
    %v1596 = vsel %vm1441, %v1593, %v1595
    %v1597 = vrot.slane %v138, 2
    %v1598 = vrot.slane %v139, 2
    %v1599 = vsel %vm1441, %v1597, %v1598
    %v1600 = vrot.slane %v140, 2
    %v1601 = vsel %vm1441, %v1598, %v1600
    %s1602 = scalar_lea.vmem %s1, 8
    %v1603 = vld [vmem:[%s1602] sm:$0xf]
    %v1604 = vsel %vm407, %v1444, 0
    %v1606 = vsel %vm407, %v1446, 0
    %v1608 = vsel %vm407, %v1449, 0
    %v1610 = vsel %vm407, %v1451, 0
    %v1612 = vsel %vm407, %v1454, 0
    %v1614 = vsel %vm407, %v1456, 0
    %v1616 = vsel %vm407, %v1459, 0
    %v1618 = vsel %vm407, %v1461, 0
    %v1620 = vsel %vm407, %v1464, 0
    %v1622 = vsel %vm407, %v1466, 0
    %v1624 = vsel %vm407, %v1469, 0
    %v1626 = vsel %vm407, %v1471, 0
    %v1628 = vsel %vm407, %v1474, 0
    %v1630 = vsel %vm407, %v1476, 0
    %v1632 = vsel %vm407, %v1479, 0
    %v1634 = vsel %vm407, %v1481, 0
    %v1636 = vsel %vm407, %v1484, 0
    %v1638 = vsel %vm407, %v1486, 0
    %v1640 = vsel %vm407, %v1489, 0
    %v1642 = vsel %vm407, %v1491, 0
    %v1644 = vsel %vm407, %v1494, 0
    %v1646 = vsel %vm407, %v1496, 0
    %v1648 = vsel %vm407, %v1499, 0
    %v1650 = vsel %vm407, %v1501, 0
    %v1652 = vsel %vm407, %v1504, 0
    %v1654 = vsel %vm407, %v1506, 0
    %v1656 = vsel %vm407, %v1509, 0
    %v1658 = vsel %vm407, %v1511, 0
    %v1660 = vsel %vm407, %v1514, 0
    %v1662 = vsel %vm407, %v1516, 0
    %v1664 = vsel %vm407, %v1519, 0
    %v1666 = vsel %vm407, %v1521, 0
    %v1668 = vsel %vm407, %v1524, 0
    %v1670 = vsel %vm407, %v1526, 0
    %v1672 = vsel %vm407, %v1529, 0
    %v1674 = vsel %vm407, %v1531, 0
    %v1676 = vsel %vm407, %v1534, 0
    %v1678 = vsel %vm407, %v1536, 0
    %v1680 = vsel %vm407, %v1539, 0
    %v1682 = vsel %vm407, %v1541, 0
    %v1684 = vsel %vm407, %v1544, 0
    %v1686 = vsel %vm407, %v1546, 0
    %v1688 = vsel %vm407, %v1549, 0
    %v1690 = vsel %vm407, %v1551, 0
    %v1692 = vsel %vm407, %v1554, 0
    %v1694 = vsel %vm407, %v1556, 0
    %v1696 = vsel %vm407, %v1559, 0
    %v1698 = vsel %vm407, %v1561, 0
    %v1700 = vsel %vm407, %v1564, 0
    %v1702 = vsel %vm407, %v1566, 0
    %v1704 = vsel %vm407, %v1569, 0
    %v1706 = vsel %vm407, %v1571, 0
    %v1708 = vsel %vm407, %v1574, 0
    %v1710 = vsel %vm407, %v1576, 0
    %v1712 = vsel %vm407, %v1579, 0
    %v1714 = vsel %vm407, %v1581, 0
    %v1716 = vsel %vm407, %v1584, 0
    %v1718 = vsel %vm407, %v1586, 0
    %v1720 = vsel %vm407, %v1589, 0
    %v1722 = vsel %vm407, %v1591, 0
    %v1724 = vsel %vm407, %v1594, 0
    %v1726 = vsel %vm407, %v1596, 0
    %v1728 = vsel %vm407, %v1599, 0
    %v1730 = vsel %vm407, %v1601, 0
    %v1733 = vsel %vm536, %v1603, 0
    %1735 = vmatprep.subr.mxu0 0.0
    %1736 = vmatpush1.msra.mxu0 0.0
    %1737 = vmatprep.subr.mxu0 0.0
    %1738 = vmatpush1.msra.mxu0 0.0
    %1739 = vmatprep.subr.mxu0 0.0
    %1740 = vmatpush1.msra.mxu0 0.0
    %1741 = vmatprep.subr.mxu0 0.0
    %1742 = vmatpush1.msra.mxu0 0.0
    %1743 = vmatprep.subr.mxu0 0.0
    %1744 = vmatpush1.msra.mxu0 0.0
    %1745 = vmatprep.subr.mxu0 0.0
    %1746 = vmatpush1.msra.mxu0 0.0
    %1747 = vmatprep.subr.mxu0 0.0
    %1748 = vmatpush1.msra.mxu0 0.0
    %1749 = vmatprep.subr.mxu0 0.0
    %1750 = vmatpush1.msra.mxu0 0.0
    %1751 = vmatprep.subr.mxu0 0.0
    %1752 = vmatpush1.msra.mxu0 0.0
    %1753 = vmatprep.subr.mxu0 0.0
    %1754 = vmatpush1.msra.mxu0 0.0
    %1755 = vmatprep.subr.mxu0 0.0
    %1756 = vmatpush1.msra.mxu0 0.0
    %1757 = vmatprep.subr.mxu0 0.0
    %1758 = vmatpush1.msra.mxu0 0.0
    %1759 = vmatprep.subr.mxu0 0.0
    %1760 = vmatpush1.msra.mxu0 0.0
    %1761 = vmatprep.subr.mxu0 0.0
    %1762 = vmatpush1.msra.mxu0 0.0
    %1763 = vmatprep.subr.mxu0 0.0
    %1764 = vmatpush1.msra.mxu0 0.0
    %1765 = vmatprep.subr.mxu0 0.0
    %1766 = vmatpush1.msra.mxu0 %v1733
    %1767 = vmatprep.subr.mxu0 0.0
    %1768 = vmatpush2.msra.mxu0 0.0
    %1769 = vmatprep.subr.mxu0 0.0
    %1770 = vmatpush2.msra.mxu0 0.0
    %1771 = vmatprep.subr.mxu0 0.0
    %1772 = vmatpush2.msra.mxu0 0.0
    %1773 = vmatprep.subr.mxu0 0.0
    %1774 = vmatpush2.msra.mxu0 0.0
    %1775 = vmatprep.subr.mxu0 0.0
    %1776 = vmatpush2.msra.mxu0 0.0
    %1777 = vmatprep.subr.mxu0 0.0
    %1778 = vmatpush2.msra.mxu0 0.0
    %1779 = vmatprep.subr.mxu0 0.0
    %1780 = vmatpush2.msra.mxu0 0.0
    %1781 = vmatprep.subr.mxu0 0.0
    %1782 = vmatpush2.msra.mxu0 0.0
    %1783 = vmatprep.subr.mxu0 0.0
    %1784 = vmatpush2.msra.mxu0 0.0
    %1785 = vmatprep.subr.mxu0 0.0
    %1786 = vmatpush2.msra.mxu0 0.0
    %1787 = vmatprep.subr.mxu0 0.0
    %1788 = vmatpush2.msra.mxu0 0.0
    %1789 = vmatprep.subr.mxu0 0.0
    %1790 = vmatpush2.msra.mxu0 0.0
    %1791 = vmatprep.subr.mxu0 0.0
    %1792 = vmatpush2.msra.mxu0 0.0
    %1793 = vmatprep.subr.mxu0 0.0
    %1794 = vmatpush2.msra.mxu0 0.0
    %1795 = vmatprep.subr.mxu0 0.0
    %1796 = vmatpush2.msra.mxu0 0.0
    %1797 = vmatprep.subr.mxu0 0.0
    %1798 = vmatpush2.msra.mxu0 0.0
    %1799 = vmatprep.mubr.f32.mxu0 0.0
    %1800 = vmatmul.mubr.f32.gmra.mxu0 %v1604
    %v1801 = vpop.f32.mrf.mxu0
    %v1802 = vadd.f32 0.0, %v1801
    %v1803 = vpop.f32.mrf.mxu0
    %1804 = vmatprep.mubr.f32.mxu0 0.0
    %1805 = vmatmul.mubr.f32.gmra.mxu0 %v1606
    %v1806 = vpop.f32.mrf.mxu0
    %v1807 = vadd.f32 0.0, %v1806
    %v1808 = vpop.f32.mrf.mxu0
    %1809 = vmatprep.mubr.f32.mxu0 0.0
    %1810 = vmatmul.mubr.f32.gmra.mxu0 %v1608
    %v1811 = vpop.f32.mrf.mxu0
    %v1812 = vadd.f32 0.0, %v1811
    %v1813 = vpop.f32.mrf.mxu0
    %1814 = vmatprep.mubr.f32.mxu0 0.0
    %1815 = vmatmul.mubr.f32.gmra.mxu0 %v1610
    %v1816 = vpop.f32.mrf.mxu0
    %v1817 = vadd.f32 0.0, %v1816
    %v1818 = vpop.f32.mrf.mxu0
    %1819 = vmatprep.mubr.f32.mxu0 0.0
    %1820 = vmatmul.mubr.f32.gmra.mxu0 %v1612
    %v1821 = vpop.f32.mrf.mxu0
    %v1822 = vadd.f32 0.0, %v1821
    %v1823 = vpop.f32.mrf.mxu0
    %1824 = vmatprep.mubr.f32.mxu0 0.0
    %1825 = vmatmul.mubr.f32.gmra.mxu0 %v1614
    %v1826 = vpop.f32.mrf.mxu0
    %v1827 = vadd.f32 0.0, %v1826
    %v1828 = vpop.f32.mrf.mxu0
    %1829 = vmatprep.mubr.f32.mxu0 0.0
    %1830 = vmatmul.mubr.f32.gmra.mxu0 %v1616
    %v1831 = vpop.f32.mrf.mxu0
    %v1832 = vadd.f32 0.0, %v1831
    %v1833 = vpop.f32.mrf.mxu0
    %1834 = vmatprep.mubr.f32.mxu0 0.0
    %1835 = vmatmul.mubr.f32.gmra.mxu0 %v1618
    %v1836 = vpop.f32.mrf.mxu0
    %v1837 = vadd.f32 0.0, %v1836
    %v1838 = vpop.f32.mrf.mxu0
    %1839 = vmatprep.mubr.f32.mxu0 0.0
    %1840 = vmatmul.mubr.f32.gmra.mxu0 %v1620
    %v1841 = vpop.f32.mrf.mxu0
    %v1842 = vadd.f32 0.0, %v1841
    %v1843 = vpop.f32.mrf.mxu0
    %1844 = vmatprep.mubr.f32.mxu0 0.0
    %1845 = vmatmul.mubr.f32.gmra.mxu0 %v1622
    %v1846 = vpop.f32.mrf.mxu0
    %v1847 = vadd.f32 0.0, %v1846
    %v1848 = vpop.f32.mrf.mxu0
    %1849 = vmatprep.mubr.f32.mxu0 0.0
    %1850 = vmatmul.mubr.f32.gmra.mxu0 %v1624
    %v1851 = vpop.f32.mrf.mxu0
    %v1852 = vadd.f32 0.0, %v1851
    %v1853 = vpop.f32.mrf.mxu0
    %1854 = vmatprep.mubr.f32.mxu0 0.0
    %1855 = vmatmul.mubr.f32.gmra.mxu0 %v1626
    %v1856 = vpop.f32.mrf.mxu0
    %v1857 = vadd.f32 0.0, %v1856
    %v1858 = vpop.f32.mrf.mxu0
    %1859 = vmatprep.mubr.f32.mxu0 0.0
    %1860 = vmatmul.mubr.f32.gmra.mxu0 %v1628
    %v1861 = vpop.f32.mrf.mxu0
    %v1862 = vadd.f32 0.0, %v1861
    %v1863 = vpop.f32.mrf.mxu0
    %1864 = vmatprep.mubr.f32.mxu0 0.0
    %1865 = vmatmul.mubr.f32.gmra.mxu0 %v1630
    %v1866 = vpop.f32.mrf.mxu0
    %v1867 = vadd.f32 0.0, %v1866
    %v1868 = vpop.f32.mrf.mxu0
    %1869 = vmatprep.mubr.f32.mxu0 0.0
    %1870 = vmatmul.mubr.f32.gmra.mxu0 %v1632
    %v1871 = vpop.f32.mrf.mxu0
    %v1872 = vadd.f32 0.0, %v1871
    %v1873 = vpop.f32.mrf.mxu0
    %1874 = vmatprep.mubr.f32.mxu0 0.0
    %1875 = vmatmul.mubr.f32.gmra.mxu0 %v1634
    %v1876 = vpop.f32.mrf.mxu0
    %v1877 = vadd.f32 0.0, %v1876
    %v1878 = vpop.f32.mrf.mxu0
    %1879 = vmatprep.mubr.f32.mxu0 0.0
    %1880 = vmatmul.mubr.f32.gmra.mxu0 %v1636
    %v1881 = vpop.f32.mrf.mxu0
    %v1882 = vadd.f32 0.0, %v1881
    %v1883 = vpop.f32.mrf.mxu0
    %1884 = vmatprep.mubr.f32.mxu0 0.0
    %1885 = vmatmul.mubr.f32.gmra.mxu0 %v1638
    %v1886 = vpop.f32.mrf.mxu0
    %v1887 = vadd.f32 0.0, %v1886
    %v1888 = vpop.f32.mrf.mxu0
    %1889 = vmatprep.mubr.f32.mxu0 0.0
    %1890 = vmatmul.mubr.f32.gmra.mxu0 %v1640
    %v1891 = vpop.f32.mrf.mxu0
    %v1892 = vadd.f32 0.0, %v1891
    %v1893 = vpop.f32.mrf.mxu0
    %1894 = vmatprep.mubr.f32.mxu0 0.0
    %1895 = vmatmul.mubr.f32.gmra.mxu0 %v1642
    %v1896 = vpop.f32.mrf.mxu0
    %v1897 = vadd.f32 0.0, %v1896
    %v1898 = vpop.f32.mrf.mxu0
    %1899 = vmatprep.mubr.f32.mxu0 0.0
    %1900 = vmatmul.mubr.f32.gmra.mxu0 %v1644
    %v1901 = vpop.f32.mrf.mxu0
    %v1902 = vadd.f32 0.0, %v1901
    %v1903 = vpop.f32.mrf.mxu0
    %1904 = vmatprep.mubr.f32.mxu0 0.0
    %1905 = vmatmul.mubr.f32.gmra.mxu0 %v1646
    %v1906 = vpop.f32.mrf.mxu0
    %v1907 = vadd.f32 0.0, %v1906
    %v1908 = vpop.f32.mrf.mxu0
    %1909 = vmatprep.mubr.f32.mxu0 0.0
    %1910 = vmatmul.mubr.f32.gmra.mxu0 %v1648
    %v1911 = vpop.f32.mrf.mxu0
    %v1912 = vadd.f32 0.0, %v1911
    %v1913 = vpop.f32.mrf.mxu0
    %1914 = vmatprep.mubr.f32.mxu0 0.0
    %1915 = vmatmul.mubr.f32.gmra.mxu0 %v1650
    %v1916 = vpop.f32.mrf.mxu0
    %v1917 = vadd.f32 0.0, %v1916
    %v1918 = vpop.f32.mrf.mxu0
    %1919 = vmatprep.mubr.f32.mxu0 0.0
    %1920 = vmatmul.mubr.f32.gmra.mxu0 %v1652
    %v1921 = vpop.f32.mrf.mxu0
    %v1922 = vadd.f32 0.0, %v1921
    %v1923 = vpop.f32.mrf.mxu0
    %1924 = vmatprep.mubr.f32.mxu0 0.0
    %1925 = vmatmul.mubr.f32.gmra.mxu0 %v1654
    %v1926 = vpop.f32.mrf.mxu0
    %v1927 = vadd.f32 0.0, %v1926
    %v1928 = vpop.f32.mrf.mxu0
    %1929 = vmatprep.mubr.f32.mxu0 0.0
    %1930 = vmatmul.mubr.f32.gmra.mxu0 %v1656
    %v1931 = vpop.f32.mrf.mxu0
    %v1932 = vadd.f32 0.0, %v1931
    %v1933 = vpop.f32.mrf.mxu0
    %1934 = vmatprep.mubr.f32.mxu0 0.0
    %1935 = vmatmul.mubr.f32.gmra.mxu0 %v1658
    %v1936 = vpop.f32.mrf.mxu0
    %v1937 = vadd.f32 0.0, %v1936
    %v1938 = vpop.f32.mrf.mxu0
    %1939 = vmatprep.mubr.f32.mxu0 0.0
    %1940 = vmatmul.mubr.f32.gmra.mxu0 %v1660
    %v1941 = vpop.f32.mrf.mxu0
    %v1942 = vadd.f32 0.0, %v1941
    %v1943 = vpop.f32.mrf.mxu0
    %1944 = vmatprep.mubr.f32.mxu0 0.0
    %1945 = vmatmul.mubr.f32.gmra.mxu0 %v1662
    %v1946 = vpop.f32.mrf.mxu0
    %v1947 = vadd.f32 0.0, %v1946
    %v1948 = vpop.f32.mrf.mxu0
    %1949 = vmatprep.mubr.f32.mxu0 0.0
    %1950 = vmatmul.mubr.f32.gmra.mxu0 %v1664
    %v1951 = vpop.f32.mrf.mxu0
    %v1952 = vadd.f32 0.0, %v1951
    %v1953 = vpop.f32.mrf.mxu0
    %1954 = vmatprep.mubr.f32.mxu0 0.0
    %1955 = vmatmul.mubr.f32.gmra.mxu0 %v1666
    %v1956 = vpop.f32.mrf.mxu0
    %v1957 = vadd.f32 0.0, %v1956
    %v1958 = vpop.f32.mrf.mxu0
    %1959 = vmatprep.mubr.f32.mxu0 0.0
    %1960 = vmatmul.mubr.f32.gmra.mxu0 %v1668
    %v1961 = vpop.f32.mrf.mxu0
    %v1962 = vadd.f32 0.0, %v1961
    %v1963 = vpop.f32.mrf.mxu0
    %1964 = vmatprep.mubr.f32.mxu0 0.0
    %1965 = vmatmul.mubr.f32.gmra.mxu0 %v1670
    %v1966 = vpop.f32.mrf.mxu0
    %v1967 = vadd.f32 0.0, %v1966
    %v1968 = vpop.f32.mrf.mxu0
    %1969 = vmatprep.mubr.f32.mxu0 0.0
    %1970 = vmatmul.mubr.f32.gmra.mxu0 %v1672
    %v1971 = vpop.f32.mrf.mxu0
    %v1972 = vadd.f32 0.0, %v1971
    %v1973 = vpop.f32.mrf.mxu0
    %1974 = vmatprep.mubr.f32.mxu0 0.0
    %1975 = vmatmul.mubr.f32.gmra.mxu0 %v1674
    %v1976 = vpop.f32.mrf.mxu0
    %v1977 = vadd.f32 0.0, %v1976
    %v1978 = vpop.f32.mrf.mxu0
    %1979 = vmatprep.mubr.f32.mxu0 0.0
    %1980 = vmatmul.mubr.f32.gmra.mxu0 %v1676
    %v1981 = vpop.f32.mrf.mxu0
    %v1982 = vadd.f32 0.0, %v1981
    %v1983 = vpop.f32.mrf.mxu0
    %1984 = vmatprep.mubr.f32.mxu0 0.0
    %1985 = vmatmul.mubr.f32.gmra.mxu0 %v1678
    %v1986 = vpop.f32.mrf.mxu0
    %v1987 = vadd.f32 0.0, %v1986
    %v1988 = vpop.f32.mrf.mxu0
    %1989 = vmatprep.mubr.f32.mxu0 0.0
    %1990 = vmatmul.mubr.f32.gmra.mxu0 %v1680
    %v1991 = vpop.f32.mrf.mxu0
    %v1992 = vadd.f32 0.0, %v1991
    %v1993 = vpop.f32.mrf.mxu0
    %1994 = vmatprep.mubr.f32.mxu0 0.0
    %1995 = vmatmul.mubr.f32.gmra.mxu0 %v1682
    %v1996 = vpop.f32.mrf.mxu0
    %v1997 = vadd.f32 0.0, %v1996
    %v1998 = vpop.f32.mrf.mxu0
    %1999 = vmatprep.mubr.f32.mxu0 0.0
    %2000 = vmatmul.mubr.f32.gmra.mxu0 %v1684
    %v2001 = vpop.f32.mrf.mxu0
    %v2002 = vadd.f32 0.0, %v2001
    %v2003 = vpop.f32.mrf.mxu0
    %2004 = vmatprep.mubr.f32.mxu0 0.0
    %2005 = vmatmul.mubr.f32.gmra.mxu0 %v1686
    %v2006 = vpop.f32.mrf.mxu0
    %v2007 = vadd.f32 0.0, %v2006
    %v2008 = vpop.f32.mrf.mxu0
    %2009 = vmatprep.mubr.f32.mxu0 0.0
    %2010 = vmatmul.mubr.f32.gmra.mxu0 %v1688
    %v2011 = vpop.f32.mrf.mxu0
    %v2012 = vadd.f32 0.0, %v2011
    %v2013 = vpop.f32.mrf.mxu0
    %2014 = vmatprep.mubr.f32.mxu0 0.0
    %2015 = vmatmul.mubr.f32.gmra.mxu0 %v1690
    %v2016 = vpop.f32.mrf.mxu0
    %v2017 = vadd.f32 0.0, %v2016
    %v2018 = vpop.f32.mrf.mxu0
    %2019 = vmatprep.mubr.f32.mxu0 0.0
    %2020 = vmatmul.mubr.f32.gmra.mxu0 %v1692
    %v2021 = vpop.f32.mrf.mxu0
    %v2022 = vadd.f32 0.0, %v2021
    %v2023 = vpop.f32.mrf.mxu0
    %2024 = vmatprep.mubr.f32.mxu0 0.0
    %2025 = vmatmul.mubr.f32.gmra.mxu0 %v1694
    %v2026 = vpop.f32.mrf.mxu0
    %v2027 = vadd.f32 0.0, %v2026
    %v2028 = vpop.f32.mrf.mxu0
    %2029 = vmatprep.mubr.f32.mxu0 0.0
    %2030 = vmatmul.mubr.f32.gmra.mxu0 %v1696
    %v2031 = vpop.f32.mrf.mxu0
    %v2032 = vadd.f32 0.0, %v2031
    %v2033 = vpop.f32.mrf.mxu0
    %2034 = vmatprep.mubr.f32.mxu0 0.0
    %2035 = vmatmul.mubr.f32.gmra.mxu0 %v1698
    %v2036 = vpop.f32.mrf.mxu0
    %v2037 = vadd.f32 0.0, %v2036
    %v2038 = vpop.f32.mrf.mxu0
    %2039 = vmatprep.mubr.f32.mxu0 0.0
    %2040 = vmatmul.mubr.f32.gmra.mxu0 %v1700
    %v2041 = vpop.f32.mrf.mxu0
    %v2042 = vadd.f32 0.0, %v2041
    %v2043 = vpop.f32.mrf.mxu0
    %2044 = vmatprep.mubr.f32.mxu0 0.0
    %2045 = vmatmul.mubr.f32.gmra.mxu0 %v1702
    %v2046 = vpop.f32.mrf.mxu0
    %v2047 = vadd.f32 0.0, %v2046
    %v2048 = vpop.f32.mrf.mxu0
    %2049 = vmatprep.mubr.f32.mxu0 0.0
    %2050 = vmatmul.mubr.f32.gmra.mxu0 %v1704
    %v2051 = vpop.f32.mrf.mxu0
    %v2052 = vadd.f32 0.0, %v2051
    %v2053 = vpop.f32.mrf.mxu0
    %2054 = vmatprep.mubr.f32.mxu0 0.0
    %2055 = vmatmul.mubr.f32.gmra.mxu0 %v1706
    %v2056 = vpop.f32.mrf.mxu0
    %v2057 = vadd.f32 0.0, %v2056
    %v2058 = vpop.f32.mrf.mxu0
    %2059 = vmatprep.mubr.f32.mxu0 0.0
    %2060 = vmatmul.mubr.f32.gmra.mxu0 %v1708
    %v2061 = vpop.f32.mrf.mxu0
    %v2062 = vadd.f32 0.0, %v2061
    %v2063 = vpop.f32.mrf.mxu0
    %2064 = vmatprep.mubr.f32.mxu0 0.0
    %2065 = vmatmul.mubr.f32.gmra.mxu0 %v1710
    %v2066 = vpop.f32.mrf.mxu0
    %v2067 = vadd.f32 0.0, %v2066
    %v2068 = vpop.f32.mrf.mxu0
    %2069 = vmatprep.mubr.f32.mxu0 0.0
    %2070 = vmatmul.mubr.f32.gmra.mxu0 %v1712
    %v2071 = vpop.f32.mrf.mxu0
    %v2072 = vadd.f32 0.0, %v2071
    %v2073 = vpop.f32.mrf.mxu0
    %2074 = vmatprep.mubr.f32.mxu0 0.0
    %2075 = vmatmul.mubr.f32.gmra.mxu0 %v1714
    %v2076 = vpop.f32.mrf.mxu0
    %v2077 = vadd.f32 0.0, %v2076
    %v2078 = vpop.f32.mrf.mxu0
    %2079 = vmatprep.mubr.f32.mxu0 0.0
    %2080 = vmatmul.mubr.f32.gmra.mxu0 %v1716
    %v2081 = vpop.f32.mrf.mxu0
    %v2082 = vadd.f32 0.0, %v2081
    %v2083 = vpop.f32.mrf.mxu0
    %2084 = vmatprep.mubr.f32.mxu0 0.0
    %2085 = vmatmul.mubr.f32.gmra.mxu0 %v1718
    %v2086 = vpop.f32.mrf.mxu0
    %v2087 = vadd.f32 0.0, %v2086
    %v2088 = vpop.f32.mrf.mxu0
    %2089 = vmatprep.mubr.f32.mxu0 0.0
    %2090 = vmatmul.mubr.f32.gmra.mxu0 %v1720
    %v2091 = vpop.f32.mrf.mxu0
    %v2092 = vadd.f32 0.0, %v2091
    %v2093 = vpop.f32.mrf.mxu0
    %2094 = vmatprep.mubr.f32.mxu0 0.0
    %2095 = vmatmul.mubr.f32.gmra.mxu0 %v1722
    %v2096 = vpop.f32.mrf.mxu0
    %v2097 = vadd.f32 0.0, %v2096
    %v2098 = vpop.f32.mrf.mxu0
    %2099 = vmatprep.mubr.f32.mxu0 0.0
    %2100 = vmatmul.mubr.f32.gmra.mxu0 %v1724
    %v2101 = vpop.f32.mrf.mxu0
    %v2102 = vadd.f32 0.0, %v2101
    %v2103 = vpop.f32.mrf.mxu0
    %2104 = vmatprep.mubr.f32.mxu0 0.0
    %2105 = vmatmul.mubr.f32.gmra.mxu0 %v1726
    %v2106 = vpop.f32.mrf.mxu0
    %v2107 = vadd.f32 0.0, %v2106
    %v2108 = vpop.f32.mrf.mxu0
    %2109 = vmatprep.mubr.f32.mxu0 0.0
    %2110 = vmatmul.mubr.f32.gmra.mxu0 %v1728
    %v2111 = vpop.f32.mrf.mxu0
    %v2112 = vadd.f32 0.0, %v2111
    %v2113 = vpop.f32.mrf.mxu0
    %2114 = vmatprep.mubr.f32.mxu0 0.0
    %2115 = vmatmul.mubr.f32.gmra.mxu0 %v1730
    %v2116 = vpop.f32.mrf.mxu0
    %v2117 = vadd.f32 0.0, %v2116
    %v2118 = vpop.f32.mrf.mxu0
    %2119 = vdwg.mxu0
    %v2120 = vadd.f32 %v1123, %v1802
    %v2121 = vadd.f32 %v1128, %v1807
    %v2122 = vadd.f32 %v1133, %v1812
    %v2123 = vadd.f32 %v1138, %v1817
    %v2124 = vadd.f32 %v1143, %v1822
    %v2125 = vadd.f32 %v1148, %v1827
    %v2126 = vadd.f32 %v1153, %v1832
    %v2127 = vadd.f32 %v1158, %v1837
    %v2128 = vadd.f32 %v1163, %v1842
    %v2129 = vadd.f32 %v1168, %v1847
    %v2130 = vadd.f32 %v1173, %v1852
    %v2131 = vadd.f32 %v1178, %v1857
    %v2132 = vadd.f32 %v1183, %v1862
    %v2133 = vadd.f32 %v1188, %v1867
    %v2134 = vadd.f32 %v1193, %v1872
    %v2135 = vadd.f32 %v1198, %v1877
    %v2136 = vadd.f32 %v1203, %v1882
    %v2137 = vadd.f32 %v1208, %v1887
    %v2138 = vadd.f32 %v1213, %v1892
    %v2139 = vadd.f32 %v1218, %v1897
    %v2140 = vadd.f32 %v1223, %v1902
    %v2141 = vadd.f32 %v1228, %v1907
    %v2142 = vadd.f32 %v1233, %v1912
    %v2143 = vadd.f32 %v1238, %v1917
    %v2144 = vadd.f32 %v1243, %v1922
    %v2145 = vadd.f32 %v1248, %v1927
    %v2146 = vadd.f32 %v1253, %v1932
    %v2147 = vadd.f32 %v1258, %v1937
    %v2148 = vadd.f32 %v1263, %v1942
    %v2149 = vadd.f32 %v1268, %v1947
    %v2150 = vadd.f32 %v1273, %v1952
    %v2151 = vadd.f32 %v1278, %v1957
    %v2152 = vadd.f32 %v1283, %v1962
    %v2153 = vadd.f32 %v1288, %v1967
    %v2154 = vadd.f32 %v1293, %v1972
    %v2155 = vadd.f32 %v1298, %v1977
    %v2156 = vadd.f32 %v1303, %v1982
    %v2157 = vadd.f32 %v1308, %v1987
    %v2158 = vadd.f32 %v1313, %v1992
    %v2159 = vadd.f32 %v1318, %v1997
    %v2160 = vadd.f32 %v1323, %v2002
    %v2161 = vadd.f32 %v1328, %v2007
    %v2162 = vadd.f32 %v1333, %v2012
    %v2163 = vadd.f32 %v1338, %v2017
    %v2164 = vadd.f32 %v1343, %v2022
    %v2165 = vadd.f32 %v1348, %v2027
    %v2166 = vadd.f32 %v1353, %v2032
    %v2167 = vadd.f32 %v1358, %v2037
    %v2168 = vadd.f32 %v1363, %v2042
    %v2169 = vadd.f32 %v1368, %v2047
    %v2170 = vadd.f32 %v1373, %v2052
    %v2171 = vadd.f32 %v1378, %v2057
    %v2172 = vadd.f32 %v1383, %v2062
    %v2173 = vadd.f32 %v1388, %v2067
    %v2174 = vadd.f32 %v1393, %v2072
    %v2175 = vadd.f32 %v1398, %v2077
    %v2176 = vadd.f32 %v1403, %v2082
    %v2177 = vadd.f32 %v1408, %v2087
    %v2178 = vadd.f32 %v1413, %v2092
    %v2179 = vadd.f32 %v1418, %v2097
    %v2180 = vadd.f32 %v1423, %v2102
    %v2181 = vadd.f32 %v1428, %v2107
    %v2182 = vadd.f32 %v1433, %v2112
    %v2183 = vadd.f32 %v1438, %v2117
    %s2184 = scalar_lea.vmem %s1, 12
    %v2185 = vld [vmem:[%s2184] sm:$0xf]
    %v2187 = vsel %vm407, %v87, 0
    %v2190 = vsel %vm407, %v88, 0
    %v2193 = vsel %vm407, %v141, 0
    %v2196 = vsel %vm407, %v142, 0
    %v2199 = vsel %vm536, %v2185, 0
    %2201 = vmatprep.subr.mxu0 0.0
    %2202 = vmatpush1.msra.mxu0 0.0
    %2203 = vmatprep.subr.mxu0 0.0
    %2204 = vmatpush1.msra.mxu0 0.0
    %2205 = vmatprep.subr.mxu0 0.0
    %2206 = vmatpush1.msra.mxu0 0.0
    %2207 = vmatprep.subr.mxu0 0.0
    %2208 = vmatpush1.msra.mxu0 0.0
    %2209 = vmatprep.subr.mxu0 0.0
    %2210 = vmatpush1.msra.mxu0 0.0
    %2211 = vmatprep.subr.mxu0 0.0
    %2212 = vmatpush1.msra.mxu0 0.0
    %2213 = vmatprep.subr.mxu0 0.0
    %2214 = vmatpush1.msra.mxu0 0.0
    %2215 = vmatprep.subr.mxu0 0.0
    %2216 = vmatpush1.msra.mxu0 0.0
    %2217 = vmatprep.subr.mxu0 0.0
    %2218 = vmatpush1.msra.mxu0 0.0
    %2219 = vmatprep.subr.mxu0 0.0
    %2220 = vmatpush1.msra.mxu0 0.0
    %2221 = vmatprep.subr.mxu0 0.0
    %2222 = vmatpush1.msra.mxu0 0.0
    %2223 = vmatprep.subr.mxu0 0.0
    %2224 = vmatpush1.msra.mxu0 0.0
    %2225 = vmatprep.subr.mxu0 0.0
    %2226 = vmatpush1.msra.mxu0 0.0
    %2227 = vmatprep.subr.mxu0 0.0
    %2228 = vmatpush1.msra.mxu0 0.0
    %2229 = vmatprep.subr.mxu0 0.0
    %2230 = vmatpush1.msra.mxu0 0.0
    %2231 = vmatprep.subr.mxu0 0.0
    %2232 = vmatpush1.msra.mxu0 %v2199
    %2233 = vmatprep.subr.mxu0 0.0
    %2234 = vmatpush2.msra.mxu0 0.0
    %2235 = vmatprep.subr.mxu0 0.0
    %2236 = vmatpush2.msra.mxu0 0.0
    %2237 = vmatprep.subr.mxu0 0.0
    %2238 = vmatpush2.msra.mxu0 0.0
    %2239 = vmatprep.subr.mxu0 0.0
    %2240 = vmatpush2.msra.mxu0 0.0
    %2241 = vmatprep.subr.mxu0 0.0
    %2242 = vmatpush2.msra.mxu0 0.0
    %2243 = vmatprep.subr.mxu0 0.0
    %2244 = vmatpush2.msra.mxu0 0.0
    %2245 = vmatprep.subr.mxu0 0.0
    %2246 = vmatpush2.msra.mxu0 0.0
    %2247 = vmatprep.subr.mxu0 0.0
    %2248 = vmatpush2.msra.mxu0 0.0
    %2249 = vmatprep.subr.mxu0 0.0
    %2250 = vmatpush2.msra.mxu0 0.0
    %2251 = vmatprep.subr.mxu0 0.0
    %2252 = vmatpush2.msra.mxu0 0.0
    %2253 = vmatprep.subr.mxu0 0.0
    %2254 = vmatpush2.msra.mxu0 0.0
    %2255 = vmatprep.subr.mxu0 0.0
    %2256 = vmatpush2.msra.mxu0 0.0
    %2257 = vmatprep.subr.mxu0 0.0
    %2258 = vmatpush2.msra.mxu0 0.0
    %2259 = vmatprep.subr.mxu0 0.0
    %2260 = vmatpush2.msra.mxu0 0.0
    %2261 = vmatprep.subr.mxu0 0.0
    %2262 = vmatpush2.msra.mxu0 0.0
    %2263 = vmatprep.subr.mxu0 0.0
    %2264 = vmatpush2.msra.mxu0 0.0
    %2265 = vmatprep.mubr.f32.mxu0 0.0
    %2266 = vmatmul.mubr.f32.gmra.mxu0 %v929
    %v2267 = vpop.f32.mrf.mxu0
    %v2268 = vadd.f32 0.0, %v2267
    %v2269 = vpop.f32.mrf.mxu0
    %2270 = vmatprep.mubr.f32.mxu0 0.0
    %2271 = vmatmul.mubr.f32.gmra.mxu0 %v931
    %v2272 = vpop.f32.mrf.mxu0
    %v2273 = vadd.f32 0.0, %v2272
    %v2274 = vpop.f32.mrf.mxu0
    %2275 = vmatprep.mubr.f32.mxu0 0.0
    %2276 = vmatmul.mubr.f32.gmra.mxu0 %v933
    %v2277 = vpop.f32.mrf.mxu0
    %v2278 = vadd.f32 0.0, %v2277
    %v2279 = vpop.f32.mrf.mxu0
    %2280 = vmatprep.mubr.f32.mxu0 0.0
    %2281 = vmatmul.mubr.f32.gmra.mxu0 %v935
    %v2282 = vpop.f32.mrf.mxu0
    %v2283 = vadd.f32 0.0, %v2282
    %v2284 = vpop.f32.mrf.mxu0
    %2285 = vmatprep.mubr.f32.mxu0 0.0
    %2286 = vmatmul.mubr.f32.gmra.mxu0 %v937
    %v2287 = vpop.f32.mrf.mxu0
    %v2288 = vadd.f32 0.0, %v2287
    %v2289 = vpop.f32.mrf.mxu0
    %2290 = vmatprep.mubr.f32.mxu0 0.0
    %2291 = vmatmul.mubr.f32.gmra.mxu0 %v939
    %v2292 = vpop.f32.mrf.mxu0
    %v2293 = vadd.f32 0.0, %v2292
    %v2294 = vpop.f32.mrf.mxu0
    %2295 = vmatprep.mubr.f32.mxu0 0.0
    %2296 = vmatmul.mubr.f32.gmra.mxu0 %v941
    %v2297 = vpop.f32.mrf.mxu0
    %v2298 = vadd.f32 0.0, %v2297
    %v2299 = vpop.f32.mrf.mxu0
    %2300 = vmatprep.mubr.f32.mxu0 0.0
    %2301 = vmatmul.mubr.f32.gmra.mxu0 %v943
    %v2302 = vpop.f32.mrf.mxu0
    %v2303 = vadd.f32 0.0, %v2302
    %v2304 = vpop.f32.mrf.mxu0
    %2305 = vmatprep.mubr.f32.mxu0 0.0
    %2306 = vmatmul.mubr.f32.gmra.mxu0 %v945
    %v2307 = vpop.f32.mrf.mxu0
    %v2308 = vadd.f32 0.0, %v2307
    %v2309 = vpop.f32.mrf.mxu0
    %2310 = vmatprep.mubr.f32.mxu0 0.0
    %2311 = vmatmul.mubr.f32.gmra.mxu0 %v947
    %v2312 = vpop.f32.mrf.mxu0
    %v2313 = vadd.f32 0.0, %v2312
    %v2314 = vpop.f32.mrf.mxu0
    %2315 = vmatprep.mubr.f32.mxu0 0.0
    %2316 = vmatmul.mubr.f32.gmra.mxu0 %v949
    %v2317 = vpop.f32.mrf.mxu0
    %v2318 = vadd.f32 0.0, %v2317
    %v2319 = vpop.f32.mrf.mxu0
    %2320 = vmatprep.mubr.f32.mxu0 0.0
    %2321 = vmatmul.mubr.f32.gmra.mxu0 %v951
    %v2322 = vpop.f32.mrf.mxu0
    %v2323 = vadd.f32 0.0, %v2322
    %v2324 = vpop.f32.mrf.mxu0
    %2325 = vmatprep.mubr.f32.mxu0 0.0
    %2326 = vmatmul.mubr.f32.gmra.mxu0 %v953
    %v2327 = vpop.f32.mrf.mxu0
    %v2328 = vadd.f32 0.0, %v2327
    %v2329 = vpop.f32.mrf.mxu0
    %2330 = vmatprep.mubr.f32.mxu0 0.0
    %2331 = vmatmul.mubr.f32.gmra.mxu0 %v955
    %v2332 = vpop.f32.mrf.mxu0
    %v2333 = vadd.f32 0.0, %v2332
    %v2334 = vpop.f32.mrf.mxu0
    %2335 = vmatprep.mubr.f32.mxu0 0.0
    %2336 = vmatmul.mubr.f32.gmra.mxu0 %v957
    %v2337 = vpop.f32.mrf.mxu0
    %v2338 = vadd.f32 0.0, %v2337
    %v2339 = vpop.f32.mrf.mxu0
    %2340 = vmatprep.mubr.f32.mxu0 0.0
    %2341 = vmatmul.mubr.f32.gmra.mxu0 %v959
    %v2342 = vpop.f32.mrf.mxu0
    %v2343 = vadd.f32 0.0, %v2342
    %v2344 = vpop.f32.mrf.mxu0
    %2345 = vmatprep.mubr.f32.mxu0 0.0
    %2346 = vmatmul.mubr.f32.gmra.mxu0 %v961
    %v2347 = vpop.f32.mrf.mxu0
    %v2348 = vadd.f32 0.0, %v2347
    %v2349 = vpop.f32.mrf.mxu0
    %2350 = vmatprep.mubr.f32.mxu0 0.0
    %2351 = vmatmul.mubr.f32.gmra.mxu0 %v963
    %v2352 = vpop.f32.mrf.mxu0
    %v2353 = vadd.f32 0.0, %v2352
    %v2354 = vpop.f32.mrf.mxu0
    %2355 = vmatprep.mubr.f32.mxu0 0.0
    %2356 = vmatmul.mubr.f32.gmra.mxu0 %v965
    %v2357 = vpop.f32.mrf.mxu0
    %v2358 = vadd.f32 0.0, %v2357
    %v2359 = vpop.f32.mrf.mxu0
    %2360 = vmatprep.mubr.f32.mxu0 0.0
    %2361 = vmatmul.mubr.f32.gmra.mxu0 %v967
    %v2362 = vpop.f32.mrf.mxu0
    %v2363 = vadd.f32 0.0, %v2362
    %v2364 = vpop.f32.mrf.mxu0
    %2365 = vmatprep.mubr.f32.mxu0 0.0
    %2366 = vmatmul.mubr.f32.gmra.mxu0 %v969
    %v2367 = vpop.f32.mrf.mxu0
    %v2368 = vadd.f32 0.0, %v2367
    %v2369 = vpop.f32.mrf.mxu0
    %2370 = vmatprep.mubr.f32.mxu0 0.0
    %2371 = vmatmul.mubr.f32.gmra.mxu0 %v971
    %v2372 = vpop.f32.mrf.mxu0
    %v2373 = vadd.f32 0.0, %v2372
    %v2374 = vpop.f32.mrf.mxu0
    %2375 = vmatprep.mubr.f32.mxu0 0.0
    %2376 = vmatmul.mubr.f32.gmra.mxu0 %v973
    %v2377 = vpop.f32.mrf.mxu0
    %v2378 = vadd.f32 0.0, %v2377
    %v2379 = vpop.f32.mrf.mxu0
    %2380 = vmatprep.mubr.f32.mxu0 0.0
    %2381 = vmatmul.mubr.f32.gmra.mxu0 %v975
    %v2382 = vpop.f32.mrf.mxu0
    %v2383 = vadd.f32 0.0, %v2382
    %v2384 = vpop.f32.mrf.mxu0
    %2385 = vmatprep.mubr.f32.mxu0 0.0
    %2386 = vmatmul.mubr.f32.gmra.mxu0 %v977
    %v2387 = vpop.f32.mrf.mxu0
    %v2388 = vadd.f32 0.0, %v2387
    %v2389 = vpop.f32.mrf.mxu0
    %2390 = vmatprep.mubr.f32.mxu0 0.0
    %2391 = vmatmul.mubr.f32.gmra.mxu0 %v979
    %v2392 = vpop.f32.mrf.mxu0
    %v2393 = vadd.f32 0.0, %v2392
    %v2394 = vpop.f32.mrf.mxu0
    %2395 = vmatprep.mubr.f32.mxu0 0.0
    %2396 = vmatmul.mubr.f32.gmra.mxu0 %v981
    %v2397 = vpop.f32.mrf.mxu0
    %v2398 = vadd.f32 0.0, %v2397
    %v2399 = vpop.f32.mrf.mxu0
    %2400 = vmatprep.mubr.f32.mxu0 0.0
    %2401 = vmatmul.mubr.f32.gmra.mxu0 %v983
    %v2402 = vpop.f32.mrf.mxu0
    %v2403 = vadd.f32 0.0, %v2402
    %v2404 = vpop.f32.mrf.mxu0
    %2405 = vmatprep.mubr.f32.mxu0 0.0
    %2406 = vmatmul.mubr.f32.gmra.mxu0 %v985
    %v2407 = vpop.f32.mrf.mxu0
    %v2408 = vadd.f32 0.0, %v2407
    %v2409 = vpop.f32.mrf.mxu0
    %2410 = vmatprep.mubr.f32.mxu0 0.0
    %2411 = vmatmul.mubr.f32.gmra.mxu0 %v987
    %v2412 = vpop.f32.mrf.mxu0
    %v2413 = vadd.f32 0.0, %v2412
    %v2414 = vpop.f32.mrf.mxu0
    %2415 = vmatprep.mubr.f32.mxu0 0.0
    %2416 = vmatmul.mubr.f32.gmra.mxu0 %v2187
    %v2417 = vpop.f32.mrf.mxu0
    %v2418 = vadd.f32 0.0, %v2417
    %v2419 = vpop.f32.mrf.mxu0
    %2420 = vmatprep.mubr.f32.mxu0 0.0
    %2421 = vmatmul.mubr.f32.gmra.mxu0 %v2190
    %v2422 = vpop.f32.mrf.mxu0
    %v2423 = vadd.f32 0.0, %v2422
    %v2424 = vpop.f32.mrf.mxu0
    %2425 = vmatprep.mubr.f32.mxu0 0.0
    %2426 = vmatmul.mubr.f32.gmra.mxu0 %v993
    %v2427 = vpop.f32.mrf.mxu0
    %v2428 = vadd.f32 0.0, %v2427
    %v2429 = vpop.f32.mrf.mxu0
    %2430 = vmatprep.mubr.f32.mxu0 0.0
    %2431 = vmatmul.mubr.f32.gmra.mxu0 %v995
    %v2432 = vpop.f32.mrf.mxu0
    %v2433 = vadd.f32 0.0, %v2432
    %v2434 = vpop.f32.mrf.mxu0
    %2435 = vmatprep.mubr.f32.mxu0 0.0
    %2436 = vmatmul.mubr.f32.gmra.mxu0 %v997
    %v2437 = vpop.f32.mrf.mxu0
    %v2438 = vadd.f32 0.0, %v2437
    %v2439 = vpop.f32.mrf.mxu0
    %2440 = vmatprep.mubr.f32.mxu0 0.0
    %2441 = vmatmul.mubr.f32.gmra.mxu0 %v999
    %v2442 = vpop.f32.mrf.mxu0
    %v2443 = vadd.f32 0.0, %v2442
    %v2444 = vpop.f32.mrf.mxu0
    %2445 = vmatprep.mubr.f32.mxu0 0.0
    %2446 = vmatmul.mubr.f32.gmra.mxu0 %v1001
    %v2447 = vpop.f32.mrf.mxu0
    %v2448 = vadd.f32 0.0, %v2447
    %v2449 = vpop.f32.mrf.mxu0
    %2450 = vmatprep.mubr.f32.mxu0 0.0
    %2451 = vmatmul.mubr.f32.gmra.mxu0 %v1003
    %v2452 = vpop.f32.mrf.mxu0
    %v2453 = vadd.f32 0.0, %v2452
    %v2454 = vpop.f32.mrf.mxu0
    %2455 = vmatprep.mubr.f32.mxu0 0.0
    %2456 = vmatmul.mubr.f32.gmra.mxu0 %v1005
    %v2457 = vpop.f32.mrf.mxu0
    %v2458 = vadd.f32 0.0, %v2457
    %v2459 = vpop.f32.mrf.mxu0
    %2460 = vmatprep.mubr.f32.mxu0 0.0
    %2461 = vmatmul.mubr.f32.gmra.mxu0 %v1007
    %v2462 = vpop.f32.mrf.mxu0
    %v2463 = vadd.f32 0.0, %v2462
    %v2464 = vpop.f32.mrf.mxu0
    %2465 = vmatprep.mubr.f32.mxu0 0.0
    %2466 = vmatmul.mubr.f32.gmra.mxu0 %v1009
    %v2467 = vpop.f32.mrf.mxu0
    %v2468 = vadd.f32 0.0, %v2467
    %v2469 = vpop.f32.mrf.mxu0
    %2470 = vmatprep.mubr.f32.mxu0 0.0
    %2471 = vmatmul.mubr.f32.gmra.mxu0 %v1011
    %v2472 = vpop.f32.mrf.mxu0
    %v2473 = vadd.f32 0.0, %v2472
    %v2474 = vpop.f32.mrf.mxu0
    %2475 = vmatprep.mubr.f32.mxu0 0.0
    %2476 = vmatmul.mubr.f32.gmra.mxu0 %v1013
    %v2477 = vpop.f32.mrf.mxu0
    %v2478 = vadd.f32 0.0, %v2477
    %v2479 = vpop.f32.mrf.mxu0
    %2480 = vmatprep.mubr.f32.mxu0 0.0
    %2481 = vmatmul.mubr.f32.gmra.mxu0 %v1015
    %v2482 = vpop.f32.mrf.mxu0
    %v2483 = vadd.f32 0.0, %v2482
    %v2484 = vpop.f32.mrf.mxu0
    %2485 = vmatprep.mubr.f32.mxu0 0.0
    %2486 = vmatmul.mubr.f32.gmra.mxu0 %v1017
    %v2487 = vpop.f32.mrf.mxu0
    %v2488 = vadd.f32 0.0, %v2487
    %v2489 = vpop.f32.mrf.mxu0
    %2490 = vmatprep.mubr.f32.mxu0 0.0
    %2491 = vmatmul.mubr.f32.gmra.mxu0 %v1019
    %v2492 = vpop.f32.mrf.mxu0
    %v2493 = vadd.f32 0.0, %v2492
    %v2494 = vpop.f32.mrf.mxu0
    %2495 = vmatprep.mubr.f32.mxu0 0.0
    %2496 = vmatmul.mubr.f32.gmra.mxu0 %v1021
    %v2497 = vpop.f32.mrf.mxu0
    %v2498 = vadd.f32 0.0, %v2497
    %v2499 = vpop.f32.mrf.mxu0
    %2500 = vmatprep.mubr.f32.mxu0 0.0
    %2501 = vmatmul.mubr.f32.gmra.mxu0 %v1023
    %v2502 = vpop.f32.mrf.mxu0
    %v2503 = vadd.f32 0.0, %v2502
    %v2504 = vpop.f32.mrf.mxu0
    %2505 = vmatprep.mubr.f32.mxu0 0.0
    %2506 = vmatmul.mubr.f32.gmra.mxu0 %v1025
    %v2507 = vpop.f32.mrf.mxu0
    %v2508 = vadd.f32 0.0, %v2507
    %v2509 = vpop.f32.mrf.mxu0
    %2510 = vmatprep.mubr.f32.mxu0 0.0
    %2511 = vmatmul.mubr.f32.gmra.mxu0 %v1027
    %v2512 = vpop.f32.mrf.mxu0
    %v2513 = vadd.f32 0.0, %v2512
    %v2514 = vpop.f32.mrf.mxu0
    %2515 = vmatprep.mubr.f32.mxu0 0.0
    %2516 = vmatmul.mubr.f32.gmra.mxu0 %v1029
    %v2517 = vpop.f32.mrf.mxu0
    %v2518 = vadd.f32 0.0, %v2517
    %v2519 = vpop.f32.mrf.mxu0
    %2520 = vmatprep.mubr.f32.mxu0 0.0
    %2521 = vmatmul.mubr.f32.gmra.mxu0 %v1031
    %v2522 = vpop.f32.mrf.mxu0
    %v2523 = vadd.f32 0.0, %v2522
    %v2524 = vpop.f32.mrf.mxu0
    %2525 = vmatprep.mubr.f32.mxu0 0.0
    %2526 = vmatmul.mubr.f32.gmra.mxu0 %v1033
    %v2527 = vpop.f32.mrf.mxu0
    %v2528 = vadd.f32 0.0, %v2527
    %v2529 = vpop.f32.mrf.mxu0
    %2530 = vmatprep.mubr.f32.mxu0 0.0
    %2531 = vmatmul.mubr.f32.gmra.mxu0 %v1035
    %v2532 = vpop.f32.mrf.mxu0
    %v2533 = vadd.f32 0.0, %v2532
    %v2534 = vpop.f32.mrf.mxu0
    %2535 = vmatprep.mubr.f32.mxu0 0.0
    %2536 = vmatmul.mubr.f32.gmra.mxu0 %v1037
    %v2537 = vpop.f32.mrf.mxu0
    %v2538 = vadd.f32 0.0, %v2537
    %v2539 = vpop.f32.mrf.mxu0
    %2540 = vmatprep.mubr.f32.mxu0 0.0
    %2541 = vmatmul.mubr.f32.gmra.mxu0 %v1039
    %v2542 = vpop.f32.mrf.mxu0
    %v2543 = vadd.f32 0.0, %v2542
    %v2544 = vpop.f32.mrf.mxu0
    %2545 = vmatprep.mubr.f32.mxu0 0.0
    %2546 = vmatmul.mubr.f32.gmra.mxu0 %v1041
    %v2547 = vpop.f32.mrf.mxu0
    %v2548 = vadd.f32 0.0, %v2547
    %v2549 = vpop.f32.mrf.mxu0
    %2550 = vmatprep.mubr.f32.mxu0 0.0
    %2551 = vmatmul.mubr.f32.gmra.mxu0 %v1043
    %v2552 = vpop.f32.mrf.mxu0
    %v2553 = vadd.f32 0.0, %v2552
    %v2554 = vpop.f32.mrf.mxu0
    %2555 = vmatprep.mubr.f32.mxu0 0.0
    %2556 = vmatmul.mubr.f32.gmra.mxu0 %v1045
    %v2557 = vpop.f32.mrf.mxu0
    %v2558 = vadd.f32 0.0, %v2557
    %v2559 = vpop.f32.mrf.mxu0
    %2560 = vmatprep.mubr.f32.mxu0 0.0
    %2561 = vmatmul.mubr.f32.gmra.mxu0 %v1047
    %v2562 = vpop.f32.mrf.mxu0
    %v2563 = vadd.f32 0.0, %v2562
    %v2564 = vpop.f32.mrf.mxu0
    %2565 = vmatprep.mubr.f32.mxu0 0.0
    %2566 = vmatmul.mubr.f32.gmra.mxu0 %v1049
    %v2567 = vpop.f32.mrf.mxu0
    %v2568 = vadd.f32 0.0, %v2567
    %v2569 = vpop.f32.mrf.mxu0
    %2570 = vmatprep.mubr.f32.mxu0 0.0
    %2571 = vmatmul.mubr.f32.gmra.mxu0 %v1051
    %v2572 = vpop.f32.mrf.mxu0
    %v2573 = vadd.f32 0.0, %v2572
    %v2574 = vpop.f32.mrf.mxu0
    %2575 = vmatprep.mubr.f32.mxu0 0.0
    %2576 = vmatmul.mubr.f32.gmra.mxu0 %v2193
    %v2577 = vpop.f32.mrf.mxu0
    %v2578 = vadd.f32 0.0, %v2577
    %v2579 = vpop.f32.mrf.mxu0
    %2580 = vmatprep.mubr.f32.mxu0 0.0
    %2581 = vmatmul.mubr.f32.gmra.mxu0 %v2196
    %v2582 = vpop.f32.mrf.mxu0
    %v2583 = vadd.f32 0.0, %v2582
    %v2584 = vpop.f32.mrf.mxu0
    %2585 = vdwg.mxu0
    %v2586 = vadd.f32 %v2120, %v2268
    %v2587 = vadd.f32 %v2121, %v2273
    %v2588 = vadd.f32 %v2122, %v2278
    %v2589 = vadd.f32 %v2123, %v2283
    %v2590 = vadd.f32 %v2124, %v2288
    %v2591 = vadd.f32 %v2125, %v2293
    %v2592 = vadd.f32 %v2126, %v2298
    %v2593 = vadd.f32 %v2127, %v2303
    %v2594 = vadd.f32 %v2128, %v2308
    %v2595 = vadd.f32 %v2129, %v2313
    %v2596 = vadd.f32 %v2130, %v2318
    %v2597 = vadd.f32 %v2131, %v2323
    %v2598 = vadd.f32 %v2132, %v2328
    %v2599 = vadd.f32 %v2133, %v2333
    %v2600 = vadd.f32 %v2134, %v2338
    %v2601 = vadd.f32 %v2135, %v2343
    %v2602 = vadd.f32 %v2136, %v2348
    %v2603 = vadd.f32 %v2137, %v2353
    %v2604 = vadd.f32 %v2138, %v2358
    %v2605 = vadd.f32 %v2139, %v2363
    %v2606 = vadd.f32 %v2140, %v2368
    %v2607 = vadd.f32 %v2141, %v2373
    %v2608 = vadd.f32 %v2142, %v2378
    %v2609 = vadd.f32 %v2143, %v2383
    %v2610 = vadd.f32 %v2144, %v2388
    %v2611 = vadd.f32 %v2145, %v2393
    %v2612 = vadd.f32 %v2146, %v2398
    %v2613 = vadd.f32 %v2147, %v2403
    %v2614 = vadd.f32 %v2148, %v2408
    %v2615 = vadd.f32 %v2149, %v2413
    %v2616 = vadd.f32 %v2150, %v2418
    %v2617 = vadd.f32 %v2151, %v2423
    %v2618 = vadd.f32 %v2152, %v2428
    %v2619 = vadd.f32 %v2153, %v2433
    %v2620 = vadd.f32 %v2154, %v2438
    %v2621 = vadd.f32 %v2155, %v2443
    %v2622 = vadd.f32 %v2156, %v2448
    %v2623 = vadd.f32 %v2157, %v2453
    %v2624 = vadd.f32 %v2158, %v2458
    %v2625 = vadd.f32 %v2159, %v2463
    %v2626 = vadd.f32 %v2160, %v2468
    %v2627 = vadd.f32 %v2161, %v2473
    %v2628 = vadd.f32 %v2162, %v2478
    %v2629 = vadd.f32 %v2163, %v2483
    %v2630 = vadd.f32 %v2164, %v2488
    %v2631 = vadd.f32 %v2165, %v2493
    %v2632 = vadd.f32 %v2166, %v2498
    %v2633 = vadd.f32 %v2167, %v2503
    %v2634 = vadd.f32 %v2168, %v2508
    %v2635 = vadd.f32 %v2169, %v2513
    %v2636 = vadd.f32 %v2170, %v2518
    %v2637 = vadd.f32 %v2171, %v2523
    %v2638 = vadd.f32 %v2172, %v2528
    %v2639 = vadd.f32 %v2173, %v2533
    %v2640 = vadd.f32 %v2174, %v2538
    %v2641 = vadd.f32 %v2175, %v2543
    %v2642 = vadd.f32 %v2176, %v2548
    %v2643 = vadd.f32 %v2177, %v2553
    %v2644 = vadd.f32 %v2178, %v2558
    %v2645 = vadd.f32 %v2179, %v2563
    %v2646 = vadd.f32 %v2180, %v2568
    %v2647 = vadd.f32 %v2181, %v2573
    %v2648 = vadd.f32 %v2182, %v2578
    %v2649 = vadd.f32 %v2183, %v2583
    %v2652 = vrot.slane %v87, 1
    %v2653 = vrot.slane %v88, 1
    %v2654 = vsel %vm244, %v2652, %v2653
    %v2655 = vrot.slane %v89, 1
    %v2656 = vsel %vm244, %v2653, %v2655
    %v2657 = vrot.slane %v141, 1
    %v2658 = vrot.slane %v142, 1
    %v2659 = vsel %vm244, %v2657, %v2658
    %v2660 = vrot.slane %v143, 1
    %v2661 = vsel %vm244, %v2658, %v2660
    %s2662 = scalar_lea.vmem %s1, 16
    %v2663 = vld [vmem:[%s2662] sm:$0xf]
    %v2664 = vsel %vm407, %v2654, 0
    %v2666 = vsel %vm407, %v2656, 0
    %v2668 = vsel %vm407, %v2659, 0
    %v2670 = vsel %vm407, %v2661, 0
    %v2673 = vsel %vm536, %v2663, 0
    %2675 = vmatprep.subr.mxu0 0.0
    %2676 = vmatpush1.msra.mxu0 0.0
    %2677 = vmatprep.subr.mxu0 0.0
    %2678 = vmatpush1.msra.mxu0 0.0
    %2679 = vmatprep.subr.mxu0 0.0
    %2680 = vmatpush1.msra.mxu0 0.0
    %2681 = vmatprep.subr.mxu0 0.0
    %2682 = vmatpush1.msra.mxu0 0.0
    %2683 = vmatprep.subr.mxu0 0.0
    %2684 = vmatpush1.msra.mxu0 0.0
    %2685 = vmatprep.subr.mxu0 0.0
    %2686 = vmatpush1.msra.mxu0 0.0
    %2687 = vmatprep.subr.mxu0 0.0
    %2688 = vmatpush1.msra.mxu0 0.0
    %2689 = vmatprep.subr.mxu0 0.0
    %2690 = vmatpush1.msra.mxu0 0.0
    %2691 = vmatprep.subr.mxu0 0.0
    %2692 = vmatpush1.msra.mxu0 0.0
    %2693 = vmatprep.subr.mxu0 0.0
    %2694 = vmatpush1.msra.mxu0 0.0
    %2695 = vmatprep.subr.mxu0 0.0
    %2696 = vmatpush1.msra.mxu0 0.0
    %2697 = vmatprep.subr.mxu0 0.0
    %2698 = vmatpush1.msra.mxu0 0.0
    %2699 = vmatprep.subr.mxu0 0.0
    %2700 = vmatpush1.msra.mxu0 0.0
    %2701 = vmatprep.subr.mxu0 0.0
    %2702 = vmatpush1.msra.mxu0 0.0
    %2703 = vmatprep.subr.mxu0 0.0
    %2704 = vmatpush1.msra.mxu0 0.0
    %2705 = vmatprep.subr.mxu0 0.0
    %2706 = vmatpush1.msra.mxu0 %v2673
    %2707 = vmatprep.subr.mxu0 0.0
    %2708 = vmatpush2.msra.mxu0 0.0
    %2709 = vmatprep.subr.mxu0 0.0
    %2710 = vmatpush2.msra.mxu0 0.0
    %2711 = vmatprep.subr.mxu0 0.0
    %2712 = vmatpush2.msra.mxu0 0.0
    %2713 = vmatprep.subr.mxu0 0.0
    %2714 = vmatpush2.msra.mxu0 0.0
    %2715 = vmatprep.subr.mxu0 0.0
    %2716 = vmatpush2.msra.mxu0 0.0
    %2717 = vmatprep.subr.mxu0 0.0
    %2718 = vmatpush2.msra.mxu0 0.0
    %2719 = vmatprep.subr.mxu0 0.0
    %2720 = vmatpush2.msra.mxu0 0.0
    %2721 = vmatprep.subr.mxu0 0.0
    %2722 = vmatpush2.msra.mxu0 0.0
    %2723 = vmatprep.subr.mxu0 0.0
    %2724 = vmatpush2.msra.mxu0 0.0
    %2725 = vmatprep.subr.mxu0 0.0
    %2726 = vmatpush2.msra.mxu0 0.0
    %2727 = vmatprep.subr.mxu0 0.0
    %2728 = vmatpush2.msra.mxu0 0.0
    %2729 = vmatprep.subr.mxu0 0.0
    %2730 = vmatpush2.msra.mxu0 0.0
    %2731 = vmatprep.subr.mxu0 0.0
    %2732 = vmatpush2.msra.mxu0 0.0
    %2733 = vmatprep.subr.mxu0 0.0
    %2734 = vmatpush2.msra.mxu0 0.0
    %2735 = vmatprep.subr.mxu0 0.0
    %2736 = vmatpush2.msra.mxu0 0.0
    %2737 = vmatprep.subr.mxu0 0.0
    %2738 = vmatpush2.msra.mxu0 0.0
    %2739 = vmatprep.mubr.f32.mxu0 0.0
    %2740 = vmatmul.mubr.f32.gmra.mxu0 %v412
    %v2741 = vpop.f32.mrf.mxu0
    %v2742 = vadd.f32 0.0, %v2741
    %v2743 = vpop.f32.mrf.mxu0
    %2744 = vmatprep.mubr.f32.mxu0 0.0
    %2745 = vmatmul.mubr.f32.gmra.mxu0 %v414
    %v2746 = vpop.f32.mrf.mxu0
    %v2747 = vadd.f32 0.0, %v2746
    %v2748 = vpop.f32.mrf.mxu0
    %2749 = vmatprep.mubr.f32.mxu0 0.0
    %2750 = vmatmul.mubr.f32.gmra.mxu0 %v416
    %v2751 = vpop.f32.mrf.mxu0
    %v2752 = vadd.f32 0.0, %v2751
    %v2753 = vpop.f32.mrf.mxu0
    %2754 = vmatprep.mubr.f32.mxu0 0.0
    %2755 = vmatmul.mubr.f32.gmra.mxu0 %v418
    %v2756 = vpop.f32.mrf.mxu0
    %v2757 = vadd.f32 0.0, %v2756
    %v2758 = vpop.f32.mrf.mxu0
    %2759 = vmatprep.mubr.f32.mxu0 0.0
    %2760 = vmatmul.mubr.f32.gmra.mxu0 %v420
    %v2761 = vpop.f32.mrf.mxu0
    %v2762 = vadd.f32 0.0, %v2761
    %v2763 = vpop.f32.mrf.mxu0
    %2764 = vmatprep.mubr.f32.mxu0 0.0
    %2765 = vmatmul.mubr.f32.gmra.mxu0 %v422
    %v2766 = vpop.f32.mrf.mxu0
    %v2767 = vadd.f32 0.0, %v2766
    %v2768 = vpop.f32.mrf.mxu0
    %2769 = vmatprep.mubr.f32.mxu0 0.0
    %2770 = vmatmul.mubr.f32.gmra.mxu0 %v424
    %v2771 = vpop.f32.mrf.mxu0
    %v2772 = vadd.f32 0.0, %v2771
    %v2773 = vpop.f32.mrf.mxu0
    %2774 = vmatprep.mubr.f32.mxu0 0.0
    %2775 = vmatmul.mubr.f32.gmra.mxu0 %v426
    %v2776 = vpop.f32.mrf.mxu0
    %v2777 = vadd.f32 0.0, %v2776
    %v2778 = vpop.f32.mrf.mxu0
    %2779 = vmatprep.mubr.f32.mxu0 0.0
    %2780 = vmatmul.mubr.f32.gmra.mxu0 %v428
    %v2781 = vpop.f32.mrf.mxu0
    %v2782 = vadd.f32 0.0, %v2781
    %v2783 = vpop.f32.mrf.mxu0
    %2784 = vmatprep.mubr.f32.mxu0 0.0
    %2785 = vmatmul.mubr.f32.gmra.mxu0 %v430
    %v2786 = vpop.f32.mrf.mxu0
    %v2787 = vadd.f32 0.0, %v2786
    %v2788 = vpop.f32.mrf.mxu0
    %2789 = vmatprep.mubr.f32.mxu0 0.0
    %2790 = vmatmul.mubr.f32.gmra.mxu0 %v432
    %v2791 = vpop.f32.mrf.mxu0
    %v2792 = vadd.f32 0.0, %v2791
    %v2793 = vpop.f32.mrf.mxu0
    %2794 = vmatprep.mubr.f32.mxu0 0.0
    %2795 = vmatmul.mubr.f32.gmra.mxu0 %v434
    %v2796 = vpop.f32.mrf.mxu0
    %v2797 = vadd.f32 0.0, %v2796
    %v2798 = vpop.f32.mrf.mxu0
    %2799 = vmatprep.mubr.f32.mxu0 0.0
    %2800 = vmatmul.mubr.f32.gmra.mxu0 %v436
    %v2801 = vpop.f32.mrf.mxu0
    %v2802 = vadd.f32 0.0, %v2801
    %v2803 = vpop.f32.mrf.mxu0
    %2804 = vmatprep.mubr.f32.mxu0 0.0
    %2805 = vmatmul.mubr.f32.gmra.mxu0 %v438
    %v2806 = vpop.f32.mrf.mxu0
    %v2807 = vadd.f32 0.0, %v2806
    %v2808 = vpop.f32.mrf.mxu0
    %2809 = vmatprep.mubr.f32.mxu0 0.0
    %2810 = vmatmul.mubr.f32.gmra.mxu0 %v440
    %v2811 = vpop.f32.mrf.mxu0
    %v2812 = vadd.f32 0.0, %v2811
    %v2813 = vpop.f32.mrf.mxu0
    %2814 = vmatprep.mubr.f32.mxu0 0.0
    %2815 = vmatmul.mubr.f32.gmra.mxu0 %v442
    %v2816 = vpop.f32.mrf.mxu0
    %v2817 = vadd.f32 0.0, %v2816
    %v2818 = vpop.f32.mrf.mxu0
    %2819 = vmatprep.mubr.f32.mxu0 0.0
    %2820 = vmatmul.mubr.f32.gmra.mxu0 %v444
    %v2821 = vpop.f32.mrf.mxu0
    %v2822 = vadd.f32 0.0, %v2821
    %v2823 = vpop.f32.mrf.mxu0
    %2824 = vmatprep.mubr.f32.mxu0 0.0
    %2825 = vmatmul.mubr.f32.gmra.mxu0 %v446
    %v2826 = vpop.f32.mrf.mxu0
    %v2827 = vadd.f32 0.0, %v2826
    %v2828 = vpop.f32.mrf.mxu0
    %2829 = vmatprep.mubr.f32.mxu0 0.0
    %2830 = vmatmul.mubr.f32.gmra.mxu0 %v448
    %v2831 = vpop.f32.mrf.mxu0
    %v2832 = vadd.f32 0.0, %v2831
    %v2833 = vpop.f32.mrf.mxu0
    %2834 = vmatprep.mubr.f32.mxu0 0.0
    %2835 = vmatmul.mubr.f32.gmra.mxu0 %v450
    %v2836 = vpop.f32.mrf.mxu0
    %v2837 = vadd.f32 0.0, %v2836
    %v2838 = vpop.f32.mrf.mxu0
    %2839 = vmatprep.mubr.f32.mxu0 0.0
    %2840 = vmatmul.mubr.f32.gmra.mxu0 %v452
    %v2841 = vpop.f32.mrf.mxu0
    %v2842 = vadd.f32 0.0, %v2841
    %v2843 = vpop.f32.mrf.mxu0
    %2844 = vmatprep.mubr.f32.mxu0 0.0
    %2845 = vmatmul.mubr.f32.gmra.mxu0 %v454
    %v2846 = vpop.f32.mrf.mxu0
    %v2847 = vadd.f32 0.0, %v2846
    %v2848 = vpop.f32.mrf.mxu0
    %2849 = vmatprep.mubr.f32.mxu0 0.0
    %2850 = vmatmul.mubr.f32.gmra.mxu0 %v456
    %v2851 = vpop.f32.mrf.mxu0
    %v2852 = vadd.f32 0.0, %v2851
    %v2853 = vpop.f32.mrf.mxu0
    %2854 = vmatprep.mubr.f32.mxu0 0.0
    %2855 = vmatmul.mubr.f32.gmra.mxu0 %v458
    %v2856 = vpop.f32.mrf.mxu0
    %v2857 = vadd.f32 0.0, %v2856
    %v2858 = vpop.f32.mrf.mxu0
    %2859 = vmatprep.mubr.f32.mxu0 0.0
    %2860 = vmatmul.mubr.f32.gmra.mxu0 %v460
    %v2861 = vpop.f32.mrf.mxu0
    %v2862 = vadd.f32 0.0, %v2861
    %v2863 = vpop.f32.mrf.mxu0
    %2864 = vmatprep.mubr.f32.mxu0 0.0
    %2865 = vmatmul.mubr.f32.gmra.mxu0 %v462
    %v2866 = vpop.f32.mrf.mxu0
    %v2867 = vadd.f32 0.0, %v2866
    %v2868 = vpop.f32.mrf.mxu0
    %2869 = vmatprep.mubr.f32.mxu0 0.0
    %2870 = vmatmul.mubr.f32.gmra.mxu0 %v464
    %v2871 = vpop.f32.mrf.mxu0
    %v2872 = vadd.f32 0.0, %v2871
    %v2873 = vpop.f32.mrf.mxu0
    %2874 = vmatprep.mubr.f32.mxu0 0.0
    %2875 = vmatmul.mubr.f32.gmra.mxu0 %v466
    %v2876 = vpop.f32.mrf.mxu0
    %v2877 = vadd.f32 0.0, %v2876
    %v2878 = vpop.f32.mrf.mxu0
    %2879 = vmatprep.mubr.f32.mxu0 0.0
    %2880 = vmatmul.mubr.f32.gmra.mxu0 %v468
    %v2881 = vpop.f32.mrf.mxu0
    %v2882 = vadd.f32 0.0, %v2881
    %v2883 = vpop.f32.mrf.mxu0
    %2884 = vmatprep.mubr.f32.mxu0 0.0
    %2885 = vmatmul.mubr.f32.gmra.mxu0 %v470
    %v2886 = vpop.f32.mrf.mxu0
    %v2887 = vadd.f32 0.0, %v2886
    %v2888 = vpop.f32.mrf.mxu0
    %2889 = vmatprep.mubr.f32.mxu0 0.0
    %2890 = vmatmul.mubr.f32.gmra.mxu0 %v2664
    %v2891 = vpop.f32.mrf.mxu0
    %v2892 = vadd.f32 0.0, %v2891
    %v2893 = vpop.f32.mrf.mxu0
    %2894 = vmatprep.mubr.f32.mxu0 0.0
    %2895 = vmatmul.mubr.f32.gmra.mxu0 %v2666
    %v2896 = vpop.f32.mrf.mxu0
    %v2897 = vadd.f32 0.0, %v2896
    %v2898 = vpop.f32.mrf.mxu0
    %2899 = vmatprep.mubr.f32.mxu0 0.0
    %2900 = vmatmul.mubr.f32.gmra.mxu0 %v476
    %v2901 = vpop.f32.mrf.mxu0
    %v2902 = vadd.f32 0.0, %v2901
    %v2903 = vpop.f32.mrf.mxu0
    %2904 = vmatprep.mubr.f32.mxu0 0.0
    %2905 = vmatmul.mubr.f32.gmra.mxu0 %v478
    %v2906 = vpop.f32.mrf.mxu0
    %v2907 = vadd.f32 0.0, %v2906
    %v2908 = vpop.f32.mrf.mxu0
    %2909 = vmatprep.mubr.f32.mxu0 0.0
    %2910 = vmatmul.mubr.f32.gmra.mxu0 %v480
    %v2911 = vpop.f32.mrf.mxu0
    %v2912 = vadd.f32 0.0, %v2911
    %v2913 = vpop.f32.mrf.mxu0
    %2914 = vmatprep.mubr.f32.mxu0 0.0
    %2915 = vmatmul.mubr.f32.gmra.mxu0 %v482
    %v2916 = vpop.f32.mrf.mxu0
    %v2917 = vadd.f32 0.0, %v2916
    %v2918 = vpop.f32.mrf.mxu0
    %2919 = vmatprep.mubr.f32.mxu0 0.0
    %2920 = vmatmul.mubr.f32.gmra.mxu0 %v484
    %v2921 = vpop.f32.mrf.mxu0
    %v2922 = vadd.f32 0.0, %v2921
    %v2923 = vpop.f32.mrf.mxu0
    %2924 = vmatprep.mubr.f32.mxu0 0.0
    %2925 = vmatmul.mubr.f32.gmra.mxu0 %v486
    %v2926 = vpop.f32.mrf.mxu0
    %v2927 = vadd.f32 0.0, %v2926
    %v2928 = vpop.f32.mrf.mxu0
    %2929 = vmatprep.mubr.f32.mxu0 0.0
    %2930 = vmatmul.mubr.f32.gmra.mxu0 %v488
    %v2931 = vpop.f32.mrf.mxu0
    %v2932 = vadd.f32 0.0, %v2931
    %v2933 = vpop.f32.mrf.mxu0
    %2934 = vmatprep.mubr.f32.mxu0 0.0
    %2935 = vmatmul.mubr.f32.gmra.mxu0 %v490
    %v2936 = vpop.f32.mrf.mxu0
    %v2937 = vadd.f32 0.0, %v2936
    %v2938 = vpop.f32.mrf.mxu0
    %2939 = vmatprep.mubr.f32.mxu0 0.0
    %2940 = vmatmul.mubr.f32.gmra.mxu0 %v492
    %v2941 = vpop.f32.mrf.mxu0
    %v2942 = vadd.f32 0.0, %v2941
    %v2943 = vpop.f32.mrf.mxu0
    %2944 = vmatprep.mubr.f32.mxu0 0.0
    %2945 = vmatmul.mubr.f32.gmra.mxu0 %v494
    %v2946 = vpop.f32.mrf.mxu0
    %v2947 = vadd.f32 0.0, %v2946
    %v2948 = vpop.f32.mrf.mxu0
    %2949 = vmatprep.mubr.f32.mxu0 0.0
    %2950 = vmatmul.mubr.f32.gmra.mxu0 %v496
    %v2951 = vpop.f32.mrf.mxu0
    %v2952 = vadd.f32 0.0, %v2951
    %v2953 = vpop.f32.mrf.mxu0
    %2954 = vmatprep.mubr.f32.mxu0 0.0
    %2955 = vmatmul.mubr.f32.gmra.mxu0 %v498
    %v2956 = vpop.f32.mrf.mxu0
    %v2957 = vadd.f32 0.0, %v2956
    %v2958 = vpop.f32.mrf.mxu0
    %2959 = vmatprep.mubr.f32.mxu0 0.0
    %2960 = vmatmul.mubr.f32.gmra.mxu0 %v500
    %v2961 = vpop.f32.mrf.mxu0
    %v2962 = vadd.f32 0.0, %v2961
    %v2963 = vpop.f32.mrf.mxu0
    %2964 = vmatprep.mubr.f32.mxu0 0.0
    %2965 = vmatmul.mubr.f32.gmra.mxu0 %v502
    %v2966 = vpop.f32.mrf.mxu0
    %v2967 = vadd.f32 0.0, %v2966
    %v2968 = vpop.f32.mrf.mxu0
    %2969 = vmatprep.mubr.f32.mxu0 0.0
    %2970 = vmatmul.mubr.f32.gmra.mxu0 %v504
    %v2971 = vpop.f32.mrf.mxu0
    %v2972 = vadd.f32 0.0, %v2971
    %v2973 = vpop.f32.mrf.mxu0
    %2974 = vmatprep.mubr.f32.mxu0 0.0
    %2975 = vmatmul.mubr.f32.gmra.mxu0 %v506
    %v2976 = vpop.f32.mrf.mxu0
    %v2977 = vadd.f32 0.0, %v2976
    %v2978 = vpop.f32.mrf.mxu0
    %2979 = vmatprep.mubr.f32.mxu0 0.0
    %2980 = vmatmul.mubr.f32.gmra.mxu0 %v508
    %v2981 = vpop.f32.mrf.mxu0
    %v2982 = vadd.f32 0.0, %v2981
    %v2983 = vpop.f32.mrf.mxu0
    %2984 = vmatprep.mubr.f32.mxu0 0.0
    %2985 = vmatmul.mubr.f32.gmra.mxu0 %v510
    %v2986 = vpop.f32.mrf.mxu0
    %v2987 = vadd.f32 0.0, %v2986
    %v2988 = vpop.f32.mrf.mxu0
    %2989 = vmatprep.mubr.f32.mxu0 0.0
    %2990 = vmatmul.mubr.f32.gmra.mxu0 %v512
    %v2991 = vpop.f32.mrf.mxu0
    %v2992 = vadd.f32 0.0, %v2991
    %v2993 = vpop.f32.mrf.mxu0
    %2994 = vmatprep.mubr.f32.mxu0 0.0
    %2995 = vmatmul.mubr.f32.gmra.mxu0 %v514
    %v2996 = vpop.f32.mrf.mxu0
    %v2997 = vadd.f32 0.0, %v2996
    %v2998 = vpop.f32.mrf.mxu0
    %2999 = vmatprep.mubr.f32.mxu0 0.0
    %3000 = vmatmul.mubr.f32.gmra.mxu0 %v516
    %v3001 = vpop.f32.mrf.mxu0
    %v3002 = vadd.f32 0.0, %v3001
    %v3003 = vpop.f32.mrf.mxu0
    %3004 = vmatprep.mubr.f32.mxu0 0.0
    %3005 = vmatmul.mubr.f32.gmra.mxu0 %v518
    %v3006 = vpop.f32.mrf.mxu0
    %v3007 = vadd.f32 0.0, %v3006
    %v3008 = vpop.f32.mrf.mxu0
    %3009 = vmatprep.mubr.f32.mxu0 0.0
    %3010 = vmatmul.mubr.f32.gmra.mxu0 %v520
    %v3011 = vpop.f32.mrf.mxu0
    %v3012 = vadd.f32 0.0, %v3011
    %v3013 = vpop.f32.mrf.mxu0
    %3014 = vmatprep.mubr.f32.mxu0 0.0
    %3015 = vmatmul.mubr.f32.gmra.mxu0 %v522
    %v3016 = vpop.f32.mrf.mxu0
    %v3017 = vadd.f32 0.0, %v3016
    %v3018 = vpop.f32.mrf.mxu0
    %3019 = vmatprep.mubr.f32.mxu0 0.0
    %3020 = vmatmul.mubr.f32.gmra.mxu0 %v524
    %v3021 = vpop.f32.mrf.mxu0
    %v3022 = vadd.f32 0.0, %v3021
    %v3023 = vpop.f32.mrf.mxu0
    %3024 = vmatprep.mubr.f32.mxu0 0.0
    %3025 = vmatmul.mubr.f32.gmra.mxu0 %v526
    %v3026 = vpop.f32.mrf.mxu0
    %v3027 = vadd.f32 0.0, %v3026
    %v3028 = vpop.f32.mrf.mxu0
    %3029 = vmatprep.mubr.f32.mxu0 0.0
    %3030 = vmatmul.mubr.f32.gmra.mxu0 %v528
    %v3031 = vpop.f32.mrf.mxu0
    %v3032 = vadd.f32 0.0, %v3031
    %v3033 = vpop.f32.mrf.mxu0
    %3034 = vmatprep.mubr.f32.mxu0 0.0
    %3035 = vmatmul.mubr.f32.gmra.mxu0 %v530
    %v3036 = vpop.f32.mrf.mxu0
    %v3037 = vadd.f32 0.0, %v3036
    %v3038 = vpop.f32.mrf.mxu0
    %3039 = vmatprep.mubr.f32.mxu0 0.0
    %3040 = vmatmul.mubr.f32.gmra.mxu0 %v532
    %v3041 = vpop.f32.mrf.mxu0
    %v3042 = vadd.f32 0.0, %v3041
    %v3043 = vpop.f32.mrf.mxu0
    %3044 = vmatprep.mubr.f32.mxu0 0.0
    %3045 = vmatmul.mubr.f32.gmra.mxu0 %v534
    %v3046 = vpop.f32.mrf.mxu0
    %v3047 = vadd.f32 0.0, %v3046
    %v3048 = vpop.f32.mrf.mxu0
    %3049 = vmatprep.mubr.f32.mxu0 0.0
    %3050 = vmatmul.mubr.f32.gmra.mxu0 %v2668
    %v3051 = vpop.f32.mrf.mxu0
    %v3052 = vadd.f32 0.0, %v3051
    %v3053 = vpop.f32.mrf.mxu0
    %3054 = vmatprep.mubr.f32.mxu0 0.0
    %3055 = vmatmul.mubr.f32.gmra.mxu0 %v2670
    %v3056 = vpop.f32.mrf.mxu0
    %v3057 = vadd.f32 0.0, %v3056
    %v3058 = vpop.f32.mrf.mxu0
    %3059 = vdwg.mxu0
    %v3060 = vadd.f32 %v2586, %v2742
    %v3061 = vadd.f32 %v2587, %v2747
    %v3062 = vadd.f32 %v2588, %v2752
    %v3063 = vadd.f32 %v2589, %v2757
    %v3064 = vadd.f32 %v2590, %v2762
    %v3065 = vadd.f32 %v2591, %v2767
    %v3066 = vadd.f32 %v2592, %v2772
    %v3067 = vadd.f32 %v2593, %v2777
    %v3068 = vadd.f32 %v2594, %v2782
    %v3069 = vadd.f32 %v2595, %v2787
    %v3070 = vadd.f32 %v2596, %v2792
    %v3071 = vadd.f32 %v2597, %v2797
    %v3072 = vadd.f32 %v2598, %v2802
    %v3073 = vadd.f32 %v2599, %v2807
    %v3074 = vadd.f32 %v2600, %v2812
    %v3075 = vadd.f32 %v2601, %v2817
    %v3076 = vadd.f32 %v2602, %v2822
    %v3077 = vadd.f32 %v2603, %v2827
    %v3078 = vadd.f32 %v2604, %v2832
    %v3079 = vadd.f32 %v2605, %v2837
    %v3080 = vadd.f32 %v2606, %v2842
    %v3081 = vadd.f32 %v2607, %v2847
    %v3082 = vadd.f32 %v2608, %v2852
    %v3083 = vadd.f32 %v2609, %v2857
    %v3084 = vadd.f32 %v2610, %v2862
    %v3085 = vadd.f32 %v2611, %v2867
    %v3086 = vadd.f32 %v2612, %v2872
    %v3087 = vadd.f32 %v2613, %v2877
    %v3088 = vadd.f32 %v2614, %v2882
    %v3089 = vadd.f32 %v2615, %v2887
    %v3090 = vadd.f32 %v2616, %v2892
    %v3091 = vadd.f32 %v2617, %v2897
    %v3092 = vadd.f32 %v2618, %v2902
    %v3093 = vadd.f32 %v2619, %v2907
    %v3094 = vadd.f32 %v2620, %v2912
    %v3095 = vadd.f32 %v2621, %v2917
    %v3096 = vadd.f32 %v2622, %v2922
    %v3097 = vadd.f32 %v2623, %v2927
    %v3098 = vadd.f32 %v2624, %v2932
    %v3099 = vadd.f32 %v2625, %v2937
    %v3100 = vadd.f32 %v2626, %v2942
    %v3101 = vadd.f32 %v2627, %v2947
    %v3102 = vadd.f32 %v2628, %v2952
    %v3103 = vadd.f32 %v2629, %v2957
    %v3104 = vadd.f32 %v2630, %v2962
    %v3105 = vadd.f32 %v2631, %v2967
    %v3106 = vadd.f32 %v2632, %v2972
    %v3107 = vadd.f32 %v2633, %v2977
    %v3108 = vadd.f32 %v2634, %v2982
    %v3109 = vadd.f32 %v2635, %v2987
    %v3110 = vadd.f32 %v2636, %v2992
    %v3111 = vadd.f32 %v2637, %v2997
    %v3112 = vadd.f32 %v2638, %v3002
    %v3113 = vadd.f32 %v2639, %v3007
    %v3114 = vadd.f32 %v2640, %v3012
    %v3115 = vadd.f32 %v2641, %v3017
    %v3116 = vadd.f32 %v2642, %v3022
    %v3117 = vadd.f32 %v2643, %v3027
    %v3118 = vadd.f32 %v2644, %v3032
    %v3119 = vadd.f32 %v2645, %v3037
    %v3120 = vadd.f32 %v2646, %v3042
    %v3121 = vadd.f32 %v2647, %v3047
    %v3122 = vadd.f32 %v2648, %v3052
    %v3123 = vadd.f32 %v2649, %v3057
    %v3124 = vrot.slane %v87, 2
    %v3125 = vrot.slane %v88, 2
    %v3126 = vsel %vm1441, %v3124, %v3125
    %v3127 = vrot.slane %v89, 2
    %v3128 = vsel %vm1441, %v3125, %v3127
    %v3129 = vrot.slane %v141, 2
    %v3130 = vrot.slane %v142, 2
    %v3131 = vsel %vm1441, %v3129, %v3130
    %v3132 = vrot.slane %v143, 2
    %v3133 = vsel %vm1441, %v3130, %v3132
    %s3134 = scalar_lea.vmem %s1, 20
    %v3135 = vld [vmem:[%s3134] sm:$0xf]
    %v3136 = vsel %vm407, %v3126, 0
    %v3138 = vsel %vm407, %v3128, 0
    %v3140 = vsel %vm407, %v3131, 0
    %v3142 = vsel %vm407, %v3133, 0
    %v3145 = vsel %vm536, %v3135, 0
    %3147 = vmatprep.subr.mxu0 0.0
    %3148 = vmatpush1.msra.mxu0 0.0
    %3149 = vmatprep.subr.mxu0 0.0
    %3150 = vmatpush1.msra.mxu0 0.0
    %3151 = vmatprep.subr.mxu0 0.0
    %3152 = vmatpush1.msra.mxu0 0.0
    %3153 = vmatprep.subr.mxu0 0.0
    %3154 = vmatpush1.msra.mxu0 0.0
    %3155 = vmatprep.subr.mxu0 0.0
    %3156 = vmatpush1.msra.mxu0 0.0
    %3157 = vmatprep.subr.mxu0 0.0
    %3158 = vmatpush1.msra.mxu0 0.0
    %3159 = vmatprep.subr.mxu0 0.0
    %3160 = vmatpush1.msra.mxu0 0.0
    %3161 = vmatprep.subr.mxu0 0.0
    %3162 = vmatpush1.msra.mxu0 0.0
    %3163 = vmatprep.subr.mxu0 0.0
    %3164 = vmatpush1.msra.mxu0 0.0
    %3165 = vmatprep.subr.mxu0 0.0
    %3166 = vmatpush1.msra.mxu0 0.0
    %3167 = vmatprep.subr.mxu0 0.0
    %3168 = vmatpush1.msra.mxu0 0.0
    %3169 = vmatprep.subr.mxu0 0.0
    %3170 = vmatpush1.msra.mxu0 0.0
    %3171 = vmatprep.subr.mxu0 0.0
    %3172 = vmatpush1.msra.mxu0 0.0
    %3173 = vmatprep.subr.mxu0 0.0
    %3174 = vmatpush1.msra.mxu0 0.0
    %3175 = vmatprep.subr.mxu0 0.0
    %3176 = vmatpush1.msra.mxu0 0.0
    %3177 = vmatprep.subr.mxu0 0.0
    %3178 = vmatpush1.msra.mxu0 %v3145
    %3179 = vmatprep.subr.mxu0 0.0
    %3180 = vmatpush2.msra.mxu0 0.0
    %3181 = vmatprep.subr.mxu0 0.0
    %3182 = vmatpush2.msra.mxu0 0.0
    %3183 = vmatprep.subr.mxu0 0.0
    %3184 = vmatpush2.msra.mxu0 0.0
    %3185 = vmatprep.subr.mxu0 0.0
    %3186 = vmatpush2.msra.mxu0 0.0
    %3187 = vmatprep.subr.mxu0 0.0
    %3188 = vmatpush2.msra.mxu0 0.0
    %3189 = vmatprep.subr.mxu0 0.0
    %3190 = vmatpush2.msra.mxu0 0.0
    %3191 = vmatprep.subr.mxu0 0.0
    %3192 = vmatpush2.msra.mxu0 0.0
    %3193 = vmatprep.subr.mxu0 0.0
    %3194 = vmatpush2.msra.mxu0 0.0
    %3195 = vmatprep.subr.mxu0 0.0
    %3196 = vmatpush2.msra.mxu0 0.0
    %3197 = vmatprep.subr.mxu0 0.0
    %3198 = vmatpush2.msra.mxu0 0.0
    %3199 = vmatprep.subr.mxu0 0.0
    %3200 = vmatpush2.msra.mxu0 0.0
    %3201 = vmatprep.subr.mxu0 0.0
    %3202 = vmatpush2.msra.mxu0 0.0
    %3203 = vmatprep.subr.mxu0 0.0
    %3204 = vmatpush2.msra.mxu0 0.0
    %3205 = vmatprep.subr.mxu0 0.0
    %3206 = vmatpush2.msra.mxu0 0.0
    %3207 = vmatprep.subr.mxu0 0.0
    %3208 = vmatpush2.msra.mxu0 0.0
    %3209 = vmatprep.subr.mxu0 0.0
    %3210 = vmatpush2.msra.mxu0 0.0
    %3211 = vmatprep.mubr.f32.mxu0 0.0
    %3212 = vmatmul.mubr.f32.gmra.mxu0 %v1608
    %v3213 = vpop.f32.mrf.mxu0
    %v3214 = vadd.f32 0.0, %v3213
    %v3215 = vpop.f32.mrf.mxu0
    %3216 = vmatprep.mubr.f32.mxu0 0.0
    %3217 = vmatmul.mubr.f32.gmra.mxu0 %v1610
    %v3218 = vpop.f32.mrf.mxu0
    %v3219 = vadd.f32 0.0, %v3218
    %v3220 = vpop.f32.mrf.mxu0
    %3221 = vmatprep.mubr.f32.mxu0 0.0
    %3222 = vmatmul.mubr.f32.gmra.mxu0 %v1612
    %v3223 = vpop.f32.mrf.mxu0
    %v3224 = vadd.f32 0.0, %v3223
    %v3225 = vpop.f32.mrf.mxu0
    %3226 = vmatprep.mubr.f32.mxu0 0.0
    %3227 = vmatmul.mubr.f32.gmra.mxu0 %v1614
    %v3228 = vpop.f32.mrf.mxu0
    %v3229 = vadd.f32 0.0, %v3228
    %v3230 = vpop.f32.mrf.mxu0
    %3231 = vmatprep.mubr.f32.mxu0 0.0
    %3232 = vmatmul.mubr.f32.gmra.mxu0 %v1616
    %v3233 = vpop.f32.mrf.mxu0
    %v3234 = vadd.f32 0.0, %v3233
    %v3235 = vpop.f32.mrf.mxu0
    %3236 = vmatprep.mubr.f32.mxu0 0.0
    %3237 = vmatmul.mubr.f32.gmra.mxu0 %v1618
    %v3238 = vpop.f32.mrf.mxu0
    %v3239 = vadd.f32 0.0, %v3238
    %v3240 = vpop.f32.mrf.mxu0
    %3241 = vmatprep.mubr.f32.mxu0 0.0
    %3242 = vmatmul.mubr.f32.gmra.mxu0 %v1620
    %v3243 = vpop.f32.mrf.mxu0
    %v3244 = vadd.f32 0.0, %v3243
    %v3245 = vpop.f32.mrf.mxu0
    %3246 = vmatprep.mubr.f32.mxu0 0.0
    %3247 = vmatmul.mubr.f32.gmra.mxu0 %v1622
    %v3248 = vpop.f32.mrf.mxu0
    %v3249 = vadd.f32 0.0, %v3248
    %v3250 = vpop.f32.mrf.mxu0
    %3251 = vmatprep.mubr.f32.mxu0 0.0
    %3252 = vmatmul.mubr.f32.gmra.mxu0 %v1624
    %v3253 = vpop.f32.mrf.mxu0
    %v3254 = vadd.f32 0.0, %v3253
    %v3255 = vpop.f32.mrf.mxu0
    %3256 = vmatprep.mubr.f32.mxu0 0.0
    %3257 = vmatmul.mubr.f32.gmra.mxu0 %v1626
    %v3258 = vpop.f32.mrf.mxu0
    %v3259 = vadd.f32 0.0, %v3258
    %v3260 = vpop.f32.mrf.mxu0
    %3261 = vmatprep.mubr.f32.mxu0 0.0
    %3262 = vmatmul.mubr.f32.gmra.mxu0 %v1628
    %v3263 = vpop.f32.mrf.mxu0
    %v3264 = vadd.f32 0.0, %v3263
    %v3265 = vpop.f32.mrf.mxu0
    %3266 = vmatprep.mubr.f32.mxu0 0.0
    %3267 = vmatmul.mubr.f32.gmra.mxu0 %v1630
    %v3268 = vpop.f32.mrf.mxu0
    %v3269 = vadd.f32 0.0, %v3268
    %v3270 = vpop.f32.mrf.mxu0
    %3271 = vmatprep.mubr.f32.mxu0 0.0
    %3272 = vmatmul.mubr.f32.gmra.mxu0 %v1632
    %v3273 = vpop.f32.mrf.mxu0
    %v3274 = vadd.f32 0.0, %v3273
    %v3275 = vpop.f32.mrf.mxu0
    %3276 = vmatprep.mubr.f32.mxu0 0.0
    %3277 = vmatmul.mubr.f32.gmra.mxu0 %v1634
    %v3278 = vpop.f32.mrf.mxu0
    %v3279 = vadd.f32 0.0, %v3278
    %v3280 = vpop.f32.mrf.mxu0
    %3281 = vmatprep.mubr.f32.mxu0 0.0
    %3282 = vmatmul.mubr.f32.gmra.mxu0 %v1636
    %v3283 = vpop.f32.mrf.mxu0
    %v3284 = vadd.f32 0.0, %v3283
    %v3285 = vpop.f32.mrf.mxu0
    %3286 = vmatprep.mubr.f32.mxu0 0.0
    %3287 = vmatmul.mubr.f32.gmra.mxu0 %v1638
    %v3288 = vpop.f32.mrf.mxu0
    %v3289 = vadd.f32 0.0, %v3288
    %v3290 = vpop.f32.mrf.mxu0
    %3291 = vmatprep.mubr.f32.mxu0 0.0
    %3292 = vmatmul.mubr.f32.gmra.mxu0 %v1640
    %v3293 = vpop.f32.mrf.mxu0
    %v3294 = vadd.f32 0.0, %v3293
    %v3295 = vpop.f32.mrf.mxu0
    %3296 = vmatprep.mubr.f32.mxu0 0.0
    %3297 = vmatmul.mubr.f32.gmra.mxu0 %v1642
    %v3298 = vpop.f32.mrf.mxu0
    %v3299 = vadd.f32 0.0, %v3298
    %v3300 = vpop.f32.mrf.mxu0
    %3301 = vmatprep.mubr.f32.mxu0 0.0
    %3302 = vmatmul.mubr.f32.gmra.mxu0 %v1644
    %v3303 = vpop.f32.mrf.mxu0
    %v3304 = vadd.f32 0.0, %v3303
    %v3305 = vpop.f32.mrf.mxu0
    %3306 = vmatprep.mubr.f32.mxu0 0.0
    %3307 = vmatmul.mubr.f32.gmra.mxu0 %v1646
    %v3308 = vpop.f32.mrf.mxu0
    %v3309 = vadd.f32 0.0, %v3308
    %v3310 = vpop.f32.mrf.mxu0
    %3311 = vmatprep.mubr.f32.mxu0 0.0
    %3312 = vmatmul.mubr.f32.gmra.mxu0 %v1648
    %v3313 = vpop.f32.mrf.mxu0
    %v3314 = vadd.f32 0.0, %v3313
    %v3315 = vpop.f32.mrf.mxu0
    %3316 = vmatprep.mubr.f32.mxu0 0.0
    %3317 = vmatmul.mubr.f32.gmra.mxu0 %v1650
    %v3318 = vpop.f32.mrf.mxu0
    %v3319 = vadd.f32 0.0, %v3318
    %v3320 = vpop.f32.mrf.mxu0
    %3321 = vmatprep.mubr.f32.mxu0 0.0
    %3322 = vmatmul.mubr.f32.gmra.mxu0 %v1652
    %v3323 = vpop.f32.mrf.mxu0
    %v3324 = vadd.f32 0.0, %v3323
    %v3325 = vpop.f32.mrf.mxu0
    %3326 = vmatprep.mubr.f32.mxu0 0.0
    %3327 = vmatmul.mubr.f32.gmra.mxu0 %v1654
    %v3328 = vpop.f32.mrf.mxu0
    %v3329 = vadd.f32 0.0, %v3328
    %v3330 = vpop.f32.mrf.mxu0
    %3331 = vmatprep.mubr.f32.mxu0 0.0
    %3332 = vmatmul.mubr.f32.gmra.mxu0 %v1656
    %v3333 = vpop.f32.mrf.mxu0
    %v3334 = vadd.f32 0.0, %v3333
    %v3335 = vpop.f32.mrf.mxu0
    %3336 = vmatprep.mubr.f32.mxu0 0.0
    %3337 = vmatmul.mubr.f32.gmra.mxu0 %v1658
    %v3338 = vpop.f32.mrf.mxu0
    %v3339 = vadd.f32 0.0, %v3338
    %v3340 = vpop.f32.mrf.mxu0
    %3341 = vmatprep.mubr.f32.mxu0 0.0
    %3342 = vmatmul.mubr.f32.gmra.mxu0 %v1660
    %v3343 = vpop.f32.mrf.mxu0
    %v3344 = vadd.f32 0.0, %v3343
    %v3345 = vpop.f32.mrf.mxu0
    %3346 = vmatprep.mubr.f32.mxu0 0.0
    %3347 = vmatmul.mubr.f32.gmra.mxu0 %v1662
    %v3348 = vpop.f32.mrf.mxu0
    %v3349 = vadd.f32 0.0, %v3348
    %v3350 = vpop.f32.mrf.mxu0
    %3351 = vmatprep.mubr.f32.mxu0 0.0
    %3352 = vmatmul.mubr.f32.gmra.mxu0 %v1664
    %v3353 = vpop.f32.mrf.mxu0
    %v3354 = vadd.f32 0.0, %v3353
    %v3355 = vpop.f32.mrf.mxu0
    %3356 = vmatprep.mubr.f32.mxu0 0.0
    %3357 = vmatmul.mubr.f32.gmra.mxu0 %v1666
    %v3358 = vpop.f32.mrf.mxu0
    %v3359 = vadd.f32 0.0, %v3358
    %v3360 = vpop.f32.mrf.mxu0
    %3361 = vmatprep.mubr.f32.mxu0 0.0
    %3362 = vmatmul.mubr.f32.gmra.mxu0 %v3136
    %v3363 = vpop.f32.mrf.mxu0
    %v3364 = vadd.f32 0.0, %v3363
    %v3365 = vpop.f32.mrf.mxu0
    %3366 = vmatprep.mubr.f32.mxu0 0.0
    %3367 = vmatmul.mubr.f32.gmra.mxu0 %v3138
    %v3368 = vpop.f32.mrf.mxu0
    %v3369 = vadd.f32 0.0, %v3368
    %v3370 = vpop.f32.mrf.mxu0
    %3371 = vmatprep.mubr.f32.mxu0 0.0
    %3372 = vmatmul.mubr.f32.gmra.mxu0 %v1672
    %v3373 = vpop.f32.mrf.mxu0
    %v3374 = vadd.f32 0.0, %v3373
    %v3375 = vpop.f32.mrf.mxu0
    %3376 = vmatprep.mubr.f32.mxu0 0.0
    %3377 = vmatmul.mubr.f32.gmra.mxu0 %v1674
    %v3378 = vpop.f32.mrf.mxu0
    %v3379 = vadd.f32 0.0, %v3378
    %v3380 = vpop.f32.mrf.mxu0
    %3381 = vmatprep.mubr.f32.mxu0 0.0
    %3382 = vmatmul.mubr.f32.gmra.mxu0 %v1676
    %v3383 = vpop.f32.mrf.mxu0
    %v3384 = vadd.f32 0.0, %v3383
    %v3385 = vpop.f32.mrf.mxu0
    %3386 = vmatprep.mubr.f32.mxu0 0.0
    %3387 = vmatmul.mubr.f32.gmra.mxu0 %v1678
    %v3388 = vpop.f32.mrf.mxu0
    %v3389 = vadd.f32 0.0, %v3388
    %v3390 = vpop.f32.mrf.mxu0
    %3391 = vmatprep.mubr.f32.mxu0 0.0
    %3392 = vmatmul.mubr.f32.gmra.mxu0 %v1680
    %v3393 = vpop.f32.mrf.mxu0
    %v3394 = vadd.f32 0.0, %v3393
    %v3395 = vpop.f32.mrf.mxu0
    %3396 = vmatprep.mubr.f32.mxu0 0.0
    %3397 = vmatmul.mubr.f32.gmra.mxu0 %v1682
    %v3398 = vpop.f32.mrf.mxu0
    %v3399 = vadd.f32 0.0, %v3398
    %v3400 = vpop.f32.mrf.mxu0
    %3401 = vmatprep.mubr.f32.mxu0 0.0
    %3402 = vmatmul.mubr.f32.gmra.mxu0 %v1684
    %v3403 = vpop.f32.mrf.mxu0
    %v3404 = vadd.f32 0.0, %v3403
    %v3405 = vpop.f32.mrf.mxu0
    %3406 = vmatprep.mubr.f32.mxu0 0.0
    %3407 = vmatmul.mubr.f32.gmra.mxu0 %v1686
    %v3408 = vpop.f32.mrf.mxu0
    %v3409 = vadd.f32 0.0, %v3408
    %v3410 = vpop.f32.mrf.mxu0
    %3411 = vmatprep.mubr.f32.mxu0 0.0
    %3412 = vmatmul.mubr.f32.gmra.mxu0 %v1688
    %v3413 = vpop.f32.mrf.mxu0
    %v3414 = vadd.f32 0.0, %v3413
    %v3415 = vpop.f32.mrf.mxu0
    %3416 = vmatprep.mubr.f32.mxu0 0.0
    %3417 = vmatmul.mubr.f32.gmra.mxu0 %v1690
    %v3418 = vpop.f32.mrf.mxu0
    %v3419 = vadd.f32 0.0, %v3418
    %v3420 = vpop.f32.mrf.mxu0
    %3421 = vmatprep.mubr.f32.mxu0 0.0
    %3422 = vmatmul.mubr.f32.gmra.mxu0 %v1692
    %v3423 = vpop.f32.mrf.mxu0
    %v3424 = vadd.f32 0.0, %v3423
    %v3425 = vpop.f32.mrf.mxu0
    %3426 = vmatprep.mubr.f32.mxu0 0.0
    %3427 = vmatmul.mubr.f32.gmra.mxu0 %v1694
    %v3428 = vpop.f32.mrf.mxu0
    %v3429 = vadd.f32 0.0, %v3428
    %v3430 = vpop.f32.mrf.mxu0
    %3431 = vmatprep.mubr.f32.mxu0 0.0
    %3432 = vmatmul.mubr.f32.gmra.mxu0 %v1696
    %v3433 = vpop.f32.mrf.mxu0
    %v3434 = vadd.f32 0.0, %v3433
    %v3435 = vpop.f32.mrf.mxu0
    %3436 = vmatprep.mubr.f32.mxu0 0.0
    %3437 = vmatmul.mubr.f32.gmra.mxu0 %v1698
    %v3438 = vpop.f32.mrf.mxu0
    %v3439 = vadd.f32 0.0, %v3438
    %v3440 = vpop.f32.mrf.mxu0
    %3441 = vmatprep.mubr.f32.mxu0 0.0
    %3442 = vmatmul.mubr.f32.gmra.mxu0 %v1700
    %v3443 = vpop.f32.mrf.mxu0
    %v3444 = vadd.f32 0.0, %v3443
    %v3445 = vpop.f32.mrf.mxu0
    %3446 = vmatprep.mubr.f32.mxu0 0.0
    %3447 = vmatmul.mubr.f32.gmra.mxu0 %v1702
    %v3448 = vpop.f32.mrf.mxu0
    %v3449 = vadd.f32 0.0, %v3448
    %v3450 = vpop.f32.mrf.mxu0
    %3451 = vmatprep.mubr.f32.mxu0 0.0
    %3452 = vmatmul.mubr.f32.gmra.mxu0 %v1704
    %v3453 = vpop.f32.mrf.mxu0
    %v3454 = vadd.f32 0.0, %v3453
    %v3455 = vpop.f32.mrf.mxu0
    %3456 = vmatprep.mubr.f32.mxu0 0.0
    %3457 = vmatmul.mubr.f32.gmra.mxu0 %v1706
    %v3458 = vpop.f32.mrf.mxu0
    %v3459 = vadd.f32 0.0, %v3458
    %v3460 = vpop.f32.mrf.mxu0
    %3461 = vmatprep.mubr.f32.mxu0 0.0
    %3462 = vmatmul.mubr.f32.gmra.mxu0 %v1708
    %v3463 = vpop.f32.mrf.mxu0
    %v3464 = vadd.f32 0.0, %v3463
    %v3465 = vpop.f32.mrf.mxu0
    %3466 = vmatprep.mubr.f32.mxu0 0.0
    %3467 = vmatmul.mubr.f32.gmra.mxu0 %v1710
    %v3468 = vpop.f32.mrf.mxu0
    %v3469 = vadd.f32 0.0, %v3468
    %v3470 = vpop.f32.mrf.mxu0
    %3471 = vmatprep.mubr.f32.mxu0 0.0
    %3472 = vmatmul.mubr.f32.gmra.mxu0 %v1712
    %v3473 = vpop.f32.mrf.mxu0
    %v3474 = vadd.f32 0.0, %v3473
    %v3475 = vpop.f32.mrf.mxu0
    %3476 = vmatprep.mubr.f32.mxu0 0.0
    %3477 = vmatmul.mubr.f32.gmra.mxu0 %v1714
    %v3478 = vpop.f32.mrf.mxu0
    %v3479 = vadd.f32 0.0, %v3478
    %v3480 = vpop.f32.mrf.mxu0
    %3481 = vmatprep.mubr.f32.mxu0 0.0
    %3482 = vmatmul.mubr.f32.gmra.mxu0 %v1716
    %v3483 = vpop.f32.mrf.mxu0
    %v3484 = vadd.f32 0.0, %v3483
    %v3485 = vpop.f32.mrf.mxu0
    %3486 = vmatprep.mubr.f32.mxu0 0.0
    %3487 = vmatmul.mubr.f32.gmra.mxu0 %v1718
    %v3488 = vpop.f32.mrf.mxu0
    %v3489 = vadd.f32 0.0, %v3488
    %v3490 = vpop.f32.mrf.mxu0
    %3491 = vmatprep.mubr.f32.mxu0 0.0
    %3492 = vmatmul.mubr.f32.gmra.mxu0 %v1720
    %v3493 = vpop.f32.mrf.mxu0
    %v3494 = vadd.f32 0.0, %v3493
    %v3495 = vpop.f32.mrf.mxu0
    %3496 = vmatprep.mubr.f32.mxu0 0.0
    %3497 = vmatmul.mubr.f32.gmra.mxu0 %v1722
    %v3498 = vpop.f32.mrf.mxu0
    %v3499 = vadd.f32 0.0, %v3498
    %v3500 = vpop.f32.mrf.mxu0
    %3501 = vmatprep.mubr.f32.mxu0 0.0
    %3502 = vmatmul.mubr.f32.gmra.mxu0 %v1724
    %v3503 = vpop.f32.mrf.mxu0
    %v3504 = vadd.f32 0.0, %v3503
    %v3505 = vpop.f32.mrf.mxu0
    %3506 = vmatprep.mubr.f32.mxu0 0.0
    %3507 = vmatmul.mubr.f32.gmra.mxu0 %v1726
    %v3508 = vpop.f32.mrf.mxu0
    %v3509 = vadd.f32 0.0, %v3508
    %v3510 = vpop.f32.mrf.mxu0
    %3511 = vmatprep.mubr.f32.mxu0 0.0
    %3512 = vmatmul.mubr.f32.gmra.mxu0 %v1728
    %v3513 = vpop.f32.mrf.mxu0
    %v3514 = vadd.f32 0.0, %v3513
    %v3515 = vpop.f32.mrf.mxu0
    %3516 = vmatprep.mubr.f32.mxu0 0.0
    %3517 = vmatmul.mubr.f32.gmra.mxu0 %v1730
    %v3518 = vpop.f32.mrf.mxu0
    %v3519 = vadd.f32 0.0, %v3518
    %v3520 = vpop.f32.mrf.mxu0
    %3521 = vmatprep.mubr.f32.mxu0 0.0
    %3522 = vmatmul.mubr.f32.gmra.mxu0 %v3140
    %v3523 = vpop.f32.mrf.mxu0
    %v3524 = vadd.f32 0.0, %v3523
    %v3525 = vpop.f32.mrf.mxu0
    %3526 = vmatprep.mubr.f32.mxu0 0.0
    %3527 = vmatmul.mubr.f32.gmra.mxu0 %v3142
    %v3528 = vpop.f32.mrf.mxu0
    %v3529 = vadd.f32 0.0, %v3528
    %v3530 = vpop.f32.mrf.mxu0
    %3531 = vdwg.mxu0
    %v3532 = vadd.f32 %v3060, %v3214
    %v3533 = vadd.f32 %v3061, %v3219
    %v3534 = vadd.f32 %v3062, %v3224
    %v3535 = vadd.f32 %v3063, %v3229
    %v3536 = vadd.f32 %v3064, %v3234
    %v3537 = vadd.f32 %v3065, %v3239
    %v3538 = vadd.f32 %v3066, %v3244
    %v3539 = vadd.f32 %v3067, %v3249
    %v3540 = vadd.f32 %v3068, %v3254
    %v3541 = vadd.f32 %v3069, %v3259
    %v3542 = vadd.f32 %v3070, %v3264
    %v3543 = vadd.f32 %v3071, %v3269
    %v3544 = vadd.f32 %v3072, %v3274
    %v3545 = vadd.f32 %v3073, %v3279
    %v3546 = vadd.f32 %v3074, %v3284
    %v3547 = vadd.f32 %v3075, %v3289
    %v3548 = vadd.f32 %v3076, %v3294
    %v3549 = vadd.f32 %v3077, %v3299
    %v3550 = vadd.f32 %v3078, %v3304
    %v3551 = vadd.f32 %v3079, %v3309
    %v3552 = vadd.f32 %v3080, %v3314
    %v3553 = vadd.f32 %v3081, %v3319
    %v3554 = vadd.f32 %v3082, %v3324
    %v3555 = vadd.f32 %v3083, %v3329
    %v3556 = vadd.f32 %v3084, %v3334
    %v3557 = vadd.f32 %v3085, %v3339
    %v3558 = vadd.f32 %v3086, %v3344
    %v3559 = vadd.f32 %v3087, %v3349
    %v3560 = vadd.f32 %v3088, %v3354
    %v3561 = vadd.f32 %v3089, %v3359
    %v3562 = vadd.f32 %v3090, %v3364
    %v3563 = vadd.f32 %v3091, %v3369
    %v3564 = vadd.f32 %v3092, %v3374
    %v3565 = vadd.f32 %v3093, %v3379
    %v3566 = vadd.f32 %v3094, %v3384
    %v3567 = vadd.f32 %v3095, %v3389
    %v3568 = vadd.f32 %v3096, %v3394
    %v3569 = vadd.f32 %v3097, %v3399
    %v3570 = vadd.f32 %v3098, %v3404
    %v3571 = vadd.f32 %v3099, %v3409
    %v3572 = vadd.f32 %v3100, %v3414
    %v3573 = vadd.f32 %v3101, %v3419
    %v3574 = vadd.f32 %v3102, %v3424
    %v3575 = vadd.f32 %v3103, %v3429
    %v3576 = vadd.f32 %v3104, %v3434
    %v3577 = vadd.f32 %v3105, %v3439
    %v3578 = vadd.f32 %v3106, %v3444
    %v3579 = vadd.f32 %v3107, %v3449
    %v3580 = vadd.f32 %v3108, %v3454
    %v3581 = vadd.f32 %v3109, %v3459
    %v3582 = vadd.f32 %v3110, %v3464
    %v3583 = vadd.f32 %v3111, %v3469
    %v3584 = vadd.f32 %v3112, %v3474
    %v3585 = vadd.f32 %v3113, %v3479
    %v3586 = vadd.f32 %v3114, %v3484
    %v3587 = vadd.f32 %v3115, %v3489
    %v3588 = vadd.f32 %v3116, %v3494
    %v3589 = vadd.f32 %v3117, %v3499
    %v3590 = vadd.f32 %v3118, %v3504
    %v3591 = vadd.f32 %v3119, %v3509
    %v3592 = vadd.f32 %v3120, %v3514
    %v3593 = vadd.f32 %v3121, %v3519
    %v3594 = vadd.f32 %v3122, %v3524
    %v3595 = vadd.f32 %v3123, %v3529
    %s3596 = scalar_lea.vmem %s1, 24
    %v3597 = vld [vmem:[%s3596] sm:$0xf]
    %v3599 = vsel %vm407, %v90, 0
    %v3602 = vsel %vm407, %v91, 0
    %v3605 = vsel %vm407, %v144, 0
    %v3608 = vsel %vm407, %v145, 0
    %v3611 = vsel %vm536, %v3597, 0
    %3613 = vmatprep.subr.mxu0 0.0
    %3614 = vmatpush1.msra.mxu0 0.0
    %3615 = vmatprep.subr.mxu0 0.0
    %3616 = vmatpush1.msra.mxu0 0.0
    %3617 = vmatprep.subr.mxu0 0.0
    %3618 = vmatpush1.msra.mxu0 0.0
    %3619 = vmatprep.subr.mxu0 0.0
    %3620 = vmatpush1.msra.mxu0 0.0
    %3621 = vmatprep.subr.mxu0 0.0
    %3622 = vmatpush1.msra.mxu0 0.0
    %3623 = vmatprep.subr.mxu0 0.0
    %3624 = vmatpush1.msra.mxu0 0.0
    %3625 = vmatprep.subr.mxu0 0.0
    %3626 = vmatpush1.msra.mxu0 0.0
    %3627 = vmatprep.subr.mxu0 0.0
    %3628 = vmatpush1.msra.mxu0 0.0
    %3629 = vmatprep.subr.mxu0 0.0
    %3630 = vmatpush1.msra.mxu0 0.0
    %3631 = vmatprep.subr.mxu0 0.0
    %3632 = vmatpush1.msra.mxu0 0.0
    %3633 = vmatprep.subr.mxu0 0.0
    %3634 = vmatpush1.msra.mxu0 0.0
    %3635 = vmatprep.subr.mxu0 0.0
    %3636 = vmatpush1.msra.mxu0 0.0
    %3637 = vmatprep.subr.mxu0 0.0
    %3638 = vmatpush1.msra.mxu0 0.0
    %3639 = vmatprep.subr.mxu0 0.0
    %3640 = vmatpush1.msra.mxu0 0.0
    %3641 = vmatprep.subr.mxu0 0.0
    %3642 = vmatpush1.msra.mxu0 0.0
    %3643 = vmatprep.subr.mxu0 0.0
    %3644 = vmatpush1.msra.mxu0 %v3611
    %3645 = vmatprep.subr.mxu0 0.0
    %3646 = vmatpush2.msra.mxu0 0.0
    %3647 = vmatprep.subr.mxu0 0.0
    %3648 = vmatpush2.msra.mxu0 0.0
    %3649 = vmatprep.subr.mxu0 0.0
    %3650 = vmatpush2.msra.mxu0 0.0
    %3651 = vmatprep.subr.mxu0 0.0
    %3652 = vmatpush2.msra.mxu0 0.0
    %3653 = vmatprep.subr.mxu0 0.0
    %3654 = vmatpush2.msra.mxu0 0.0
    %3655 = vmatprep.subr.mxu0 0.0
    %3656 = vmatpush2.msra.mxu0 0.0
    %3657 = vmatprep.subr.mxu0 0.0
    %3658 = vmatpush2.msra.mxu0 0.0
    %3659 = vmatprep.subr.mxu0 0.0
    %3660 = vmatpush2.msra.mxu0 0.0
    %3661 = vmatprep.subr.mxu0 0.0
    %3662 = vmatpush2.msra.mxu0 0.0
    %3663 = vmatprep.subr.mxu0 0.0
    %3664 = vmatpush2.msra.mxu0 0.0
    %3665 = vmatprep.subr.mxu0 0.0
    %3666 = vmatpush2.msra.mxu0 0.0
    %3667 = vmatprep.subr.mxu0 0.0
    %3668 = vmatpush2.msra.mxu0 0.0
    %3669 = vmatprep.subr.mxu0 0.0
    %3670 = vmatpush2.msra.mxu0 0.0
    %3671 = vmatprep.subr.mxu0 0.0
    %3672 = vmatpush2.msra.mxu0 0.0
    %3673 = vmatprep.subr.mxu0 0.0
    %3674 = vmatpush2.msra.mxu0 0.0
    %3675 = vmatprep.subr.mxu0 0.0
    %3676 = vmatpush2.msra.mxu0 0.0
    %3677 = vmatprep.mubr.f32.mxu0 0.0
    %3678 = vmatmul.mubr.f32.gmra.mxu0 %v933
    %v3679 = vpop.f32.mrf.mxu0
    %v3680 = vadd.f32 0.0, %v3679
    %v3681 = vpop.f32.mrf.mxu0
    %3682 = vmatprep.mubr.f32.mxu0 0.0
    %3683 = vmatmul.mubr.f32.gmra.mxu0 %v935
    %v3684 = vpop.f32.mrf.mxu0
    %v3685 = vadd.f32 0.0, %v3684
    %v3686 = vpop.f32.mrf.mxu0
    %3687 = vmatprep.mubr.f32.mxu0 0.0
    %3688 = vmatmul.mubr.f32.gmra.mxu0 %v937
    %v3689 = vpop.f32.mrf.mxu0
    %v3690 = vadd.f32 0.0, %v3689
    %v3691 = vpop.f32.mrf.mxu0
    %3692 = vmatprep.mubr.f32.mxu0 0.0
    %3693 = vmatmul.mubr.f32.gmra.mxu0 %v939
    %v3694 = vpop.f32.mrf.mxu0
    %v3695 = vadd.f32 0.0, %v3694
    %v3696 = vpop.f32.mrf.mxu0
    %3697 = vmatprep.mubr.f32.mxu0 0.0
    %3698 = vmatmul.mubr.f32.gmra.mxu0 %v941
    %v3699 = vpop.f32.mrf.mxu0
    %v3700 = vadd.f32 0.0, %v3699
    %v3701 = vpop.f32.mrf.mxu0
    %3702 = vmatprep.mubr.f32.mxu0 0.0
    %3703 = vmatmul.mubr.f32.gmra.mxu0 %v943
    %v3704 = vpop.f32.mrf.mxu0
    %v3705 = vadd.f32 0.0, %v3704
    %v3706 = vpop.f32.mrf.mxu0
    %3707 = vmatprep.mubr.f32.mxu0 0.0
    %3708 = vmatmul.mubr.f32.gmra.mxu0 %v945
    %v3709 = vpop.f32.mrf.mxu0
    %v3710 = vadd.f32 0.0, %v3709
    %v3711 = vpop.f32.mrf.mxu0
    %3712 = vmatprep.mubr.f32.mxu0 0.0
    %3713 = vmatmul.mubr.f32.gmra.mxu0 %v947
    %v3714 = vpop.f32.mrf.mxu0
    %v3715 = vadd.f32 0.0, %v3714
    %v3716 = vpop.f32.mrf.mxu0
    %3717 = vmatprep.mubr.f32.mxu0 0.0
    %3718 = vmatmul.mubr.f32.gmra.mxu0 %v949
    %v3719 = vpop.f32.mrf.mxu0
    %v3720 = vadd.f32 0.0, %v3719
    %v3721 = vpop.f32.mrf.mxu0
    %3722 = vmatprep.mubr.f32.mxu0 0.0
    %3723 = vmatmul.mubr.f32.gmra.mxu0 %v951
    %v3724 = vpop.f32.mrf.mxu0
    %v3725 = vadd.f32 0.0, %v3724
    %v3726 = vpop.f32.mrf.mxu0
    %3727 = vmatprep.mubr.f32.mxu0 0.0
    %3728 = vmatmul.mubr.f32.gmra.mxu0 %v953
    %v3729 = vpop.f32.mrf.mxu0
    %v3730 = vadd.f32 0.0, %v3729
    %v3731 = vpop.f32.mrf.mxu0
    %3732 = vmatprep.mubr.f32.mxu0 0.0
    %3733 = vmatmul.mubr.f32.gmra.mxu0 %v955
    %v3734 = vpop.f32.mrf.mxu0
    %v3735 = vadd.f32 0.0, %v3734
    %v3736 = vpop.f32.mrf.mxu0
    %3737 = vmatprep.mubr.f32.mxu0 0.0
    %3738 = vmatmul.mubr.f32.gmra.mxu0 %v957
    %v3739 = vpop.f32.mrf.mxu0
    %v3740 = vadd.f32 0.0, %v3739
    %v3741 = vpop.f32.mrf.mxu0
    %3742 = vmatprep.mubr.f32.mxu0 0.0
    %3743 = vmatmul.mubr.f32.gmra.mxu0 %v959
    %v3744 = vpop.f32.mrf.mxu0
    %v3745 = vadd.f32 0.0, %v3744
    %v3746 = vpop.f32.mrf.mxu0
    %3747 = vmatprep.mubr.f32.mxu0 0.0
    %3748 = vmatmul.mubr.f32.gmra.mxu0 %v961
    %v3749 = vpop.f32.mrf.mxu0
    %v3750 = vadd.f32 0.0, %v3749
    %v3751 = vpop.f32.mrf.mxu0
    %3752 = vmatprep.mubr.f32.mxu0 0.0
    %3753 = vmatmul.mubr.f32.gmra.mxu0 %v963
    %v3754 = vpop.f32.mrf.mxu0
    %v3755 = vadd.f32 0.0, %v3754
    %v3756 = vpop.f32.mrf.mxu0
    %3757 = vmatprep.mubr.f32.mxu0 0.0
    %3758 = vmatmul.mubr.f32.gmra.mxu0 %v965
    %v3759 = vpop.f32.mrf.mxu0
    %v3760 = vadd.f32 0.0, %v3759
    %v3761 = vpop.f32.mrf.mxu0
    %3762 = vmatprep.mubr.f32.mxu0 0.0
    %3763 = vmatmul.mubr.f32.gmra.mxu0 %v967
    %v3764 = vpop.f32.mrf.mxu0
    %v3765 = vadd.f32 0.0, %v3764
    %v3766 = vpop.f32.mrf.mxu0
    %3767 = vmatprep.mubr.f32.mxu0 0.0
    %3768 = vmatmul.mubr.f32.gmra.mxu0 %v969
    %v3769 = vpop.f32.mrf.mxu0
    %v3770 = vadd.f32 0.0, %v3769
    %v3771 = vpop.f32.mrf.mxu0
    %3772 = vmatprep.mubr.f32.mxu0 0.0
    %3773 = vmatmul.mubr.f32.gmra.mxu0 %v971
    %v3774 = vpop.f32.mrf.mxu0
    %v3775 = vadd.f32 0.0, %v3774
    %v3776 = vpop.f32.mrf.mxu0
    %3777 = vmatprep.mubr.f32.mxu0 0.0
    %3778 = vmatmul.mubr.f32.gmra.mxu0 %v973
    %v3779 = vpop.f32.mrf.mxu0
    %v3780 = vadd.f32 0.0, %v3779
    %v3781 = vpop.f32.mrf.mxu0
    %3782 = vmatprep.mubr.f32.mxu0 0.0
    %3783 = vmatmul.mubr.f32.gmra.mxu0 %v975
    %v3784 = vpop.f32.mrf.mxu0
    %v3785 = vadd.f32 0.0, %v3784
    %v3786 = vpop.f32.mrf.mxu0
    %3787 = vmatprep.mubr.f32.mxu0 0.0
    %3788 = vmatmul.mubr.f32.gmra.mxu0 %v977
    %v3789 = vpop.f32.mrf.mxu0
    %v3790 = vadd.f32 0.0, %v3789
    %v3791 = vpop.f32.mrf.mxu0
    %3792 = vmatprep.mubr.f32.mxu0 0.0
    %3793 = vmatmul.mubr.f32.gmra.mxu0 %v979
    %v3794 = vpop.f32.mrf.mxu0
    %v3795 = vadd.f32 0.0, %v3794
    %v3796 = vpop.f32.mrf.mxu0
    %3797 = vmatprep.mubr.f32.mxu0 0.0
    %3798 = vmatmul.mubr.f32.gmra.mxu0 %v981
    %v3799 = vpop.f32.mrf.mxu0
    %v3800 = vadd.f32 0.0, %v3799
    %v3801 = vpop.f32.mrf.mxu0
    %3802 = vmatprep.mubr.f32.mxu0 0.0
    %3803 = vmatmul.mubr.f32.gmra.mxu0 %v983
    %v3804 = vpop.f32.mrf.mxu0
    %v3805 = vadd.f32 0.0, %v3804
    %v3806 = vpop.f32.mrf.mxu0
    %3807 = vmatprep.mubr.f32.mxu0 0.0
    %3808 = vmatmul.mubr.f32.gmra.mxu0 %v985
    %v3809 = vpop.f32.mrf.mxu0
    %v3810 = vadd.f32 0.0, %v3809
    %v3811 = vpop.f32.mrf.mxu0
    %3812 = vmatprep.mubr.f32.mxu0 0.0
    %3813 = vmatmul.mubr.f32.gmra.mxu0 %v987
    %v3814 = vpop.f32.mrf.mxu0
    %v3815 = vadd.f32 0.0, %v3814
    %v3816 = vpop.f32.mrf.mxu0
    %3817 = vmatprep.mubr.f32.mxu0 0.0
    %3818 = vmatmul.mubr.f32.gmra.mxu0 %v2187
    %v3819 = vpop.f32.mrf.mxu0
    %v3820 = vadd.f32 0.0, %v3819
    %v3821 = vpop.f32.mrf.mxu0
    %3822 = vmatprep.mubr.f32.mxu0 0.0
    %3823 = vmatmul.mubr.f32.gmra.mxu0 %v2190
    %v3824 = vpop.f32.mrf.mxu0
    %v3825 = vadd.f32 0.0, %v3824
    %v3826 = vpop.f32.mrf.mxu0
    %3827 = vmatprep.mubr.f32.mxu0 0.0
    %3828 = vmatmul.mubr.f32.gmra.mxu0 %v3599
    %v3829 = vpop.f32.mrf.mxu0
    %v3830 = vadd.f32 0.0, %v3829
    %v3831 = vpop.f32.mrf.mxu0
    %3832 = vmatprep.mubr.f32.mxu0 0.0
    %3833 = vmatmul.mubr.f32.gmra.mxu0 %v3602
    %v3834 = vpop.f32.mrf.mxu0
    %v3835 = vadd.f32 0.0, %v3834
    %v3836 = vpop.f32.mrf.mxu0
    %3837 = vmatprep.mubr.f32.mxu0 0.0
    %3838 = vmatmul.mubr.f32.gmra.mxu0 %v997
    %v3839 = vpop.f32.mrf.mxu0
    %v3840 = vadd.f32 0.0, %v3839
    %v3841 = vpop.f32.mrf.mxu0
    %3842 = vmatprep.mubr.f32.mxu0 0.0
    %3843 = vmatmul.mubr.f32.gmra.mxu0 %v999
    %v3844 = vpop.f32.mrf.mxu0
    %v3845 = vadd.f32 0.0, %v3844
    %v3846 = vpop.f32.mrf.mxu0
    %3847 = vmatprep.mubr.f32.mxu0 0.0
    %3848 = vmatmul.mubr.f32.gmra.mxu0 %v1001
    %v3849 = vpop.f32.mrf.mxu0
    %v3850 = vadd.f32 0.0, %v3849
    %v3851 = vpop.f32.mrf.mxu0
    %3852 = vmatprep.mubr.f32.mxu0 0.0
    %3853 = vmatmul.mubr.f32.gmra.mxu0 %v1003
    %v3854 = vpop.f32.mrf.mxu0
    %v3855 = vadd.f32 0.0, %v3854
    %v3856 = vpop.f32.mrf.mxu0
    %3857 = vmatprep.mubr.f32.mxu0 0.0
    %3858 = vmatmul.mubr.f32.gmra.mxu0 %v1005
    %v3859 = vpop.f32.mrf.mxu0
    %v3860 = vadd.f32 0.0, %v3859
    %v3861 = vpop.f32.mrf.mxu0
    %3862 = vmatprep.mubr.f32.mxu0 0.0
    %3863 = vmatmul.mubr.f32.gmra.mxu0 %v1007
    %v3864 = vpop.f32.mrf.mxu0
    %v3865 = vadd.f32 0.0, %v3864
    %v3866 = vpop.f32.mrf.mxu0
    %3867 = vmatprep.mubr.f32.mxu0 0.0
    %3868 = vmatmul.mubr.f32.gmra.mxu0 %v1009
    %v3869 = vpop.f32.mrf.mxu0
    %v3870 = vadd.f32 0.0, %v3869
    %v3871 = vpop.f32.mrf.mxu0
    %3872 = vmatprep.mubr.f32.mxu0 0.0
    %3873 = vmatmul.mubr.f32.gmra.mxu0 %v1011
    %v3874 = vpop.f32.mrf.mxu0
    %v3875 = vadd.f32 0.0, %v3874
    %v3876 = vpop.f32.mrf.mxu0
    %3877 = vmatprep.mubr.f32.mxu0 0.0
    %3878 = vmatmul.mubr.f32.gmra.mxu0 %v1013
    %v3879 = vpop.f32.mrf.mxu0
    %v3880 = vadd.f32 0.0, %v3879
    %v3881 = vpop.f32.mrf.mxu0
    %3882 = vmatprep.mubr.f32.mxu0 0.0
    %3883 = vmatmul.mubr.f32.gmra.mxu0 %v1015
    %v3884 = vpop.f32.mrf.mxu0
    %v3885 = vadd.f32 0.0, %v3884
    %v3886 = vpop.f32.mrf.mxu0
    %3887 = vmatprep.mubr.f32.mxu0 0.0
    %3888 = vmatmul.mubr.f32.gmra.mxu0 %v1017
    %v3889 = vpop.f32.mrf.mxu0
    %v3890 = vadd.f32 0.0, %v3889
    %v3891 = vpop.f32.mrf.mxu0
    %3892 = vmatprep.mubr.f32.mxu0 0.0
    %3893 = vmatmul.mubr.f32.gmra.mxu0 %v1019
    %v3894 = vpop.f32.mrf.mxu0
    %v3895 = vadd.f32 0.0, %v3894
    %v3896 = vpop.f32.mrf.mxu0
    %3897 = vmatprep.mubr.f32.mxu0 0.0
    %3898 = vmatmul.mubr.f32.gmra.mxu0 %v1021
    %v3899 = vpop.f32.mrf.mxu0
    %v3900 = vadd.f32 0.0, %v3899
    %v3901 = vpop.f32.mrf.mxu0
    %3902 = vmatprep.mubr.f32.mxu0 0.0
    %3903 = vmatmul.mubr.f32.gmra.mxu0 %v1023
    %v3904 = vpop.f32.mrf.mxu0
    %v3905 = vadd.f32 0.0, %v3904
    %v3906 = vpop.f32.mrf.mxu0
    %3907 = vmatprep.mubr.f32.mxu0 0.0
    %3908 = vmatmul.mubr.f32.gmra.mxu0 %v1025
    %v3909 = vpop.f32.mrf.mxu0
    %v3910 = vadd.f32 0.0, %v3909
    %v3911 = vpop.f32.mrf.mxu0
    %3912 = vmatprep.mubr.f32.mxu0 0.0
    %3913 = vmatmul.mubr.f32.gmra.mxu0 %v1027
    %v3914 = vpop.f32.mrf.mxu0
    %v3915 = vadd.f32 0.0, %v3914
    %v3916 = vpop.f32.mrf.mxu0
    %3917 = vmatprep.mubr.f32.mxu0 0.0
    %3918 = vmatmul.mubr.f32.gmra.mxu0 %v1029
    %v3919 = vpop.f32.mrf.mxu0
    %v3920 = vadd.f32 0.0, %v3919
    %v3921 = vpop.f32.mrf.mxu0
    %3922 = vmatprep.mubr.f32.mxu0 0.0
    %3923 = vmatmul.mubr.f32.gmra.mxu0 %v1031
    %v3924 = vpop.f32.mrf.mxu0
    %v3925 = vadd.f32 0.0, %v3924
    %v3926 = vpop.f32.mrf.mxu0
    %3927 = vmatprep.mubr.f32.mxu0 0.0
    %3928 = vmatmul.mubr.f32.gmra.mxu0 %v1033
    %v3929 = vpop.f32.mrf.mxu0
    %v3930 = vadd.f32 0.0, %v3929
    %v3931 = vpop.f32.mrf.mxu0
    %3932 = vmatprep.mubr.f32.mxu0 0.0
    %3933 = vmatmul.mubr.f32.gmra.mxu0 %v1035
    %v3934 = vpop.f32.mrf.mxu0
    %v3935 = vadd.f32 0.0, %v3934
    %v3936 = vpop.f32.mrf.mxu0
    %3937 = vmatprep.mubr.f32.mxu0 0.0
    %3938 = vmatmul.mubr.f32.gmra.mxu0 %v1037
    %v3939 = vpop.f32.mrf.mxu0
    %v3940 = vadd.f32 0.0, %v3939
    %v3941 = vpop.f32.mrf.mxu0
    %3942 = vmatprep.mubr.f32.mxu0 0.0
    %3943 = vmatmul.mubr.f32.gmra.mxu0 %v1039
    %v3944 = vpop.f32.mrf.mxu0
    %v3945 = vadd.f32 0.0, %v3944
    %v3946 = vpop.f32.mrf.mxu0
    %3947 = vmatprep.mubr.f32.mxu0 0.0
    %3948 = vmatmul.mubr.f32.gmra.mxu0 %v1041
    %v3949 = vpop.f32.mrf.mxu0
    %v3950 = vadd.f32 0.0, %v3949
    %v3951 = vpop.f32.mrf.mxu0
    %3952 = vmatprep.mubr.f32.mxu0 0.0
    %3953 = vmatmul.mubr.f32.gmra.mxu0 %v1043
    %v3954 = vpop.f32.mrf.mxu0
    %v3955 = vadd.f32 0.0, %v3954
    %v3956 = vpop.f32.mrf.mxu0
    %3957 = vmatprep.mubr.f32.mxu0 0.0
    %3958 = vmatmul.mubr.f32.gmra.mxu0 %v1045
    %v3959 = vpop.f32.mrf.mxu0
    %v3960 = vadd.f32 0.0, %v3959
    %v3961 = vpop.f32.mrf.mxu0
    %3962 = vmatprep.mubr.f32.mxu0 0.0
    %3963 = vmatmul.mubr.f32.gmra.mxu0 %v1047
    %v3964 = vpop.f32.mrf.mxu0
    %v3965 = vadd.f32 0.0, %v3964
    %v3966 = vpop.f32.mrf.mxu0
    %3967 = vmatprep.mubr.f32.mxu0 0.0
    %3968 = vmatmul.mubr.f32.gmra.mxu0 %v1049
    %v3969 = vpop.f32.mrf.mxu0
    %v3970 = vadd.f32 0.0, %v3969
    %v3971 = vpop.f32.mrf.mxu0
    %3972 = vmatprep.mubr.f32.mxu0 0.0
    %3973 = vmatmul.mubr.f32.gmra.mxu0 %v1051
    %v3974 = vpop.f32.mrf.mxu0
    %v3975 = vadd.f32 0.0, %v3974
    %v3976 = vpop.f32.mrf.mxu0
    %3977 = vmatprep.mubr.f32.mxu0 0.0
    %3978 = vmatmul.mubr.f32.gmra.mxu0 %v2193
    %v3979 = vpop.f32.mrf.mxu0
    %v3980 = vadd.f32 0.0, %v3979
    %v3981 = vpop.f32.mrf.mxu0
    %3982 = vmatprep.mubr.f32.mxu0 0.0
    %3983 = vmatmul.mubr.f32.gmra.mxu0 %v2196
    %v3984 = vpop.f32.mrf.mxu0
    %v3985 = vadd.f32 0.0, %v3984
    %v3986 = vpop.f32.mrf.mxu0
    %3987 = vmatprep.mubr.f32.mxu0 0.0
    %3988 = vmatmul.mubr.f32.gmra.mxu0 %v3605
    %v3989 = vpop.f32.mrf.mxu0
    %v3990 = vadd.f32 0.0, %v3989
    %v3991 = vpop.f32.mrf.mxu0
    %3992 = vmatprep.mubr.f32.mxu0 0.0
    %3993 = vmatmul.mubr.f32.gmra.mxu0 %v3608
    %v3994 = vpop.f32.mrf.mxu0
    %v3995 = vadd.f32 0.0, %v3994
    %v3996 = vpop.f32.mrf.mxu0
    %3997 = vdwg.mxu0
    %v3998 = vadd.f32 %v3532, %v3680
    %v3999 = vadd.f32 %v3533, %v3685
    %v4000 = vadd.f32 %v3534, %v3690
    %v4001 = vadd.f32 %v3535, %v3695
    %v4002 = vadd.f32 %v3536, %v3700
    %v4003 = vadd.f32 %v3537, %v3705
    %v4004 = vadd.f32 %v3538, %v3710
    %v4005 = vadd.f32 %v3539, %v3715
    %v4006 = vadd.f32 %v3540, %v3720
    %v4007 = vadd.f32 %v3541, %v3725
    %v4008 = vadd.f32 %v3542, %v3730
    %v4009 = vadd.f32 %v3543, %v3735
    %v4010 = vadd.f32 %v3544, %v3740
    %v4011 = vadd.f32 %v3545, %v3745
    %v4012 = vadd.f32 %v3546, %v3750
    %v4013 = vadd.f32 %v3547, %v3755
    %v4014 = vadd.f32 %v3548, %v3760
    %v4015 = vadd.f32 %v3549, %v3765
    %v4016 = vadd.f32 %v3550, %v3770
    %v4017 = vadd.f32 %v3551, %v3775
    %v4018 = vadd.f32 %v3552, %v3780
    %v4019 = vadd.f32 %v3553, %v3785
    %v4020 = vadd.f32 %v3554, %v3790
    %v4021 = vadd.f32 %v3555, %v3795
    %v4022 = vadd.f32 %v3556, %v3800
    %v4023 = vadd.f32 %v3557, %v3805
    %v4024 = vadd.f32 %v3558, %v3810
    %v4025 = vadd.f32 %v3559, %v3815
    %v4026 = vadd.f32 %v3560, %v3820
    %v4027 = vadd.f32 %v3561, %v3825
    %v4028 = vadd.f32 %v3562, %v3830
    %v4029 = vadd.f32 %v3563, %v3835
    %v4030 = vadd.f32 %v3564, %v3840
    %v4031 = vadd.f32 %v3565, %v3845
    %v4032 = vadd.f32 %v3566, %v3850
    %v4033 = vadd.f32 %v3567, %v3855
    %v4034 = vadd.f32 %v3568, %v3860
    %v4035 = vadd.f32 %v3569, %v3865
    %v4036 = vadd.f32 %v3570, %v3870
    %v4037 = vadd.f32 %v3571, %v3875
    %v4038 = vadd.f32 %v3572, %v3880
    %v4039 = vadd.f32 %v3573, %v3885
    %v4040 = vadd.f32 %v3574, %v3890
    %v4041 = vadd.f32 %v3575, %v3895
    %v4042 = vadd.f32 %v3576, %v3900
    %v4043 = vadd.f32 %v3577, %v3905
    %v4044 = vadd.f32 %v3578, %v3910
    %v4045 = vadd.f32 %v3579, %v3915
    %v4046 = vadd.f32 %v3580, %v3920
    %v4047 = vadd.f32 %v3581, %v3925
    %v4048 = vadd.f32 %v3582, %v3930
    %v4049 = vadd.f32 %v3583, %v3935
    %v4050 = vadd.f32 %v3584, %v3940
    %v4051 = vadd.f32 %v3585, %v3945
    %v4052 = vadd.f32 %v3586, %v3950
    %v4053 = vadd.f32 %v3587, %v3955
    %v4054 = vadd.f32 %v3588, %v3960
    %v4055 = vadd.f32 %v3589, %v3965
    %v4056 = vadd.f32 %v3590, %v3970
    %v4057 = vadd.f32 %v3591, %v3975
    %v4058 = vadd.f32 %v3592, %v3980
    %v4059 = vadd.f32 %v3593, %v3985
    %v4060 = vadd.f32 %v3594, %v3990
    %v4061 = vadd.f32 %v3595, %v3995
    %v4064 = vrot.slane %v90, 1
    %v4065 = vrot.slane %v91, 1
    %v4066 = vsel %vm244, %v4064, %v4065
    %v4067 = vrot.slane %v92, 1
    %v4068 = vsel %vm244, %v4065, %v4067
    %v4069 = vrot.slane %v144, 1
    %v4070 = vrot.slane %v145, 1
    %v4071 = vsel %vm244, %v4069, %v4070
    %v4072 = vrot.slane %v146, 1
    %v4073 = vsel %vm244, %v4070, %v4072
    %s4074 = scalar_lea.vmem %s1, 28
    %v4075 = vld [vmem:[%s4074] sm:$0xf]
    %v4076 = vsel %vm407, %v4066, 0
    %v4078 = vsel %vm407, %v4068, 0
    %v4080 = vsel %vm407, %v4071, 0
    %v4082 = vsel %vm407, %v4073, 0
    %v4085 = vsel %vm536, %v4075, 0
    %4087 = vmatprep.subr.mxu0 0.0
    %4088 = vmatpush1.msra.mxu0 0.0
    %4089 = vmatprep.subr.mxu0 0.0
    %4090 = vmatpush1.msra.mxu0 0.0
    %4091 = vmatprep.subr.mxu0 0.0
    %4092 = vmatpush1.msra.mxu0 0.0
    %4093 = vmatprep.subr.mxu0 0.0
    %4094 = vmatpush1.msra.mxu0 0.0
    %4095 = vmatprep.subr.mxu0 0.0
    %4096 = vmatpush1.msra.mxu0 0.0
    %4097 = vmatprep.subr.mxu0 0.0
    %4098 = vmatpush1.msra.mxu0 0.0
    %4099 = vmatprep.subr.mxu0 0.0
    %4100 = vmatpush1.msra.mxu0 0.0
    %4101 = vmatprep.subr.mxu0 0.0
    %4102 = vmatpush1.msra.mxu0 0.0
    %4103 = vmatprep.subr.mxu0 0.0
    %4104 = vmatpush1.msra.mxu0 0.0
    %4105 = vmatprep.subr.mxu0 0.0
    %4106 = vmatpush1.msra.mxu0 0.0
    %4107 = vmatprep.subr.mxu0 0.0
    %4108 = vmatpush1.msra.mxu0 0.0
    %4109 = vmatprep.subr.mxu0 0.0
    %4110 = vmatpush1.msra.mxu0 0.0
    %4111 = vmatprep.subr.mxu0 0.0
    %4112 = vmatpush1.msra.mxu0 0.0
    %4113 = vmatprep.subr.mxu0 0.0
    %4114 = vmatpush1.msra.mxu0 0.0
    %4115 = vmatprep.subr.mxu0 0.0
    %4116 = vmatpush1.msra.mxu0 0.0
    %4117 = vmatprep.subr.mxu0 0.0
    %4118 = vmatpush1.msra.mxu0 %v4085
    %4119 = vmatprep.subr.mxu0 0.0
    %4120 = vmatpush2.msra.mxu0 0.0
    %4121 = vmatprep.subr.mxu0 0.0
    %4122 = vmatpush2.msra.mxu0 0.0
    %4123 = vmatprep.subr.mxu0 0.0
    %4124 = vmatpush2.msra.mxu0 0.0
    %4125 = vmatprep.subr.mxu0 0.0
    %4126 = vmatpush2.msra.mxu0 0.0
    %4127 = vmatprep.subr.mxu0 0.0
    %4128 = vmatpush2.msra.mxu0 0.0
    %4129 = vmatprep.subr.mxu0 0.0
    %4130 = vmatpush2.msra.mxu0 0.0
    %4131 = vmatprep.subr.mxu0 0.0
    %4132 = vmatpush2.msra.mxu0 0.0
    %4133 = vmatprep.subr.mxu0 0.0
    %4134 = vmatpush2.msra.mxu0 0.0
    %4135 = vmatprep.subr.mxu0 0.0
    %4136 = vmatpush2.msra.mxu0 0.0
    %4137 = vmatprep.subr.mxu0 0.0
    %4138 = vmatpush2.msra.mxu0 0.0
    %4139 = vmatprep.subr.mxu0 0.0
    %4140 = vmatpush2.msra.mxu0 0.0
    %4141 = vmatprep.subr.mxu0 0.0
    %4142 = vmatpush2.msra.mxu0 0.0
    %4143 = vmatprep.subr.mxu0 0.0
    %4144 = vmatpush2.msra.mxu0 0.0
    %4145 = vmatprep.subr.mxu0 0.0
    %4146 = vmatpush2.msra.mxu0 0.0
    %4147 = vmatprep.subr.mxu0 0.0
    %4148 = vmatpush2.msra.mxu0 0.0
    %4149 = vmatprep.subr.mxu0 0.0
    %4150 = vmatpush2.msra.mxu0 0.0
    %4151 = vmatprep.mubr.f32.mxu0 0.0
    %4152 = vmatmul.mubr.f32.gmra.mxu0 %v416
    %v4153 = vpop.f32.mrf.mxu0
    %v4154 = vadd.f32 0.0, %v4153
    %v4155 = vpop.f32.mrf.mxu0
    %4156 = vmatprep.mubr.f32.mxu0 0.0
    %4157 = vmatmul.mubr.f32.gmra.mxu0 %v418
    %v4158 = vpop.f32.mrf.mxu0
    %v4159 = vadd.f32 0.0, %v4158
    %v4160 = vpop.f32.mrf.mxu0
    %4161 = vmatprep.mubr.f32.mxu0 0.0
    %4162 = vmatmul.mubr.f32.gmra.mxu0 %v420
    %v4163 = vpop.f32.mrf.mxu0
    %v4164 = vadd.f32 0.0, %v4163
    %v4165 = vpop.f32.mrf.mxu0
    %4166 = vmatprep.mubr.f32.mxu0 0.0
    %4167 = vmatmul.mubr.f32.gmra.mxu0 %v422
    %v4168 = vpop.f32.mrf.mxu0
    %v4169 = vadd.f32 0.0, %v4168
    %v4170 = vpop.f32.mrf.mxu0
    %4171 = vmatprep.mubr.f32.mxu0 0.0
    %4172 = vmatmul.mubr.f32.gmra.mxu0 %v424
    %v4173 = vpop.f32.mrf.mxu0
    %v4174 = vadd.f32 0.0, %v4173
    %v4175 = vpop.f32.mrf.mxu0
    %4176 = vmatprep.mubr.f32.mxu0 0.0
    %4177 = vmatmul.mubr.f32.gmra.mxu0 %v426
    %v4178 = vpop.f32.mrf.mxu0
    %v4179 = vadd.f32 0.0, %v4178
    %v4180 = vpop.f32.mrf.mxu0
    %4181 = vmatprep.mubr.f32.mxu0 0.0
    %4182 = vmatmul.mubr.f32.gmra.mxu0 %v428
    %v4183 = vpop.f32.mrf.mxu0
    %v4184 = vadd.f32 0.0, %v4183
    %v4185 = vpop.f32.mrf.mxu0
    %4186 = vmatprep.mubr.f32.mxu0 0.0
    %4187 = vmatmul.mubr.f32.gmra.mxu0 %v430
    %v4188 = vpop.f32.mrf.mxu0
    %v4189 = vadd.f32 0.0, %v4188
    %v4190 = vpop.f32.mrf.mxu0
    %4191 = vmatprep.mubr.f32.mxu0 0.0
    %4192 = vmatmul.mubr.f32.gmra.mxu0 %v432
    %v4193 = vpop.f32.mrf.mxu0
    %v4194 = vadd.f32 0.0, %v4193
    %v4195 = vpop.f32.mrf.mxu0
    %4196 = vmatprep.mubr.f32.mxu0 0.0
    %4197 = vmatmul.mubr.f32.gmra.mxu0 %v434
    %v4198 = vpop.f32.mrf.mxu0
    %v4199 = vadd.f32 0.0, %v4198
    %v4200 = vpop.f32.mrf.mxu0
    %4201 = vmatprep.mubr.f32.mxu0 0.0
    %4202 = vmatmul.mubr.f32.gmra.mxu0 %v436
    %v4203 = vpop.f32.mrf.mxu0
    %v4204 = vadd.f32 0.0, %v4203
    %v4205 = vpop.f32.mrf.mxu0
    %4206 = vmatprep.mubr.f32.mxu0 0.0
    %4207 = vmatmul.mubr.f32.gmra.mxu0 %v438
    %v4208 = vpop.f32.mrf.mxu0
    %v4209 = vadd.f32 0.0, %v4208
    %v4210 = vpop.f32.mrf.mxu0
    %4211 = vmatprep.mubr.f32.mxu0 0.0
    %4212 = vmatmul.mubr.f32.gmra.mxu0 %v440
    %v4213 = vpop.f32.mrf.mxu0
    %v4214 = vadd.f32 0.0, %v4213
    %v4215 = vpop.f32.mrf.mxu0
    %4216 = vmatprep.mubr.f32.mxu0 0.0
    %4217 = vmatmul.mubr.f32.gmra.mxu0 %v442
    %v4218 = vpop.f32.mrf.mxu0
    %v4219 = vadd.f32 0.0, %v4218
    %v4220 = vpop.f32.mrf.mxu0
    %4221 = vmatprep.mubr.f32.mxu0 0.0
    %4222 = vmatmul.mubr.f32.gmra.mxu0 %v444
    %v4223 = vpop.f32.mrf.mxu0
    %v4224 = vadd.f32 0.0, %v4223
    %v4225 = vpop.f32.mrf.mxu0
    %4226 = vmatprep.mubr.f32.mxu0 0.0
    %4227 = vmatmul.mubr.f32.gmra.mxu0 %v446
    %v4228 = vpop.f32.mrf.mxu0
    %v4229 = vadd.f32 0.0, %v4228
    %v4230 = vpop.f32.mrf.mxu0
    %4231 = vmatprep.mubr.f32.mxu0 0.0
    %4232 = vmatmul.mubr.f32.gmra.mxu0 %v448
    %v4233 = vpop.f32.mrf.mxu0
    %v4234 = vadd.f32 0.0, %v4233
    %v4235 = vpop.f32.mrf.mxu0
    %4236 = vmatprep.mubr.f32.mxu0 0.0
    %4237 = vmatmul.mubr.f32.gmra.mxu0 %v450
    %v4238 = vpop.f32.mrf.mxu0
    %v4239 = vadd.f32 0.0, %v4238
    %v4240 = vpop.f32.mrf.mxu0
    %4241 = vmatprep.mubr.f32.mxu0 0.0
    %4242 = vmatmul.mubr.f32.gmra.mxu0 %v452
    %v4243 = vpop.f32.mrf.mxu0
    %v4244 = vadd.f32 0.0, %v4243
    %v4245 = vpop.f32.mrf.mxu0
    %4246 = vmatprep.mubr.f32.mxu0 0.0
    %4247 = vmatmul.mubr.f32.gmra.mxu0 %v454
    %v4248 = vpop.f32.mrf.mxu0
    %v4249 = vadd.f32 0.0, %v4248
    %v4250 = vpop.f32.mrf.mxu0
    %4251 = vmatprep.mubr.f32.mxu0 0.0
    %4252 = vmatmul.mubr.f32.gmra.mxu0 %v456
    %v4253 = vpop.f32.mrf.mxu0
    %v4254 = vadd.f32 0.0, %v4253
    %v4255 = vpop.f32.mrf.mxu0
    %4256 = vmatprep.mubr.f32.mxu0 0.0
    %4257 = vmatmul.mubr.f32.gmra.mxu0 %v458
    %v4258 = vpop.f32.mrf.mxu0
    %v4259 = vadd.f32 0.0, %v4258
    %v4260 = vpop.f32.mrf.mxu0
    %4261 = vmatprep.mubr.f32.mxu0 0.0
    %4262 = vmatmul.mubr.f32.gmra.mxu0 %v460
    %v4263 = vpop.f32.mrf.mxu0
    %v4264 = vadd.f32 0.0, %v4263
    %v4265 = vpop.f32.mrf.mxu0
    %4266 = vmatprep.mubr.f32.mxu0 0.0
    %4267 = vmatmul.mubr.f32.gmra.mxu0 %v462
    %v4268 = vpop.f32.mrf.mxu0
    %v4269 = vadd.f32 0.0, %v4268
    %v4270 = vpop.f32.mrf.mxu0
    %4271 = vmatprep.mubr.f32.mxu0 0.0
    %4272 = vmatmul.mubr.f32.gmra.mxu0 %v464
    %v4273 = vpop.f32.mrf.mxu0
    %v4274 = vadd.f32 0.0, %v4273
    %v4275 = vpop.f32.mrf.mxu0
    %4276 = vmatprep.mubr.f32.mxu0 0.0
    %4277 = vmatmul.mubr.f32.gmra.mxu0 %v466
    %v4278 = vpop.f32.mrf.mxu0
    %v4279 = vadd.f32 0.0, %v4278
    %v4280 = vpop.f32.mrf.mxu0
    %4281 = vmatprep.mubr.f32.mxu0 0.0
    %4282 = vmatmul.mubr.f32.gmra.mxu0 %v468
    %v4283 = vpop.f32.mrf.mxu0
    %v4284 = vadd.f32 0.0, %v4283
    %v4285 = vpop.f32.mrf.mxu0
    %4286 = vmatprep.mubr.f32.mxu0 0.0
    %4287 = vmatmul.mubr.f32.gmra.mxu0 %v470
    %v4288 = vpop.f32.mrf.mxu0
    %v4289 = vadd.f32 0.0, %v4288
    %v4290 = vpop.f32.mrf.mxu0
    %4291 = vmatprep.mubr.f32.mxu0 0.0
    %4292 = vmatmul.mubr.f32.gmra.mxu0 %v2664
    %v4293 = vpop.f32.mrf.mxu0
    %v4294 = vadd.f32 0.0, %v4293
    %v4295 = vpop.f32.mrf.mxu0
    %4296 = vmatprep.mubr.f32.mxu0 0.0
    %4297 = vmatmul.mubr.f32.gmra.mxu0 %v2666
    %v4298 = vpop.f32.mrf.mxu0
    %v4299 = vadd.f32 0.0, %v4298
    %v4300 = vpop.f32.mrf.mxu0
    %4301 = vmatprep.mubr.f32.mxu0 0.0
    %4302 = vmatmul.mubr.f32.gmra.mxu0 %v4076
    %v4303 = vpop.f32.mrf.mxu0
    %v4304 = vadd.f32 0.0, %v4303
    %v4305 = vpop.f32.mrf.mxu0
    %4306 = vmatprep.mubr.f32.mxu0 0.0
    %4307 = vmatmul.mubr.f32.gmra.mxu0 %v4078
    %v4308 = vpop.f32.mrf.mxu0
    %v4309 = vadd.f32 0.0, %v4308
    %v4310 = vpop.f32.mrf.mxu0
    %4311 = vmatprep.mubr.f32.mxu0 0.0
    %4312 = vmatmul.mubr.f32.gmra.mxu0 %v480
    %v4313 = vpop.f32.mrf.mxu0
    %v4314 = vadd.f32 0.0, %v4313
    %v4315 = vpop.f32.mrf.mxu0
    %4316 = vmatprep.mubr.f32.mxu0 0.0
    %4317 = vmatmul.mubr.f32.gmra.mxu0 %v482
    %v4318 = vpop.f32.mrf.mxu0
    %v4319 = vadd.f32 0.0, %v4318
    %v4320 = vpop.f32.mrf.mxu0
    %4321 = vmatprep.mubr.f32.mxu0 0.0
    %4322 = vmatmul.mubr.f32.gmra.mxu0 %v484
    %v4323 = vpop.f32.mrf.mxu0
    %v4324 = vadd.f32 0.0, %v4323
    %v4325 = vpop.f32.mrf.mxu0
    %4326 = vmatprep.mubr.f32.mxu0 0.0
    %4327 = vmatmul.mubr.f32.gmra.mxu0 %v486
    %v4328 = vpop.f32.mrf.mxu0
    %v4329 = vadd.f32 0.0, %v4328
    %v4330 = vpop.f32.mrf.mxu0
    %4331 = vmatprep.mubr.f32.mxu0 0.0
    %4332 = vmatmul.mubr.f32.gmra.mxu0 %v488
    %v4333 = vpop.f32.mrf.mxu0
    %v4334 = vadd.f32 0.0, %v4333
    %v4335 = vpop.f32.mrf.mxu0
    %4336 = vmatprep.mubr.f32.mxu0 0.0
    %4337 = vmatmul.mubr.f32.gmra.mxu0 %v490
    %v4338 = vpop.f32.mrf.mxu0
    %v4339 = vadd.f32 0.0, %v4338
    %v4340 = vpop.f32.mrf.mxu0
    %4341 = vmatprep.mubr.f32.mxu0 0.0
    %4342 = vmatmul.mubr.f32.gmra.mxu0 %v492
    %v4343 = vpop.f32.mrf.mxu0
    %v4344 = vadd.f32 0.0, %v4343
    %v4345 = vpop.f32.mrf.mxu0
    %4346 = vmatprep.mubr.f32.mxu0 0.0
    %4347 = vmatmul.mubr.f32.gmra.mxu0 %v494
    %v4348 = vpop.f32.mrf.mxu0
    %v4349 = vadd.f32 0.0, %v4348
    %v4350 = vpop.f32.mrf.mxu0
    %4351 = vmatprep.mubr.f32.mxu0 0.0
    %4352 = vmatmul.mubr.f32.gmra.mxu0 %v496
    %v4353 = vpop.f32.mrf.mxu0
    %v4354 = vadd.f32 0.0, %v4353
    %v4355 = vpop.f32.mrf.mxu0
    %4356 = vmatprep.mubr.f32.mxu0 0.0
    %4357 = vmatmul.mubr.f32.gmra.mxu0 %v498
    %v4358 = vpop.f32.mrf.mxu0
    %v4359 = vadd.f32 0.0, %v4358
    %v4360 = vpop.f32.mrf.mxu0
    %4361 = vmatprep.mubr.f32.mxu0 0.0
    %4362 = vmatmul.mubr.f32.gmra.mxu0 %v500
    %v4363 = vpop.f32.mrf.mxu0
    %v4364 = vadd.f32 0.0, %v4363
    %v4365 = vpop.f32.mrf.mxu0
    %4366 = vmatprep.mubr.f32.mxu0 0.0
    %4367 = vmatmul.mubr.f32.gmra.mxu0 %v502
    %v4368 = vpop.f32.mrf.mxu0
    %v4369 = vadd.f32 0.0, %v4368
    %v4370 = vpop.f32.mrf.mxu0
    %4371 = vmatprep.mubr.f32.mxu0 0.0
    %4372 = vmatmul.mubr.f32.gmra.mxu0 %v504
    %v4373 = vpop.f32.mrf.mxu0
    %v4374 = vadd.f32 0.0, %v4373
    %v4375 = vpop.f32.mrf.mxu0
    %4376 = vmatprep.mubr.f32.mxu0 0.0
    %4377 = vmatmul.mubr.f32.gmra.mxu0 %v506
    %v4378 = vpop.f32.mrf.mxu0
    %v4379 = vadd.f32 0.0, %v4378
    %v4380 = vpop.f32.mrf.mxu0
    %4381 = vmatprep.mubr.f32.mxu0 0.0
    %4382 = vmatmul.mubr.f32.gmra.mxu0 %v508
    %v4383 = vpop.f32.mrf.mxu0
    %v4384 = vadd.f32 0.0, %v4383
    %v4385 = vpop.f32.mrf.mxu0
    %4386 = vmatprep.mubr.f32.mxu0 0.0
    %4387 = vmatmul.mubr.f32.gmra.mxu0 %v510
    %v4388 = vpop.f32.mrf.mxu0
    %v4389 = vadd.f32 0.0, %v4388
    %v4390 = vpop.f32.mrf.mxu0
    %4391 = vmatprep.mubr.f32.mxu0 0.0
    %4392 = vmatmul.mubr.f32.gmra.mxu0 %v512
    %v4393 = vpop.f32.mrf.mxu0
    %v4394 = vadd.f32 0.0, %v4393
    %v4395 = vpop.f32.mrf.mxu0
    %4396 = vmatprep.mubr.f32.mxu0 0.0
    %4397 = vmatmul.mubr.f32.gmra.mxu0 %v514
    %v4398 = vpop.f32.mrf.mxu0
    %v4399 = vadd.f32 0.0, %v4398
    %v4400 = vpop.f32.mrf.mxu0
    %4401 = vmatprep.mubr.f32.mxu0 0.0
    %4402 = vmatmul.mubr.f32.gmra.mxu0 %v516
    %v4403 = vpop.f32.mrf.mxu0
    %v4404 = vadd.f32 0.0, %v4403
    %v4405 = vpop.f32.mrf.mxu0
    %4406 = vmatprep.mubr.f32.mxu0 0.0
    %4407 = vmatmul.mubr.f32.gmra.mxu0 %v518
    %v4408 = vpop.f32.mrf.mxu0
    %v4409 = vadd.f32 0.0, %v4408
    %v4410 = vpop.f32.mrf.mxu0
    %4411 = vmatprep.mubr.f32.mxu0 0.0
    %4412 = vmatmul.mubr.f32.gmra.mxu0 %v520
    %v4413 = vpop.f32.mrf.mxu0
    %v4414 = vadd.f32 0.0, %v4413
    %v4415 = vpop.f32.mrf.mxu0
    %4416 = vmatprep.mubr.f32.mxu0 0.0
    %4417 = vmatmul.mubr.f32.gmra.mxu0 %v522
    %v4418 = vpop.f32.mrf.mxu0
    %v4419 = vadd.f32 0.0, %v4418
    %v4420 = vpop.f32.mrf.mxu0
    %4421 = vmatprep.mubr.f32.mxu0 0.0
    %4422 = vmatmul.mubr.f32.gmra.mxu0 %v524
    %v4423 = vpop.f32.mrf.mxu0
    %v4424 = vadd.f32 0.0, %v4423
    %v4425 = vpop.f32.mrf.mxu0
    %4426 = vmatprep.mubr.f32.mxu0 0.0
    %4427 = vmatmul.mubr.f32.gmra.mxu0 %v526
    %v4428 = vpop.f32.mrf.mxu0
    %v4429 = vadd.f32 0.0, %v4428
    %v4430 = vpop.f32.mrf.mxu0
    %4431 = vmatprep.mubr.f32.mxu0 0.0
    %4432 = vmatmul.mubr.f32.gmra.mxu0 %v528
    %v4433 = vpop.f32.mrf.mxu0
    %v4434 = vadd.f32 0.0, %v4433
    %v4435 = vpop.f32.mrf.mxu0
    %4436 = vmatprep.mubr.f32.mxu0 0.0
    %4437 = vmatmul.mubr.f32.gmra.mxu0 %v530
    %v4438 = vpop.f32.mrf.mxu0
    %v4439 = vadd.f32 0.0, %v4438
    %v4440 = vpop.f32.mrf.mxu0
    %4441 = vmatprep.mubr.f32.mxu0 0.0
    %4442 = vmatmul.mubr.f32.gmra.mxu0 %v532
    %v4443 = vpop.f32.mrf.mxu0
    %v4444 = vadd.f32 0.0, %v4443
    %v4445 = vpop.f32.mrf.mxu0
    %4446 = vmatprep.mubr.f32.mxu0 0.0
    %4447 = vmatmul.mubr.f32.gmra.mxu0 %v534
    %v4448 = vpop.f32.mrf.mxu0
    %v4449 = vadd.f32 0.0, %v4448
    %v4450 = vpop.f32.mrf.mxu0
    %4451 = vmatprep.mubr.f32.mxu0 0.0
    %4452 = vmatmul.mubr.f32.gmra.mxu0 %v2668
    %v4453 = vpop.f32.mrf.mxu0
    %v4454 = vadd.f32 0.0, %v4453
    %v4455 = vpop.f32.mrf.mxu0
    %4456 = vmatprep.mubr.f32.mxu0 0.0
    %4457 = vmatmul.mubr.f32.gmra.mxu0 %v2670
    %v4458 = vpop.f32.mrf.mxu0
    %v4459 = vadd.f32 0.0, %v4458
    %v4460 = vpop.f32.mrf.mxu0
    %4461 = vmatprep.mubr.f32.mxu0 0.0
    %4462 = vmatmul.mubr.f32.gmra.mxu0 %v4080
    %v4463 = vpop.f32.mrf.mxu0
    %v4464 = vadd.f32 0.0, %v4463
    %v4465 = vpop.f32.mrf.mxu0
    %4466 = vmatprep.mubr.f32.mxu0 0.0
    %4467 = vmatmul.mubr.f32.gmra.mxu0 %v4082
    %v4468 = vpop.f32.mrf.mxu0
    %v4469 = vadd.f32 0.0, %v4468
    %v4470 = vpop.f32.mrf.mxu0
    %4471 = vdwg.mxu0
    %v4472 = vadd.f32 %v3998, %v4154
    %v4473 = vadd.f32 %v3999, %v4159
    %v4474 = vadd.f32 %v4000, %v4164
    %v4475 = vadd.f32 %v4001, %v4169
    %v4476 = vadd.f32 %v4002, %v4174
    %v4477 = vadd.f32 %v4003, %v4179
    %v4478 = vadd.f32 %v4004, %v4184
    %v4479 = vadd.f32 %v4005, %v4189
    %v4480 = vadd.f32 %v4006, %v4194
    %v4481 = vadd.f32 %v4007, %v4199
    %v4482 = vadd.f32 %v4008, %v4204
    %v4483 = vadd.f32 %v4009, %v4209
    %v4484 = vadd.f32 %v4010, %v4214
    %v4485 = vadd.f32 %v4011, %v4219
    %v4486 = vadd.f32 %v4012, %v4224
    %v4487 = vadd.f32 %v4013, %v4229
    %v4488 = vadd.f32 %v4014, %v4234
    %v4489 = vadd.f32 %v4015, %v4239
    %v4490 = vadd.f32 %v4016, %v4244
    %v4491 = vadd.f32 %v4017, %v4249
    %v4492 = vadd.f32 %v4018, %v4254
    %v4493 = vadd.f32 %v4019, %v4259
    %v4494 = vadd.f32 %v4020, %v4264
    %v4495 = vadd.f32 %v4021, %v4269
    %v4496 = vadd.f32 %v4022, %v4274
    %v4497 = vadd.f32 %v4023, %v4279
    %v4498 = vadd.f32 %v4024, %v4284
    %v4499 = vadd.f32 %v4025, %v4289
    %v4500 = vadd.f32 %v4026, %v4294
    %v4501 = vadd.f32 %v4027, %v4299
    %v4502 = vadd.f32 %v4028, %v4304
    %v4503 = vadd.f32 %v4029, %v4309
    %v4504 = vadd.f32 %v4030, %v4314
    %v4505 = vadd.f32 %v4031, %v4319
    %v4506 = vadd.f32 %v4032, %v4324
    %v4507 = vadd.f32 %v4033, %v4329
    %v4508 = vadd.f32 %v4034, %v4334
    %v4509 = vadd.f32 %v4035, %v4339
    %v4510 = vadd.f32 %v4036, %v4344
    %v4511 = vadd.f32 %v4037, %v4349
    %v4512 = vadd.f32 %v4038, %v4354
    %v4513 = vadd.f32 %v4039, %v4359
    %v4514 = vadd.f32 %v4040, %v4364
    %v4515 = vadd.f32 %v4041, %v4369
    %v4516 = vadd.f32 %v4042, %v4374
    %v4517 = vadd.f32 %v4043, %v4379
    %v4518 = vadd.f32 %v4044, %v4384
    %v4519 = vadd.f32 %v4045, %v4389
    %v4520 = vadd.f32 %v4046, %v4394
    %v4521 = vadd.f32 %v4047, %v4399
    %v4522 = vadd.f32 %v4048, %v4404
    %v4523 = vadd.f32 %v4049, %v4409
    %v4524 = vadd.f32 %v4050, %v4414
    %v4525 = vadd.f32 %v4051, %v4419
    %v4526 = vadd.f32 %v4052, %v4424
    %v4527 = vadd.f32 %v4053, %v4429
    %v4528 = vadd.f32 %v4054, %v4434
    %v4529 = vadd.f32 %v4055, %v4439
    %v4530 = vadd.f32 %v4056, %v4444
    %v4531 = vadd.f32 %v4057, %v4449
    %v4532 = vadd.f32 %v4058, %v4454
    %v4533 = vadd.f32 %v4059, %v4459
    %v4534 = vadd.f32 %v4060, %v4464
    %v4535 = vadd.f32 %v4061, %v4469
    %v4536 = vrot.slane %v90, 2
    %v4537 = vrot.slane %v91, 2
    %v4538 = vsel %vm1441, %v4536, %v4537
    %v4539 = vrot.slane %v92, 2
    %v4540 = vsel %vm1441, %v4537, %v4539
    %v4541 = vrot.slane %v144, 2
    %v4542 = vrot.slane %v145, 2
    %v4543 = vsel %vm1441, %v4541, %v4542
    %v4544 = vrot.slane %v146, 2
    %v4545 = vsel %vm1441, %v4542, %v4544
    %s4546 = scalar_lea.vmem %s1, 32
    %v4547 = vld [vmem:[%s4546] sm:$0xf]
    %v4548 = vsel %vm407, %v4538, 0
    %v4550 = vsel %vm407, %v4540, 0
    %v4552 = vsel %vm407, %v4543, 0
    %v4554 = vsel %vm407, %v4545, 0
    %v4557 = vsel %vm536, %v4547, 0
    %4559 = vmatprep.subr.mxu0 0.0
    %4560 = vmatpush1.msra.mxu0 0.0
    %4561 = vmatprep.subr.mxu0 0.0
    %4562 = vmatpush1.msra.mxu0 0.0
    %4563 = vmatprep.subr.mxu0 0.0
    %4564 = vmatpush1.msra.mxu0 0.0
    %4565 = vmatprep.subr.mxu0 0.0
    %4566 = vmatpush1.msra.mxu0 0.0
    %4567 = vmatprep.subr.mxu0 0.0
    %4568 = vmatpush1.msra.mxu0 0.0
    %4569 = vmatprep.subr.mxu0 0.0
    %4570 = vmatpush1.msra.mxu0 0.0
    %4571 = vmatprep.subr.mxu0 0.0
    %4572 = vmatpush1.msra.mxu0 0.0
    %4573 = vmatprep.subr.mxu0 0.0
    %4574 = vmatpush1.msra.mxu0 0.0
    %4575 = vmatprep.subr.mxu0 0.0
    %4576 = vmatpush1.msra.mxu0 0.0
    %4577 = vmatprep.subr.mxu0 0.0
    %4578 = vmatpush1.msra.mxu0 0.0
    %4579 = vmatprep.subr.mxu0 0.0
    %4580 = vmatpush1.msra.mxu0 0.0
    %4581 = vmatprep.subr.mxu0 0.0
    %4582 = vmatpush1.msra.mxu0 0.0
    %4583 = vmatprep.subr.mxu0 0.0
    %4584 = vmatpush1.msra.mxu0 0.0
    %4585 = vmatprep.subr.mxu0 0.0
    %4586 = vmatpush1.msra.mxu0 0.0
    %4587 = vmatprep.subr.mxu0 0.0
    %4588 = vmatpush1.msra.mxu0 0.0
    %4589 = vmatprep.subr.mxu0 0.0
    %4590 = vmatpush1.msra.mxu0 %v4557
    %4591 = vmatprep.subr.mxu0 0.0
    %4592 = vmatpush2.msra.mxu0 0.0
    %4593 = vmatprep.subr.mxu0 0.0
    %4594 = vmatpush2.msra.mxu0 0.0
    %4595 = vmatprep.subr.mxu0 0.0
    %4596 = vmatpush2.msra.mxu0 0.0
    %4597 = vmatprep.subr.mxu0 0.0
    %4598 = vmatpush2.msra.mxu0 0.0
    %4599 = vmatprep.subr.mxu0 0.0
    %4600 = vmatpush2.msra.mxu0 0.0
    %4601 = vmatprep.subr.mxu0 0.0
    %4602 = vmatpush2.msra.mxu0 0.0
    %4603 = vmatprep.subr.mxu0 0.0
    %4604 = vmatpush2.msra.mxu0 0.0
    %4605 = vmatprep.subr.mxu0 0.0
    %4606 = vmatpush2.msra.mxu0 0.0
    %4607 = vmatprep.subr.mxu0 0.0
    %4608 = vmatpush2.msra.mxu0 0.0
    %4609 = vmatprep.subr.mxu0 0.0
    %4610 = vmatpush2.msra.mxu0 0.0
    %4611 = vmatprep.subr.mxu0 0.0
    %4612 = vmatpush2.msra.mxu0 0.0
    %4613 = vmatprep.subr.mxu0 0.0
    %4614 = vmatpush2.msra.mxu0 0.0
    %4615 = vmatprep.subr.mxu0 0.0
    %4616 = vmatpush2.msra.mxu0 0.0
    %4617 = vmatprep.subr.mxu0 0.0
    %4618 = vmatpush2.msra.mxu0 0.0
    %4619 = vmatprep.subr.mxu0 0.0
    %4620 = vmatpush2.msra.mxu0 0.0
    %4621 = vmatprep.subr.mxu0 0.0
    %4622 = vmatpush2.msra.mxu0 0.0
    %4623 = vmatprep.mubr.f32.mxu0 0.0
    %4624 = vmatmul.mubr.f32.gmra.mxu0 %v1612
    %v4625 = vpop.f32.mrf.mxu0
    %v4626 = vadd.f32 0.0, %v4625
    %v4627 = vpop.f32.mrf.mxu0
    %4628 = vmatprep.mubr.f32.mxu0 0.0
    %4629 = vmatmul.mubr.f32.gmra.mxu0 %v1614
    %v4630 = vpop.f32.mrf.mxu0
    %v4631 = vadd.f32 0.0, %v4630
    %v4632 = vpop.f32.mrf.mxu0
    %4633 = vmatprep.mubr.f32.mxu0 0.0
    %4634 = vmatmul.mubr.f32.gmra.mxu0 %v1616
    %v4635 = vpop.f32.mrf.mxu0
    %v4636 = vadd.f32 0.0, %v4635
    %v4637 = vpop.f32.mrf.mxu0
    %4638 = vmatprep.mubr.f32.mxu0 0.0
    %4639 = vmatmul.mubr.f32.gmra.mxu0 %v1618
    %v4640 = vpop.f32.mrf.mxu0
    %v4641 = vadd.f32 0.0, %v4640
    %v4642 = vpop.f32.mrf.mxu0
    %4643 = vmatprep.mubr.f32.mxu0 0.0
    %4644 = vmatmul.mubr.f32.gmra.mxu0 %v1620
    %v4645 = vpop.f32.mrf.mxu0
    %v4646 = vadd.f32 0.0, %v4645
    %v4647 = vpop.f32.mrf.mxu0
    %4648 = vmatprep.mubr.f32.mxu0 0.0
    %4649 = vmatmul.mubr.f32.gmra.mxu0 %v1622
    %v4650 = vpop.f32.mrf.mxu0
    %v4651 = vadd.f32 0.0, %v4650
    %v4652 = vpop.f32.mrf.mxu0
    %4653 = vmatprep.mubr.f32.mxu0 0.0
    %4654 = vmatmul.mubr.f32.gmra.mxu0 %v1624
    %v4655 = vpop.f32.mrf.mxu0
    %v4656 = vadd.f32 0.0, %v4655
    %v4657 = vpop.f32.mrf.mxu0
    %4658 = vmatprep.mubr.f32.mxu0 0.0
    %4659 = vmatmul.mubr.f32.gmra.mxu0 %v1626
    %v4660 = vpop.f32.mrf.mxu0
    %v4661 = vadd.f32 0.0, %v4660
    %v4662 = vpop.f32.mrf.mxu0
    %4663 = vmatprep.mubr.f32.mxu0 0.0
    %4664 = vmatmul.mubr.f32.gmra.mxu0 %v1628
    %v4665 = vpop.f32.mrf.mxu0
    %v4666 = vadd.f32 0.0, %v4665
    %v4667 = vpop.f32.mrf.mxu0
    %4668 = vmatprep.mubr.f32.mxu0 0.0
    %4669 = vmatmul.mubr.f32.gmra.mxu0 %v1630
    %v4670 = vpop.f32.mrf.mxu0
    %v4671 = vadd.f32 0.0, %v4670
    %v4672 = vpop.f32.mrf.mxu0
    %4673 = vmatprep.mubr.f32.mxu0 0.0
    %4674 = vmatmul.mubr.f32.gmra.mxu0 %v1632
    %v4675 = vpop.f32.mrf.mxu0
    %v4676 = vadd.f32 0.0, %v4675
    %v4677 = vpop.f32.mrf.mxu0
    %4678 = vmatprep.mubr.f32.mxu0 0.0
    %4679 = vmatmul.mubr.f32.gmra.mxu0 %v1634
    %v4680 = vpop.f32.mrf.mxu0
    %v4681 = vadd.f32 0.0, %v4680
    %v4682 = vpop.f32.mrf.mxu0
    %4683 = vmatprep.mubr.f32.mxu0 0.0
    %4684 = vmatmul.mubr.f32.gmra.mxu0 %v1636
    %v4685 = vpop.f32.mrf.mxu0
    %v4686 = vadd.f32 0.0, %v4685
    %v4687 = vpop.f32.mrf.mxu0
    %4688 = vmatprep.mubr.f32.mxu0 0.0
    %4689 = vmatmul.mubr.f32.gmra.mxu0 %v1638
    %v4690 = vpop.f32.mrf.mxu0
    %v4691 = vadd.f32 0.0, %v4690
    %v4692 = vpop.f32.mrf.mxu0
    %4693 = vmatprep.mubr.f32.mxu0 0.0
    %4694 = vmatmul.mubr.f32.gmra.mxu0 %v1640
    %v4695 = vpop.f32.mrf.mxu0
    %v4696 = vadd.f32 0.0, %v4695
    %v4697 = vpop.f32.mrf.mxu0
    %4698 = vmatprep.mubr.f32.mxu0 0.0
    %4699 = vmatmul.mubr.f32.gmra.mxu0 %v1642
    %v4700 = vpop.f32.mrf.mxu0
    %v4701 = vadd.f32 0.0, %v4700
    %v4702 = vpop.f32.mrf.mxu0
    %4703 = vmatprep.mubr.f32.mxu0 0.0
    %4704 = vmatmul.mubr.f32.gmra.mxu0 %v1644
    %v4705 = vpop.f32.mrf.mxu0
    %v4706 = vadd.f32 0.0, %v4705
    %v4707 = vpop.f32.mrf.mxu0
    %4708 = vmatprep.mubr.f32.mxu0 0.0
    %4709 = vmatmul.mubr.f32.gmra.mxu0 %v1646
    %v4710 = vpop.f32.mrf.mxu0
    %v4711 = vadd.f32 0.0, %v4710
    %v4712 = vpop.f32.mrf.mxu0
    %4713 = vmatprep.mubr.f32.mxu0 0.0
    %4714 = vmatmul.mubr.f32.gmra.mxu0 %v1648
    %v4715 = vpop.f32.mrf.mxu0
    %v4716 = vadd.f32 0.0, %v4715
    %v4717 = vpop.f32.mrf.mxu0
    %4718 = vmatprep.mubr.f32.mxu0 0.0
    %4719 = vmatmul.mubr.f32.gmra.mxu0 %v1650
    %v4720 = vpop.f32.mrf.mxu0
    %v4721 = vadd.f32 0.0, %v4720
    %v4722 = vpop.f32.mrf.mxu0
    %4723 = vmatprep.mubr.f32.mxu0 0.0
    %4724 = vmatmul.mubr.f32.gmra.mxu0 %v1652
    %v4725 = vpop.f32.mrf.mxu0
    %v4726 = vadd.f32 0.0, %v4725
    %v4727 = vpop.f32.mrf.mxu0
    %4728 = vmatprep.mubr.f32.mxu0 0.0
    %4729 = vmatmul.mubr.f32.gmra.mxu0 %v1654
    %v4730 = vpop.f32.mrf.mxu0
    %v4731 = vadd.f32 0.0, %v4730
    %v4732 = vpop.f32.mrf.mxu0
    %4733 = vmatprep.mubr.f32.mxu0 0.0
    %4734 = vmatmul.mubr.f32.gmra.mxu0 %v1656
    %v4735 = vpop.f32.mrf.mxu0
    %v4736 = vadd.f32 0.0, %v4735
    %v4737 = vpop.f32.mrf.mxu0
    %4738 = vmatprep.mubr.f32.mxu0 0.0
    %4739 = vmatmul.mubr.f32.gmra.mxu0 %v1658
    %v4740 = vpop.f32.mrf.mxu0
    %v4741 = vadd.f32 0.0, %v4740
    %v4742 = vpop.f32.mrf.mxu0
    %4743 = vmatprep.mubr.f32.mxu0 0.0
    %4744 = vmatmul.mubr.f32.gmra.mxu0 %v1660
    %v4745 = vpop.f32.mrf.mxu0
    %v4746 = vadd.f32 0.0, %v4745
    %v4747 = vpop.f32.mrf.mxu0
    %4748 = vmatprep.mubr.f32.mxu0 0.0
    %4749 = vmatmul.mubr.f32.gmra.mxu0 %v1662
    %v4750 = vpop.f32.mrf.mxu0
    %v4751 = vadd.f32 0.0, %v4750
    %v4752 = vpop.f32.mrf.mxu0
    %4753 = vmatprep.mubr.f32.mxu0 0.0
    %4754 = vmatmul.mubr.f32.gmra.mxu0 %v1664
    %v4755 = vpop.f32.mrf.mxu0
    %v4756 = vadd.f32 0.0, %v4755
    %v4757 = vpop.f32.mrf.mxu0
    %4758 = vmatprep.mubr.f32.mxu0 0.0
    %4759 = vmatmul.mubr.f32.gmra.mxu0 %v1666
    %v4760 = vpop.f32.mrf.mxu0
    %v4761 = vadd.f32 0.0, %v4760
    %v4762 = vpop.f32.mrf.mxu0
    %4763 = vmatprep.mubr.f32.mxu0 0.0
    %4764 = vmatmul.mubr.f32.gmra.mxu0 %v3136
    %v4765 = vpop.f32.mrf.mxu0
    %v4766 = vadd.f32 0.0, %v4765
    %v4767 = vpop.f32.mrf.mxu0
    %4768 = vmatprep.mubr.f32.mxu0 0.0
    %4769 = vmatmul.mubr.f32.gmra.mxu0 %v3138
    %v4770 = vpop.f32.mrf.mxu0
    %v4771 = vadd.f32 0.0, %v4770
    %v4772 = vpop.f32.mrf.mxu0
    %4773 = vmatprep.mubr.f32.mxu0 0.0
    %4774 = vmatmul.mubr.f32.gmra.mxu0 %v4548
    %v4775 = vpop.f32.mrf.mxu0
    %v4776 = vadd.f32 0.0, %v4775
    %v4777 = vpop.f32.mrf.mxu0
    %4778 = vmatprep.mubr.f32.mxu0 0.0
    %4779 = vmatmul.mubr.f32.gmra.mxu0 %v4550
    %v4780 = vpop.f32.mrf.mxu0
    %v4781 = vadd.f32 0.0, %v4780
    %v4782 = vpop.f32.mrf.mxu0
    %4783 = vmatprep.mubr.f32.mxu0 0.0
    %4784 = vmatmul.mubr.f32.gmra.mxu0 %v1676
    %v4785 = vpop.f32.mrf.mxu0
    %v4786 = vadd.f32 0.0, %v4785
    %v4787 = vpop.f32.mrf.mxu0
    %4788 = vmatprep.mubr.f32.mxu0 0.0
    %4789 = vmatmul.mubr.f32.gmra.mxu0 %v1678
    %v4790 = vpop.f32.mrf.mxu0
    %v4791 = vadd.f32 0.0, %v4790
    %v4792 = vpop.f32.mrf.mxu0
    %4793 = vmatprep.mubr.f32.mxu0 0.0
    %4794 = vmatmul.mubr.f32.gmra.mxu0 %v1680
    %v4795 = vpop.f32.mrf.mxu0
    %v4796 = vadd.f32 0.0, %v4795
    %v4797 = vpop.f32.mrf.mxu0
    %4798 = vmatprep.mubr.f32.mxu0 0.0
    %4799 = vmatmul.mubr.f32.gmra.mxu0 %v1682
    %v4800 = vpop.f32.mrf.mxu0
    %v4801 = vadd.f32 0.0, %v4800
    %v4802 = vpop.f32.mrf.mxu0
    %4803 = vmatprep.mubr.f32.mxu0 0.0
    %4804 = vmatmul.mubr.f32.gmra.mxu0 %v1684
    %v4805 = vpop.f32.mrf.mxu0
    %v4806 = vadd.f32 0.0, %v4805
    %v4807 = vpop.f32.mrf.mxu0
    %4808 = vmatprep.mubr.f32.mxu0 0.0
    %4809 = vmatmul.mubr.f32.gmra.mxu0 %v1686
    %v4810 = vpop.f32.mrf.mxu0
    %v4811 = vadd.f32 0.0, %v4810
    %v4812 = vpop.f32.mrf.mxu0
    %4813 = vmatprep.mubr.f32.mxu0 0.0
    %4814 = vmatmul.mubr.f32.gmra.mxu0 %v1688
    %v4815 = vpop.f32.mrf.mxu0
    %v4816 = vadd.f32 0.0, %v4815
    %v4817 = vpop.f32.mrf.mxu0
    %4818 = vmatprep.mubr.f32.mxu0 0.0
    %4819 = vmatmul.mubr.f32.gmra.mxu0 %v1690
    %v4820 = vpop.f32.mrf.mxu0
    %v4821 = vadd.f32 0.0, %v4820
    %v4822 = vpop.f32.mrf.mxu0
    %4823 = vmatprep.mubr.f32.mxu0 0.0
    %4824 = vmatmul.mubr.f32.gmra.mxu0 %v1692
    %v4825 = vpop.f32.mrf.mxu0
    %v4826 = vadd.f32 0.0, %v4825
    %v4827 = vpop.f32.mrf.mxu0
    %4828 = vmatprep.mubr.f32.mxu0 0.0
    %4829 = vmatmul.mubr.f32.gmra.mxu0 %v1694
    %v4830 = vpop.f32.mrf.mxu0
    %v4831 = vadd.f32 0.0, %v4830
    %v4832 = vpop.f32.mrf.mxu0
    %4833 = vmatprep.mubr.f32.mxu0 0.0
    %4834 = vmatmul.mubr.f32.gmra.mxu0 %v1696
    %v4835 = vpop.f32.mrf.mxu0
    %v4836 = vadd.f32 0.0, %v4835
    %v4837 = vpop.f32.mrf.mxu0
    %4838 = vmatprep.mubr.f32.mxu0 0.0
    %4839 = vmatmul.mubr.f32.gmra.mxu0 %v1698
    %v4840 = vpop.f32.mrf.mxu0
    %v4841 = vadd.f32 0.0, %v4840
    %v4842 = vpop.f32.mrf.mxu0
    %4843 = vmatprep.mubr.f32.mxu0 0.0
    %4844 = vmatmul.mubr.f32.gmra.mxu0 %v1700
    %v4845 = vpop.f32.mrf.mxu0
    %v4846 = vadd.f32 0.0, %v4845
    %v4847 = vpop.f32.mrf.mxu0
    %4848 = vmatprep.mubr.f32.mxu0 0.0
    %4849 = vmatmul.mubr.f32.gmra.mxu0 %v1702
    %v4850 = vpop.f32.mrf.mxu0
    %v4851 = vadd.f32 0.0, %v4850
    %v4852 = vpop.f32.mrf.mxu0
    %4853 = vmatprep.mubr.f32.mxu0 0.0
    %4854 = vmatmul.mubr.f32.gmra.mxu0 %v1704
    %v4855 = vpop.f32.mrf.mxu0
    %v4856 = vadd.f32 0.0, %v4855
    %v4857 = vpop.f32.mrf.mxu0
    %4858 = vmatprep.mubr.f32.mxu0 0.0
    %4859 = vmatmul.mubr.f32.gmra.mxu0 %v1706
    %v4860 = vpop.f32.mrf.mxu0
    %v4861 = vadd.f32 0.0, %v4860
    %v4862 = vpop.f32.mrf.mxu0
    %4863 = vmatprep.mubr.f32.mxu0 0.0
    %4864 = vmatmul.mubr.f32.gmra.mxu0 %v1708
    %v4865 = vpop.f32.mrf.mxu0
    %v4866 = vadd.f32 0.0, %v4865
    %v4867 = vpop.f32.mrf.mxu0
    %4868 = vmatprep.mubr.f32.mxu0 0.0
    %4869 = vmatmul.mubr.f32.gmra.mxu0 %v1710
    %v4870 = vpop.f32.mrf.mxu0
    %v4871 = vadd.f32 0.0, %v4870
    %v4872 = vpop.f32.mrf.mxu0
    %4873 = vmatprep.mubr.f32.mxu0 0.0
    %4874 = vmatmul.mubr.f32.gmra.mxu0 %v1712
    %v4875 = vpop.f32.mrf.mxu0
    %v4876 = vadd.f32 0.0, %v4875
    %v4877 = vpop.f32.mrf.mxu0
    %4878 = vmatprep.mubr.f32.mxu0 0.0
    %4879 = vmatmul.mubr.f32.gmra.mxu0 %v1714
    %v4880 = vpop.f32.mrf.mxu0
    %v4881 = vadd.f32 0.0, %v4880
    %v4882 = vpop.f32.mrf.mxu0
    %4883 = vmatprep.mubr.f32.mxu0 0.0
    %4884 = vmatmul.mubr.f32.gmra.mxu0 %v1716
    %v4885 = vpop.f32.mrf.mxu0
    %v4886 = vadd.f32 0.0, %v4885
    %v4887 = vpop.f32.mrf.mxu0
    %4888 = vmatprep.mubr.f32.mxu0 0.0
    %4889 = vmatmul.mubr.f32.gmra.mxu0 %v1718
    %v4890 = vpop.f32.mrf.mxu0
    %v4891 = vadd.f32 0.0, %v4890
    %v4892 = vpop.f32.mrf.mxu0
    %4893 = vmatprep.mubr.f32.mxu0 0.0
    %4894 = vmatmul.mubr.f32.gmra.mxu0 %v1720
    %v4895 = vpop.f32.mrf.mxu0
    %v4896 = vadd.f32 0.0, %v4895
    %v4897 = vpop.f32.mrf.mxu0
    %4898 = vmatprep.mubr.f32.mxu0 0.0
    %4899 = vmatmul.mubr.f32.gmra.mxu0 %v1722
    %v4900 = vpop.f32.mrf.mxu0
    %v4901 = vadd.f32 0.0, %v4900
    %v4902 = vpop.f32.mrf.mxu0
    %4903 = vmatprep.mubr.f32.mxu0 0.0
    %4904 = vmatmul.mubr.f32.gmra.mxu0 %v1724
    %v4905 = vpop.f32.mrf.mxu0
    %v4906 = vadd.f32 0.0, %v4905
    %v4907 = vpop.f32.mrf.mxu0
    %4908 = vmatprep.mubr.f32.mxu0 0.0
    %4909 = vmatmul.mubr.f32.gmra.mxu0 %v1726
    %v4910 = vpop.f32.mrf.mxu0
    %v4911 = vadd.f32 0.0, %v4910
    %v4912 = vpop.f32.mrf.mxu0
    %4913 = vmatprep.mubr.f32.mxu0 0.0
    %4914 = vmatmul.mubr.f32.gmra.mxu0 %v1728
    %v4915 = vpop.f32.mrf.mxu0
    %v4916 = vadd.f32 0.0, %v4915
    %v4917 = vpop.f32.mrf.mxu0
    %4918 = vmatprep.mubr.f32.mxu0 0.0
    %4919 = vmatmul.mubr.f32.gmra.mxu0 %v1730
    %v4920 = vpop.f32.mrf.mxu0
    %v4921 = vadd.f32 0.0, %v4920
    %v4922 = vpop.f32.mrf.mxu0
    %4923 = vmatprep.mubr.f32.mxu0 0.0
    %4924 = vmatmul.mubr.f32.gmra.mxu0 %v3140
    %v4925 = vpop.f32.mrf.mxu0
    %v4926 = vadd.f32 0.0, %v4925
    %v4927 = vpop.f32.mrf.mxu0
    %4928 = vmatprep.mubr.f32.mxu0 0.0
    %4929 = vmatmul.mubr.f32.gmra.mxu0 %v3142
    %v4930 = vpop.f32.mrf.mxu0
    %v4931 = vadd.f32 0.0, %v4930
    %v4932 = vpop.f32.mrf.mxu0
    %4933 = vmatprep.mubr.f32.mxu0 0.0
    %4934 = vmatmul.mubr.f32.gmra.mxu0 %v4552
    %v4935 = vpop.f32.mrf.mxu0
    %v4936 = vadd.f32 0.0, %v4935
    %v4937 = vpop.f32.mrf.mxu0
    %4938 = vmatprep.mubr.f32.mxu0 0.0
    %4939 = vmatmul.mubr.f32.gmra.mxu0 %v4554
    %v4940 = vpop.f32.mrf.mxu0
    %v4941 = vadd.f32 0.0, %v4940
    %v4942 = vpop.f32.mrf.mxu0
    %4943 = vdwg.mxu0
    %v4944 = vadd.f32 %v4472, %v4626
    %v4945 = vadd.f32 %v4473, %v4631
    %v4946 = vadd.f32 %v4474, %v4636
    %v4947 = vadd.f32 %v4475, %v4641
    %v4948 = vadd.f32 %v4476, %v4646
    %v4949 = vadd.f32 %v4477, %v4651
    %v4950 = vadd.f32 %v4478, %v4656
    %v4951 = vadd.f32 %v4479, %v4661
    %v4952 = vadd.f32 %v4480, %v4666
    %v4953 = vadd.f32 %v4481, %v4671
    %v4954 = vadd.f32 %v4482, %v4676
    %v4955 = vadd.f32 %v4483, %v4681
    %v4956 = vadd.f32 %v4484, %v4686
    %v4957 = vadd.f32 %v4485, %v4691
    %v4958 = vadd.f32 %v4486, %v4696
    %v4959 = vadd.f32 %v4487, %v4701
    %v4960 = vadd.f32 %v4488, %v4706
    %v4961 = vadd.f32 %v4489, %v4711
    %v4962 = vadd.f32 %v4490, %v4716
    %v4963 = vadd.f32 %v4491, %v4721
    %v4964 = vadd.f32 %v4492, %v4726
    %v4965 = vadd.f32 %v4493, %v4731
    %v4966 = vadd.f32 %v4494, %v4736
    %v4967 = vadd.f32 %v4495, %v4741
    %v4968 = vadd.f32 %v4496, %v4746
    %v4969 = vadd.f32 %v4497, %v4751
    %v4970 = vadd.f32 %v4498, %v4756
    %v4971 = vadd.f32 %v4499, %v4761
    %v4972 = vadd.f32 %v4500, %v4766
    %v4973 = vadd.f32 %v4501, %v4771
    %v4974 = vadd.f32 %v4502, %v4776
    %v4975 = vadd.f32 %v4503, %v4781
    %v4976 = vadd.f32 %v4504, %v4786
    %v4977 = vadd.f32 %v4505, %v4791
    %v4978 = vadd.f32 %v4506, %v4796
    %v4979 = vadd.f32 %v4507, %v4801
    %v4980 = vadd.f32 %v4508, %v4806
    %v4981 = vadd.f32 %v4509, %v4811
    %v4982 = vadd.f32 %v4510, %v4816
    %v4983 = vadd.f32 %v4511, %v4821
    %v4984 = vadd.f32 %v4512, %v4826
    %v4985 = vadd.f32 %v4513, %v4831
    %v4986 = vadd.f32 %v4514, %v4836
    %v4987 = vadd.f32 %v4515, %v4841
    %v4988 = vadd.f32 %v4516, %v4846
    %v4989 = vadd.f32 %v4517, %v4851
    %v4990 = vadd.f32 %v4518, %v4856
    %v4991 = vadd.f32 %v4519, %v4861
    %v4992 = vadd.f32 %v4520, %v4866
    %v4993 = vadd.f32 %v4521, %v4871
    %v4994 = vadd.f32 %v4522, %v4876
    %v4995 = vadd.f32 %v4523, %v4881
    %v4996 = vadd.f32 %v4524, %v4886
    %v4997 = vadd.f32 %v4525, %v4891
    %v4998 = vadd.f32 %v4526, %v4896
    %v4999 = vadd.f32 %v4527, %v4901
    %v5000 = vadd.f32 %v4528, %v4906
    %v5001 = vadd.f32 %v4529, %v4911
    %v5002 = vadd.f32 %v4530, %v4916
    %v5003 = vadd.f32 %v4531, %v4921
    %v5004 = vadd.f32 %v4532, %v4926
    %v5005 = vadd.f32 %v4533, %v4931
    %v5006 = vadd.f32 %v4534, %v4936
    %v5007 = vadd.f32 %v4535, %v4941
    %v5008 = vld [vmem:[%s2] sm:$0x1]
    %v5010 = vlaneseq
    %v5011 = vshrl.u32 %v5010, 7
    %v5012 = vsub.s32 0, %v5011
    %v5013 = vrot.slane %v5008, %v5012
    %v5015 = vadd.f32 %v4944, %v5013
    %v5016 = vadd.f32 %v4945, %v5013
    %v5017 = vadd.f32 %v4946, %v5013
    %v5018 = vadd.f32 %v4947, %v5013
    %v5019 = vadd.f32 %v4948, %v5013
    %v5020 = vadd.f32 %v4949, %v5013
    %v5021 = vadd.f32 %v4950, %v5013
    %v5022 = vadd.f32 %v4951, %v5013
    %v5023 = vadd.f32 %v4952, %v5013
    %v5024 = vadd.f32 %v4953, %v5013
    %v5025 = vadd.f32 %v4954, %v5013
    %v5026 = vadd.f32 %v4955, %v5013
    %v5027 = vadd.f32 %v4956, %v5013
    %v5028 = vadd.f32 %v4957, %v5013
    %v5029 = vadd.f32 %v4958, %v5013
    %v5030 = vadd.f32 %v4959, %v5013
    %v5031 = vadd.f32 %v4960, %v5013
    %v5032 = vadd.f32 %v4961, %v5013
    %v5033 = vadd.f32 %v4962, %v5013
    %v5034 = vadd.f32 %v4963, %v5013
    %v5035 = vadd.f32 %v4964, %v5013
    %v5036 = vadd.f32 %v4965, %v5013
    %v5037 = vadd.f32 %v4966, %v5013
    %v5038 = vadd.f32 %v4967, %v5013
    %v5039 = vadd.f32 %v4968, %v5013
    %v5040 = vadd.f32 %v4969, %v5013
    %v5041 = vadd.f32 %v4970, %v5013
    %v5042 = vadd.f32 %v4971, %v5013
    %v5043 = vadd.f32 %v4972, %v5013
    %v5044 = vadd.f32 %v4973, %v5013
    %v5045 = vadd.f32 %v4974, %v5013
    %v5046 = vadd.f32 %v4975, %v5013
    %v5047 = vadd.f32 %v4976, %v5013
    %v5048 = vadd.f32 %v4977, %v5013
    %v5049 = vadd.f32 %v4978, %v5013
    %v5050 = vadd.f32 %v4979, %v5013
    %v5051 = vadd.f32 %v4980, %v5013
    %v5052 = vadd.f32 %v4981, %v5013
    %v5053 = vadd.f32 %v4982, %v5013
    %v5054 = vadd.f32 %v4983, %v5013
    %v5055 = vadd.f32 %v4984, %v5013
    %v5056 = vadd.f32 %v4985, %v5013
    %v5057 = vadd.f32 %v4986, %v5013
    %v5058 = vadd.f32 %v4987, %v5013
    %v5059 = vadd.f32 %v4988, %v5013
    %v5060 = vadd.f32 %v4989, %v5013
    %v5061 = vadd.f32 %v4990, %v5013
    %v5062 = vadd.f32 %v4991, %v5013
    %v5063 = vadd.f32 %v4992, %v5013
    %v5064 = vadd.f32 %v4993, %v5013
    %v5065 = vadd.f32 %v4994, %v5013
    %v5066 = vadd.f32 %v4995, %v5013
    %v5067 = vadd.f32 %v4996, %v5013
    %v5068 = vadd.f32 %v4997, %v5013
    %v5069 = vadd.f32 %v4998, %v5013
    %v5070 = vadd.f32 %v4999, %v5013
    %v5071 = vadd.f32 %v5000, %v5013
    %v5072 = vadd.f32 %v5001, %v5013
    %v5073 = vadd.f32 %v5002, %v5013
    %v5074 = vadd.f32 %v5003, %v5013
    %v5075 = vadd.f32 %v5004, %v5013
    %v5076 = vadd.f32 %v5005, %v5013
    %v5077 = vadd.f32 %v5006, %v5013
    %v5078 = vadd.f32 %v5007, %v5013
    %v5079 = vmax.f32 %v5015, 0.0
    %v5080 = vmax.f32 %v5016, 0.0
    %v5081 = vmax.f32 %v5017, 0.0
    %v5082 = vmax.f32 %v5018, 0.0
    %v5083 = vmax.f32 %v5019, 0.0
    %v5084 = vmax.f32 %v5020, 0.0
    %v5085 = vmax.f32 %v5021, 0.0
    %v5086 = vmax.f32 %v5022, 0.0
    %v5087 = vmax.f32 %v5023, 0.0
    %v5088 = vmax.f32 %v5024, 0.0
    %v5089 = vmax.f32 %v5025, 0.0
    %v5090 = vmax.f32 %v5026, 0.0
    %v5091 = vmax.f32 %v5027, 0.0
    %v5092 = vmax.f32 %v5028, 0.0
    %v5093 = vmax.f32 %v5029, 0.0
    %v5094 = vmax.f32 %v5030, 0.0
    %v5095 = vmax.f32 %v5031, 0.0
    %v5096 = vmax.f32 %v5032, 0.0
    %v5097 = vmax.f32 %v5033, 0.0
    %v5098 = vmax.f32 %v5034, 0.0
    %v5099 = vmax.f32 %v5035, 0.0
    %v5100 = vmax.f32 %v5036, 0.0
    %v5101 = vmax.f32 %v5037, 0.0
    %v5102 = vmax.f32 %v5038, 0.0
    %v5103 = vmax.f32 %v5039, 0.0
    %v5104 = vmax.f32 %v5040, 0.0
    %v5105 = vmax.f32 %v5041, 0.0
    %v5106 = vmax.f32 %v5042, 0.0
    %v5107 = vmax.f32 %v5043, 0.0
    %v5108 = vmax.f32 %v5044, 0.0
    %v5109 = vmax.f32 %v5045, 0.0
    %v5110 = vmax.f32 %v5046, 0.0
    %v5111 = vmax.f32 %v5047, 0.0
    %v5112 = vmax.f32 %v5048, 0.0
    %v5113 = vmax.f32 %v5049, 0.0
    %v5114 = vmax.f32 %v5050, 0.0
    %v5115 = vmax.f32 %v5051, 0.0
    %v5116 = vmax.f32 %v5052, 0.0
    %v5117 = vmax.f32 %v5053, 0.0
    %v5118 = vmax.f32 %v5054, 0.0
    %v5119 = vmax.f32 %v5055, 0.0
    %v5120 = vmax.f32 %v5056, 0.0
    %v5121 = vmax.f32 %v5057, 0.0
    %v5122 = vmax.f32 %v5058, 0.0
    %v5123 = vmax.f32 %v5059, 0.0
    %v5124 = vmax.f32 %v5060, 0.0
    %v5125 = vmax.f32 %v5061, 0.0
    %v5126 = vmax.f32 %v5062, 0.0
    %v5127 = vmax.f32 %v5063, 0.0
    %v5128 = vmax.f32 %v5064, 0.0
    %v5129 = vmax.f32 %v5065, 0.0
    %v5130 = vmax.f32 %v5066, 0.0
    %v5131 = vmax.f32 %v5067, 0.0
    %v5132 = vmax.f32 %v5068, 0.0
    %v5133 = vmax.f32 %v5069, 0.0
    %v5134 = vmax.f32 %v5070, 0.0
    %v5135 = vmax.f32 %v5071, 0.0
    %v5136 = vmax.f32 %v5072, 0.0
    %v5137 = vmax.f32 %v5073, 0.0
    %v5138 = vmax.f32 %v5074, 0.0
    %v5139 = vmax.f32 %v5075, 0.0
    %v5140 = vmax.f32 %v5076, 0.0
    %v5141 = vmax.f32 %v5077, 0.0
    %v5142 = vmax.f32 %v5078, 0.0
    %vm5143 = vcmask 64512
    %v5144 = vsel %vm5143, %v5079, 0.0
    %v5145 = vsel %vm5143, %v5080, 0.0
    %v5146 = vadd.f32 %v5144, %v5145
    %v5147 = vsel %vm5143, %v5081, 0.0
    %v5148 = vadd.f32 %v5146, %v5147
    %v5149 = vsel %vm5143, %v5082, 0.0
    %v5150 = vadd.f32 %v5148, %v5149
    %v5151 = vsel %vm5143, %v5083, 0.0
    %v5152 = vadd.f32 %v5150, %v5151
    %v5153 = vsel %vm5143, %v5084, 0.0
    %v5154 = vadd.f32 %v5152, %v5153
    %v5155 = vsel %vm5143, %v5085, 0.0
    %v5156 = vadd.f32 %v5154, %v5155
    %v5157 = vsel %vm5143, %v5086, 0.0
    %v5158 = vadd.f32 %v5156, %v5157
    %v5159 = vsel %vm5143, %v5087, 0.0
    %v5160 = vadd.f32 %v5158, %v5159
    %v5161 = vsel %vm5143, %v5088, 0.0
    %v5162 = vadd.f32 %v5160, %v5161
    %v5163 = vsel %vm5143, %v5089, 0.0
    %v5164 = vadd.f32 %v5162, %v5163
    %v5165 = vsel %vm5143, %v5090, 0.0
    %v5166 = vadd.f32 %v5164, %v5165
    %v5167 = vsel %vm5143, %v5091, 0.0
    %v5168 = vadd.f32 %v5166, %v5167
    %v5169 = vsel %vm5143, %v5092, 0.0
    %v5170 = vadd.f32 %v5168, %v5169
    %v5171 = vsel %vm5143, %v5093, 0.0
    %v5172 = vadd.f32 %v5170, %v5171
    %v5173 = vsel %vm5143, %v5094, 0.0
    %v5174 = vadd.f32 %v5172, %v5173
    %v5175 = vsel %vm5143, %v5095, 0.0
    %v5176 = vadd.f32 %v5174, %v5175
    %v5177 = vsel %vm5143, %v5096, 0.0
    %v5178 = vadd.f32 %v5176, %v5177
    %v5179 = vsel %vm5143, %v5097, 0.0
    %v5180 = vadd.f32 %v5178, %v5179
    %v5181 = vsel %vm5143, %v5098, 0.0
    %v5182 = vadd.f32 %v5180, %v5181
    %v5183 = vsel %vm5143, %v5099, 0.0
    %v5184 = vadd.f32 %v5182, %v5183
    %v5185 = vsel %vm5143, %v5100, 0.0
    %v5186 = vadd.f32 %v5184, %v5185
    %v5187 = vsel %vm5143, %v5101, 0.0
    %v5188 = vadd.f32 %v5186, %v5187
    %v5189 = vsel %vm5143, %v5102, 0.0
    %v5190 = vadd.f32 %v5188, %v5189
    %v5191 = vsel %vm5143, %v5103, 0.0
    %v5192 = vadd.f32 %v5190, %v5191
    %v5193 = vsel %vm5143, %v5104, 0.0
    %v5194 = vadd.f32 %v5192, %v5193
    %v5195 = vsel %vm5143, %v5105, 0.0
    %v5196 = vadd.f32 %v5194, %v5195
    %v5197 = vsel %vm5143, %v5106, 0.0
    %v5198 = vadd.f32 %v5196, %v5197
    %v5199 = vsel %vm5143, %v5107, 0.0
    %v5200 = vadd.f32 %v5198, %v5199
    %v5201 = vsel %vm5143, %v5108, 0.0
    %v5202 = vadd.f32 %v5200, %v5201
    %v5203 = vsel %vm5143, %v5109, 0.0
    %v5204 = vadd.f32 %v5202, %v5203
    %v5205 = vsel %vm5143, %v5110, 0.0
    %v5206 = vadd.f32 %v5204, %v5205
    %v5207 = vrot.slane %v5206, 4
    %v5208 = vadd.f32 %v5206, %v5207
    %v5209 = vrot.slane %v5208, 2
    %v5210 = vadd.f32 %v5208, %v5209
    %v5211 = vrot.slane %v5210, 1
    %v5212 = vadd.f32 %v5210, %v5211
    %v5213 = vsel %vm5143, %v5111, 0.0
    %v5214 = vsel %vm5143, %v5112, 0.0
    %v5215 = vadd.f32 %v5213, %v5214
    %v5216 = vsel %vm5143, %v5113, 0.0
    %v5217 = vadd.f32 %v5215, %v5216
    %v5218 = vsel %vm5143, %v5114, 0.0
    %v5219 = vadd.f32 %v5217, %v5218
    %v5220 = vsel %vm5143, %v5115, 0.0
    %v5221 = vadd.f32 %v5219, %v5220
    %v5222 = vsel %vm5143, %v5116, 0.0
    %v5223 = vadd.f32 %v5221, %v5222
    %v5224 = vsel %vm5143, %v5117, 0.0
    %v5225 = vadd.f32 %v5223, %v5224
    %v5226 = vsel %vm5143, %v5118, 0.0
    %v5227 = vadd.f32 %v5225, %v5226
    %v5228 = vsel %vm5143, %v5119, 0.0
    %v5229 = vadd.f32 %v5227, %v5228
    %v5230 = vsel %vm5143, %v5120, 0.0
    %v5231 = vadd.f32 %v5229, %v5230
    %v5232 = vsel %vm5143, %v5121, 0.0
    %v5233 = vadd.f32 %v5231, %v5232
    %v5234 = vsel %vm5143, %v5122, 0.0
    %v5235 = vadd.f32 %v5233, %v5234
    %v5236 = vsel %vm5143, %v5123, 0.0
    %v5237 = vadd.f32 %v5235, %v5236
    %v5238 = vsel %vm5143, %v5124, 0.0
    %v5239 = vadd.f32 %v5237, %v5238
    %v5240 = vsel %vm5143, %v5125, 0.0
    %v5241 = vadd.f32 %v5239, %v5240
    %v5242 = vsel %vm5143, %v5126, 0.0
    %v5243 = vadd.f32 %v5241, %v5242
    %v5244 = vsel %vm5143, %v5127, 0.0
    %v5245 = vadd.f32 %v5243, %v5244
    %v5246 = vsel %vm5143, %v5128, 0.0
    %v5247 = vadd.f32 %v5245, %v5246
    %v5248 = vsel %vm5143, %v5129, 0.0
    %v5249 = vadd.f32 %v5247, %v5248
    %v5250 = vsel %vm5143, %v5130, 0.0
    %v5251 = vadd.f32 %v5249, %v5250
    %v5252 = vsel %vm5143, %v5131, 0.0
    %v5253 = vadd.f32 %v5251, %v5252
    %v5254 = vsel %vm5143, %v5132, 0.0
    %v5255 = vadd.f32 %v5253, %v5254
    %v5256 = vsel %vm5143, %v5133, 0.0
    %v5257 = vadd.f32 %v5255, %v5256
    %v5258 = vsel %vm5143, %v5134, 0.0
    %v5259 = vadd.f32 %v5257, %v5258
    %v5260 = vsel %vm5143, %v5135, 0.0
    %v5261 = vadd.f32 %v5259, %v5260
    %v5262 = vsel %vm5143, %v5136, 0.0
    %v5263 = vadd.f32 %v5261, %v5262
    %v5264 = vsel %vm5143, %v5137, 0.0
    %v5265 = vadd.f32 %v5263, %v5264
    %v5266 = vsel %vm5143, %v5138, 0.0
    %v5267 = vadd.f32 %v5265, %v5266
    %v5268 = vsel %vm5143, %v5139, 0.0
    %v5269 = vadd.f32 %v5267, %v5268
    %v5270 = vsel %vm5143, %v5140, 0.0
    %v5271 = vadd.f32 %v5269, %v5270
    %v5272 = vsel %vm5143, %v5141, 0.0
    %v5273 = vadd.f32 %v5271, %v5272
    %v5274 = vsel %vm5143, %v5142, 0.0
    %v5275 = vadd.f32 %v5273, %v5274
    %v5276 = vrot.slane %v5275, 4
    %v5277 = vadd.f32 %v5275, %v5276
    %v5278 = vrot.slane %v5277, 2
    %v5279 = vadd.f32 %v5277, %v5278
    %v5280 = vrot.slane %v5279, 1
    %v5281 = vadd.f32 %v5279, %v5280
    %v5282 = vmul.f32 %v5212, 0.00390625
    %v5283 = vmul.f32 %v5281, 0.00390625
    %v5284 = vld [vmem:[%s3] sm:$0xff]
    %v5285 = vld [vmem:[%s4] sm:$0x1]
    %v5287 = vlaneseq
    %v5288 = vshrl.u32 %v5287, 7
    %v5289 = vsub.s32 0, %v5288
    %v5290 = vrot.slane %v5285, %v5289
    %vm5294 = vcmask 1041409
    %v5295 = vsel %vm5294, %v5283, %v5282
    %v5296 = vsel %vm5143, %v5295, 0
    %5298 = vmatprep.subr.mxu0 0.0
    %5299 = vmatpush1.msra.mxu0 0.0
    %5300 = vmatprep.subr.mxu0 0.0
    %5301 = vmatpush1.msra.mxu0 0.0
    %5302 = vmatprep.subr.mxu0 0.0
    %5303 = vmatpush1.msra.mxu0 0.0
    %5304 = vmatprep.subr.mxu0 0.0
    %5305 = vmatpush1.msra.mxu0 0.0
    %5306 = vmatprep.subr.mxu0 0.0
    %5307 = vmatpush1.msra.mxu0 0.0
    %5308 = vmatprep.subr.mxu0 0.0
    %5309 = vmatpush1.msra.mxu0 0.0
    %5310 = vmatprep.subr.mxu0 0.0
    %5311 = vmatpush1.msra.mxu0 0.0
    %5312 = vmatprep.subr.mxu0 0.0
    %5313 = vmatpush1.msra.mxu0 0.0
    %5314 = vmatprep.subr.mxu0 0.0
    %5315 = vmatpush1.msra.mxu0 0.0
    %5316 = vmatprep.subr.mxu0 0.0
    %5317 = vmatpush1.msra.mxu0 0.0
    %5318 = vmatprep.subr.mxu0 0.0
    %5319 = vmatpush1.msra.mxu0 0.0
    %5320 = vmatprep.subr.mxu0 0.0
    %5321 = vmatpush1.msra.mxu0 0.0
    %5322 = vmatprep.subr.mxu0 0.0
    %5323 = vmatpush1.msra.mxu0 0.0
    %5324 = vmatprep.subr.mxu0 0.0
    %5325 = vmatpush1.msra.mxu0 0.0
    %5326 = vmatprep.subr.mxu0 0.0
    %5327 = vmatpush1.msra.mxu0 0.0
    %5328 = vmatprep.subr.mxu0 0.0
    %5329 = vmatpush1.msra.mxu0 %v5284
    %5330 = vmatprep.subr.mxu0 0.0
    %5331 = vmatpush2.msra.mxu0 0.0
    %5332 = vmatprep.subr.mxu0 0.0
    %5333 = vmatpush2.msra.mxu0 0.0
    %5334 = vmatprep.subr.mxu0 0.0
    %5335 = vmatpush2.msra.mxu0 0.0
    %5336 = vmatprep.subr.mxu0 0.0
    %5337 = vmatpush2.msra.mxu0 0.0
    %5338 = vmatprep.subr.mxu0 0.0
    %5339 = vmatpush2.msra.mxu0 0.0
    %5340 = vmatprep.subr.mxu0 0.0
    %5341 = vmatpush2.msra.mxu0 0.0
    %5342 = vmatprep.subr.mxu0 0.0
    %5343 = vmatpush2.msra.mxu0 0.0
    %5344 = vmatprep.subr.mxu0 0.0
    %5345 = vmatpush2.msra.mxu0 0.0
    %5346 = vmatprep.subr.mxu0 0.0
    %5347 = vmatpush2.msra.mxu0 0.0
    %5348 = vmatprep.subr.mxu0 0.0
    %5349 = vmatpush2.msra.mxu0 0.0
    %5350 = vmatprep.subr.mxu0 0.0
    %5351 = vmatpush2.msra.mxu0 0.0
    %5352 = vmatprep.subr.mxu0 0.0
    %5353 = vmatpush2.msra.mxu0 0.0
    %5354 = vmatprep.subr.mxu0 0.0
    %5355 = vmatpush2.msra.mxu0 0.0
    %5356 = vmatprep.subr.mxu0 0.0
    %5357 = vmatpush2.msra.mxu0 0.0
    %5358 = vmatprep.subr.mxu0 0.0
    %5359 = vmatpush2.msra.mxu0 0.0
    %5360 = vmatprep.subr.mxu0 0.0
    %5361 = vmatpush2.msra.mxu0 0.0
    %5362 = vmatprep.mubr.f32.mxu0 0.0
    %5363 = vmatmul.mubr.f32.gmra.mxu0 %v5296
    %v5364 = vpop.f32.mrf.mxu0
    %v5365 = vadd.f32 %v5290, %v5364
    %v5366 = vpop.f32.mrf.mxu0
    %5367 = vdwg.mxu0
    %v5368 = vmax.f32 %v5365, 0.0
    %v5369 = vld [vmem:[%s5] sm:$0xf]
    %v5370 = vld [vmem:[%s6] sm:$0x1]
    %v5372 = vlaneseq
    %v5373 = vshrl.u32 %v5372, 7
    %v5374 = vsub.s32 0, %v5373
    %v5375 = vrot.slane %v5370, %v5374
    %v5378 = vsel %vm407, %v5368, 0
    %v5381 = vsel %vm536, %v5369, 0
    %5383 = vmatprep.subr.mxu0 0.0
    %5384 = vmatpush1.msra.mxu0 0.0
    %5385 = vmatprep.subr.mxu0 0.0
    %5386 = vmatpush1.msra.mxu0 0.0
    %5387 = vmatprep.subr.mxu0 0.0
    %5388 = vmatpush1.msra.mxu0 0.0
    %5389 = vmatprep.subr.mxu0 0.0
    %5390 = vmatpush1.msra.mxu0 0.0
    %5391 = vmatprep.subr.mxu0 0.0
    %5392 = vmatpush1.msra.mxu0 0.0
    %5393 = vmatprep.subr.mxu0 0.0
    %5394 = vmatpush1.msra.mxu0 0.0
    %5395 = vmatprep.subr.mxu0 0.0
    %5396 = vmatpush1.msra.mxu0 0.0
    %5397 = vmatprep.subr.mxu0 0.0
    %5398 = vmatpush1.msra.mxu0 0.0
    %5399 = vmatprep.subr.mxu0 0.0
    %5400 = vmatpush1.msra.mxu0 0.0
    %5401 = vmatprep.subr.mxu0 0.0
    %5402 = vmatpush1.msra.mxu0 0.0
    %5403 = vmatprep.subr.mxu0 0.0
    %5404 = vmatpush1.msra.mxu0 0.0
    %5405 = vmatprep.subr.mxu0 0.0
    %5406 = vmatpush1.msra.mxu0 0.0
    %5407 = vmatprep.subr.mxu0 0.0
    %5408 = vmatpush1.msra.mxu0 0.0
    %5409 = vmatprep.subr.mxu0 0.0
    %5410 = vmatpush1.msra.mxu0 0.0
    %5411 = vmatprep.subr.mxu0 0.0
    %5412 = vmatpush1.msra.mxu0 0.0
    %5413 = vmatprep.subr.mxu0 0.0
    %5414 = vmatpush1.msra.mxu0 %v5381
    %5415 = vmatprep.subr.mxu0 0.0
    %5416 = vmatpush2.msra.mxu0 0.0
    %5417 = vmatprep.subr.mxu0 0.0
    %5418 = vmatpush2.msra.mxu0 0.0
    %5419 = vmatprep.subr.mxu0 0.0
    %5420 = vmatpush2.msra.mxu0 0.0
    %5421 = vmatprep.subr.mxu0 0.0
    %5422 = vmatpush2.msra.mxu0 0.0
    %5423 = vmatprep.subr.mxu0 0.0
    %5424 = vmatpush2.msra.mxu0 0.0
    %5425 = vmatprep.subr.mxu0 0.0
    %5426 = vmatpush2.msra.mxu0 0.0
    %5427 = vmatprep.subr.mxu0 0.0
    %5428 = vmatpush2.msra.mxu0 0.0
    %5429 = vmatprep.subr.mxu0 0.0
    %5430 = vmatpush2.msra.mxu0 0.0
    %5431 = vmatprep.subr.mxu0 0.0
    %5432 = vmatpush2.msra.mxu0 0.0
    %5433 = vmatprep.subr.mxu0 0.0
    %5434 = vmatpush2.msra.mxu0 0.0
    %5435 = vmatprep.subr.mxu0 0.0
    %5436 = vmatpush2.msra.mxu0 0.0
    %5437 = vmatprep.subr.mxu0 0.0
    %5438 = vmatpush2.msra.mxu0 0.0
    %5439 = vmatprep.subr.mxu0 0.0
    %5440 = vmatpush2.msra.mxu0 0.0
    %5441 = vmatprep.subr.mxu0 0.0
    %5442 = vmatpush2.msra.mxu0 0.0
    %5443 = vmatprep.subr.mxu0 0.0
    %5444 = vmatpush2.msra.mxu0 0.0
    %5445 = vmatprep.subr.mxu0 0.0
    %5446 = vmatpush2.msra.mxu0 0.0
    %5447 = vmatprep.mubr.f32.mxu0 0.0
    %5448 = vmatmul.mubr.f32.gmra.mxu0 %v5378
    %v5449 = vpop.f32.mrf.mxu0
    %v5450 = vadd.f32 %v5375, %v5449
    %v5451 = vpop.f32.mrf.mxu0
    %5452 = vdwg.mxu0
    %v5453 = vxor.u32 %v5450, 2147483648
    %v5454 = vmul.f32 %v5453, 1.442695
    %v5455 = vpow.pop %v5454
    %v5456 = vadd.f32 %v5455, 1.0
    %v5457 = vrcp.pop %v5456
    %v5458 = vmul.f32 1.0, %v5457
    %v5461 = vunpack.c.l.s4 1966171168
    %v5462 = vunpack.c.0.s8 %v5461
    %v5463 = vlaneseq
    %v5464 = vshrl.u32 %v5463, 7
    %v5465 = vsub.s32 %v5462, %v5464
    %v5466 = vrot.slane %v5458, %v5465
    %v5467 = vcombine.high %v5466, %v5466
    %v5469 = vunpack.c.l.s4 1966171168
    %v5470 = vunpack.c.0.s8 %v5469
    %v5471 = vlaneseq
    %v5472 = vshrl.u32 %v5471, 7
    %v5473 = vsub.s32 %v5470, %v5472
    %v5474 = vrot.slane %v5466, %v5473
    %v5476 = vunpack.c.l.s4 1966171168
    %v5477 = vunpack.c.0.s8 %v5476
    %v5478 = vlaneseq
    %v5479 = vshrl.u32 %v5478, 7
    %v5480 = vsub.s32 %v5477, %v5479
    %v5481 = vrot.slane %v5467, %v5480
    %v5482 = vlaneseq
    %v5483 = vshrl.u32 %v5482, 7
    %v5484 = vsub.s32 0, %v5483
    %v5485 = vrot.slane %v5474, %v5484
    %v5486 = vlaneseq
    %v5487 = vshrl.u32 %v5486, 7
    %v5488 = vsub.s32 0, %v5487
    %v5489 = vrot.slane %v5481, %v5488
    %v5492 = vmul.f32 %v5079, %v5485
    %v5493 = vmul.f32 %v5080, %v5485
    %v5494 = vmul.f32 %v5081, %v5485
    %v5495 = vmul.f32 %v5082, %v5485
    %v5496 = vmul.f32 %v5083, %v5485
    %v5497 = vmul.f32 %v5084, %v5485
    %v5498 = vmul.f32 %v5085, %v5485
    %v5499 = vmul.f32 %v5086, %v5485
    %v5500 = vmul.f32 %v5087, %v5485
    %v5501 = vmul.f32 %v5088, %v5485
    %v5502 = vmul.f32 %v5089, %v5485
    %v5503 = vmul.f32 %v5090, %v5485
    %v5504 = vmul.f32 %v5091, %v5485
    %v5505 = vmul.f32 %v5092, %v5485
    %v5506 = vmul.f32 %v5093, %v5485
    %v5507 = vmul.f32 %v5094, %v5485
    %v5508 = vmul.f32 %v5095, %v5485
    %v5509 = vmul.f32 %v5096, %v5485
    %v5510 = vmul.f32 %v5097, %v5485
    %v5511 = vmul.f32 %v5098, %v5485
    %v5512 = vmul.f32 %v5099, %v5485
    %v5513 = vmul.f32 %v5100, %v5485
    %v5514 = vmul.f32 %v5101, %v5485
    %v5515 = vmul.f32 %v5102, %v5485
    %v5516 = vmul.f32 %v5103, %v5485
    %v5517 = vmul.f32 %v5104, %v5485
    %v5518 = vmul.f32 %v5105, %v5485
    %v5519 = vmul.f32 %v5106, %v5485
    %v5520 = vmul.f32 %v5107, %v5485
    %v5521 = vmul.f32 %v5108, %v5485
    %v5522 = vmul.f32 %v5109, %v5485
    %v5523 = vmul.f32 %v5110, %v5485
    %v5524 = vmul.f32 %v5111, %v5489
    %v5525 = vmul.f32 %v5112, %v5489
    %v5526 = vmul.f32 %v5113, %v5489
    %v5527 = vmul.f32 %v5114, %v5489
    %v5528 = vmul.f32 %v5115, %v5489
    %v5529 = vmul.f32 %v5116, %v5489
    %v5530 = vmul.f32 %v5117, %v5489
    %v5531 = vmul.f32 %v5118, %v5489
    %v5532 = vmul.f32 %v5119, %v5489
    %v5533 = vmul.f32 %v5120, %v5489
    %v5534 = vmul.f32 %v5121, %v5489
    %v5535 = vmul.f32 %v5122, %v5489
    %v5536 = vmul.f32 %v5123, %v5489
    %v5537 = vmul.f32 %v5124, %v5489
    %v5538 = vmul.f32 %v5125, %v5489
    %v5539 = vmul.f32 %v5126, %v5489
    %v5540 = vmul.f32 %v5127, %v5489
    %v5541 = vmul.f32 %v5128, %v5489
    %v5542 = vmul.f32 %v5129, %v5489
    %v5543 = vmul.f32 %v5130, %v5489
    %v5544 = vmul.f32 %v5131, %v5489
    %v5545 = vmul.f32 %v5132, %v5489
    %v5546 = vmul.f32 %v5133, %v5489
    %v5547 = vmul.f32 %v5134, %v5489
    %v5548 = vmul.f32 %v5135, %v5489
    %v5549 = vmul.f32 %v5136, %v5489
    %v5550 = vmul.f32 %v5137, %v5489
    %v5551 = vmul.f32 %v5138, %v5489
    %v5552 = vmul.f32 %v5139, %v5489
    %v5553 = vmul.f32 %v5140, %v5489
    %v5554 = vmul.f32 %v5141, %v5489
    %v5555 = vmul.f32 %v5142, %v5489
    %v5556 = vsel %vm5143, %v5492, 0.0
    %v5557 = vsel %vm5143, %v5493, 0.0
    %v5558 = vadd.f32 %v5556, %v5557
    %v5559 = vsel %vm5143, %v5494, 0.0
    %v5560 = vadd.f32 %v5558, %v5559
    %v5561 = vsel %vm5143, %v5495, 0.0
    %v5562 = vadd.f32 %v5560, %v5561
    %v5563 = vsel %vm5143, %v5496, 0.0
    %v5564 = vadd.f32 %v5562, %v5563
    %v5565 = vsel %vm5143, %v5497, 0.0
    %v5566 = vadd.f32 %v5564, %v5565
    %v5567 = vsel %vm5143, %v5498, 0.0
    %v5568 = vadd.f32 %v5566, %v5567
    %v5569 = vsel %vm5143, %v5499, 0.0
    %v5570 = vadd.f32 %v5568, %v5569
    %v5571 = vsel %vm5143, %v5500, 0.0
    %v5572 = vadd.f32 %v5570, %v5571
    %v5573 = vsel %vm5143, %v5501, 0.0
    %v5574 = vadd.f32 %v5572, %v5573
    %v5575 = vsel %vm5143, %v5502, 0.0
    %v5576 = vadd.f32 %v5574, %v5575
    %v5577 = vsel %vm5143, %v5503, 0.0
    %v5578 = vadd.f32 %v5576, %v5577
    %v5579 = vsel %vm5143, %v5504, 0.0
    %v5580 = vadd.f32 %v5578, %v5579
    %v5581 = vsel %vm5143, %v5505, 0.0
    %v5582 = vadd.f32 %v5580, %v5581
    %v5583 = vsel %vm5143, %v5506, 0.0
    %v5584 = vadd.f32 %v5582, %v5583
    %v5585 = vsel %vm5143, %v5507, 0.0
    %v5586 = vadd.f32 %v5584, %v5585
    %v5587 = vsel %vm5143, %v5508, 0.0
    %v5588 = vadd.f32 %v5586, %v5587
    %v5589 = vsel %vm5143, %v5509, 0.0
    %v5590 = vadd.f32 %v5588, %v5589
    %v5591 = vsel %vm5143, %v5510, 0.0
    %v5592 = vadd.f32 %v5590, %v5591
    %v5593 = vsel %vm5143, %v5511, 0.0
    %v5594 = vadd.f32 %v5592, %v5593
    %v5595 = vsel %vm5143, %v5512, 0.0
    %v5596 = vadd.f32 %v5594, %v5595
    %v5597 = vsel %vm5143, %v5513, 0.0
    %v5598 = vadd.f32 %v5596, %v5597
    %v5599 = vsel %vm5143, %v5514, 0.0
    %v5600 = vadd.f32 %v5598, %v5599
    %v5601 = vsel %vm5143, %v5515, 0.0
    %v5602 = vadd.f32 %v5600, %v5601
    %v5603 = vsel %vm5143, %v5516, 0.0
    %v5604 = vadd.f32 %v5602, %v5603
    %v5605 = vsel %vm5143, %v5517, 0.0
    %v5606 = vadd.f32 %v5604, %v5605
    %v5607 = vsel %vm5143, %v5518, 0.0
    %v5608 = vadd.f32 %v5606, %v5607
    %v5609 = vsel %vm5143, %v5519, 0.0
    %v5610 = vadd.f32 %v5608, %v5609
    %v5611 = vsel %vm5143, %v5520, 0.0
    %v5612 = vadd.f32 %v5610, %v5611
    %v5613 = vsel %vm5143, %v5521, 0.0
    %v5614 = vadd.f32 %v5612, %v5613
    %v5615 = vsel %vm5143, %v5522, 0.0
    %v5616 = vadd.f32 %v5614, %v5615
    %v5617 = vsel %vm5143, %v5523, 0.0
    %v5618 = vadd.f32 %v5616, %v5617
    %v5619 = vrot.slane %v5618, 4
    %v5620 = vadd.f32 %v5618, %v5619
    %v5621 = vrot.slane %v5620, 2
    %v5622 = vadd.f32 %v5620, %v5621
    %v5623 = vrot.slane %v5622, 1
    %v5624 = vadd.f32 %v5622, %v5623
    %v5625 = vsel %vm5143, %v5524, 0.0
    %v5626 = vsel %vm5143, %v5525, 0.0
    %v5627 = vadd.f32 %v5625, %v5626
    %v5628 = vsel %vm5143, %v5526, 0.0
    %v5629 = vadd.f32 %v5627, %v5628
    %v5630 = vsel %vm5143, %v5527, 0.0
    %v5631 = vadd.f32 %v5629, %v5630
    %v5632 = vsel %vm5143, %v5528, 0.0
    %v5633 = vadd.f32 %v5631, %v5632
    %v5634 = vsel %vm5143, %v5529, 0.0
    %v5635 = vadd.f32 %v5633, %v5634
    %v5636 = vsel %vm5143, %v5530, 0.0
    %v5637 = vadd.f32 %v5635, %v5636
    %v5638 = vsel %vm5143, %v5531, 0.0
    %v5639 = vadd.f32 %v5637, %v5638
    %v5640 = vsel %vm5143, %v5532, 0.0
    %v5641 = vadd.f32 %v5639, %v5640
    %v5642 = vsel %vm5143, %v5533, 0.0
    %v5643 = vadd.f32 %v5641, %v5642
    %v5644 = vsel %vm5143, %v5534, 0.0
    %v5645 = vadd.f32 %v5643, %v5644
    %v5646 = vsel %vm5143, %v5535, 0.0
    %v5647 = vadd.f32 %v5645, %v5646
    %v5648 = vsel %vm5143, %v5536, 0.0
    %v5649 = vadd.f32 %v5647, %v5648
    %v5650 = vsel %vm5143, %v5537, 0.0
    %v5651 = vadd.f32 %v5649, %v5650
    %v5652 = vsel %vm5143, %v5538, 0.0
    %v5653 = vadd.f32 %v5651, %v5652
    %v5654 = vsel %vm5143, %v5539, 0.0
    %v5655 = vadd.f32 %v5653, %v5654
    %v5656 = vsel %vm5143, %v5540, 0.0
    %v5657 = vadd.f32 %v5655, %v5656
    %v5658 = vsel %vm5143, %v5541, 0.0
    %v5659 = vadd.f32 %v5657, %v5658
    %v5660 = vsel %vm5143, %v5542, 0.0
    %v5661 = vadd.f32 %v5659, %v5660
    %v5662 = vsel %vm5143, %v5543, 0.0
    %v5663 = vadd.f32 %v5661, %v5662
    %v5664 = vsel %vm5143, %v5544, 0.0
    %v5665 = vadd.f32 %v5663, %v5664
    %v5666 = vsel %vm5143, %v5545, 0.0
    %v5667 = vadd.f32 %v5665, %v5666
    %v5668 = vsel %vm5143, %v5546, 0.0
    %v5669 = vadd.f32 %v5667, %v5668
    %v5670 = vsel %vm5143, %v5547, 0.0
    %v5671 = vadd.f32 %v5669, %v5670
    %v5672 = vsel %vm5143, %v5548, 0.0
    %v5673 = vadd.f32 %v5671, %v5672
    %v5674 = vsel %vm5143, %v5549, 0.0
    %v5675 = vadd.f32 %v5673, %v5674
    %v5676 = vsel %vm5143, %v5550, 0.0
    %v5677 = vadd.f32 %v5675, %v5676
    %v5678 = vsel %vm5143, %v5551, 0.0
    %v5679 = vadd.f32 %v5677, %v5678
    %v5680 = vsel %vm5143, %v5552, 0.0
    %v5681 = vadd.f32 %v5679, %v5680
    %v5682 = vsel %vm5143, %v5553, 0.0
    %v5683 = vadd.f32 %v5681, %v5682
    %v5684 = vsel %vm5143, %v5554, 0.0
    %v5685 = vadd.f32 %v5683, %v5684
    %v5686 = vsel %vm5143, %v5555, 0.0
    %v5687 = vadd.f32 %v5685, %v5686
    %v5688 = vrot.slane %v5687, 4
    %v5689 = vadd.f32 %v5687, %v5688
    %v5690 = vrot.slane %v5689, 2
    %v5691 = vadd.f32 %v5689, %v5690
    %v5692 = vrot.slane %v5691, 1
    %v5693 = vadd.f32 %v5691, %v5692
    %v5694 = vmul.f32 %v5624, 0.00390625
    %v5695 = vmul.f32 %v5693, 0.00390625
    %v5696 = vld [vmem:[%s7] sm:$0xff]
    %v5697 = vld [vmem:[%s8] sm:$0x1]
    %v5699 = vlaneseq
    %v5700 = vshrl.u32 %v5699, 7
    %v5701 = vsub.s32 0, %v5700
    %v5702 = vrot.slane %v5697, %v5701
    %v5706 = vsel %vm5294, %v5695, %v5694
    %v5707 = vsel %vm5143, %v5706, 0
    %5709 = vmatprep.subr.mxu0 0.0
    %5710 = vmatpush1.msra.mxu0 0.0
    %5711 = vmatprep.subr.mxu0 0.0
    %5712 = vmatpush1.msra.mxu0 0.0
    %5713 = vmatprep.subr.mxu0 0.0
    %5714 = vmatpush1.msra.mxu0 0.0
    %5715 = vmatprep.subr.mxu0 0.0
    %5716 = vmatpush1.msra.mxu0 0.0
    %5717 = vmatprep.subr.mxu0 0.0
    %5718 = vmatpush1.msra.mxu0 0.0
    %5719 = vmatprep.subr.mxu0 0.0
    %5720 = vmatpush1.msra.mxu0 0.0
    %5721 = vmatprep.subr.mxu0 0.0
    %5722 = vmatpush1.msra.mxu0 0.0
    %5723 = vmatprep.subr.mxu0 0.0
    %5724 = vmatpush1.msra.mxu0 0.0
    %5725 = vmatprep.subr.mxu0 0.0
    %5726 = vmatpush1.msra.mxu0 0.0
    %5727 = vmatprep.subr.mxu0 0.0
    %5728 = vmatpush1.msra.mxu0 0.0
    %5729 = vmatprep.subr.mxu0 0.0
    %5730 = vmatpush1.msra.mxu0 0.0
    %5731 = vmatprep.subr.mxu0 0.0
    %5732 = vmatpush1.msra.mxu0 0.0
    %5733 = vmatprep.subr.mxu0 0.0
    %5734 = vmatpush1.msra.mxu0 0.0
    %5735 = vmatprep.subr.mxu0 0.0
    %5736 = vmatpush1.msra.mxu0 0.0
    %5737 = vmatprep.subr.mxu0 0.0
    %5738 = vmatpush1.msra.mxu0 0.0
    %5739 = vmatprep.subr.mxu0 0.0
    %5740 = vmatpush1.msra.mxu0 %v5696
    %5741 = vmatprep.subr.mxu0 0.0
    %5742 = vmatpush2.msra.mxu0 0.0
    %5743 = vmatprep.subr.mxu0 0.0
    %5744 = vmatpush2.msra.mxu0 0.0
    %5745 = vmatprep.subr.mxu0 0.0
    %5746 = vmatpush2.msra.mxu0 0.0
    %5747 = vmatprep.subr.mxu0 0.0
    %5748 = vmatpush2.msra.mxu0 0.0
    %5749 = vmatprep.subr.mxu0 0.0
    %5750 = vmatpush2.msra.mxu0 0.0
    %5751 = vmatprep.subr.mxu0 0.0
    %5752 = vmatpush2.msra.mxu0 0.0
    %5753 = vmatprep.subr.mxu0 0.0
    %5754 = vmatpush2.msra.mxu0 0.0
    %5755 = vmatprep.subr.mxu0 0.0
    %5756 = vmatpush2.msra.mxu0 0.0
    %5757 = vmatprep.subr.mxu0 0.0
    %5758 = vmatpush2.msra.mxu0 0.0
    %5759 = vmatprep.subr.mxu0 0.0
    %5760 = vmatpush2.msra.mxu0 0.0
    %5761 = vmatprep.subr.mxu0 0.0
    %5762 = vmatpush2.msra.mxu0 0.0
    %5763 = vmatprep.subr.mxu0 0.0
    %5764 = vmatpush2.msra.mxu0 0.0
    %5765 = vmatprep.subr.mxu0 0.0
    %5766 = vmatpush2.msra.mxu0 0.0
    %5767 = vmatprep.subr.mxu0 0.0
    %5768 = vmatpush2.msra.mxu0 0.0
    %5769 = vmatprep.subr.mxu0 0.0
    %5770 = vmatpush2.msra.mxu0 0.0
    %5771 = vmatprep.subr.mxu0 0.0
    %5772 = vmatpush2.msra.mxu0 0.0
    %5773 = vmatprep.mubr.f32.mxu0 0.0
    %5774 = vmatmul.mubr.f32.gmra.mxu0 %v5707
    %v5775 = vpop.f32.mrf.mxu0
    %v5776 = vadd.f32 %v5702, %v5775
    %v5777 = vpop.f32.mrf.mxu0
    %5778 = vdwg.mxu0
    %5779 = vst [vmem:[#allocation2] sm:$0x3] %v5776
    %v5780 = vlaneseq
    %v5781 = vand.u32 %v5780, 127
    %vm5782 = vcmp.lt.s32.totalorder %v5781, 10
    %v5783 = vsel %vm5782, %v5776, -1e+30
    %vm5784 = vcmask 1041408
    %v5785 = vsel %vm5784, %v5783, -inf
    %5786 = vmax.xlane.f32.xlu0 %v5785
    %v5787 = vpop.xlane.xlu0 %5786
    %v5788 = vsub.f32 %v5783, %v5787
    %v5789 = vmul.f32 %v5788, 1.442695
    %v5790 = vpow.pop %v5789
    %v5791 = vsel %vm5784, %v5790, 0.0
    %5792 = vadd.xlane.f32.xlu0 %v5791
    %v5793 = vpop.xlane.xlu0 %5792
    %v5794 = vlog2.pop %v5793
    %v5795 = vmul.f32 %v5794, 0.6931472
    %v5796 = vsub.f32 %v5788, %v5795
    %v5797 = vld [vmem:[%s9] sm:$0x3]
    %v5798 = vmul.f32 %v5797, %v5796
    %v5799 = vsel %vm5784, %v5798, 0.0
    %5800 = vadd.xlane.f32.xlu0 %v5799
    %v5801 = vpop.xlane.xlu0 %5800
    %v5802 = vrot.slane %v5801, 4
    %v5803 = vadd.f32 %v5801, %v5802
    %v5804 = vrot.slane %v5803, 2
    %v5805 = vadd.f32 %v5803, %v5804
    %v5806 = vrot.slane %v5805, 1
    %v5807 = vadd.f32 %v5805, %v5806
    %s5808 = vtos %v5807
    %s5809 = ssub.f32 0.0, %s5808
    %s5810 = smul.f32 %s5809, 0.5
    %s5811 = scalar_lea.smem [#allocation5], 0
    %5812 = sst [smem:[%s5811]] %s5810
    // Predicated region
    $region42: #{tpu_custom_call.1} parent=1 // pred_check
      _
    $region43: #{tpu_custom_call.1} parent=1 // pred_check_branch
      %5814 = sbr.rel (0) target = $region45
    $region44: #{tpu_custom_call.1} parent=1 // pred_region
      %s5816 = ssub.s32 32, 32
      %5817 = vsyncadd [#allocation3], %s5816
      %s5819 = sshll.u32 [#allocation2], 4
      %s5820 = int_to_ptr.vmem [resolvable:$true] %s5819
      %5822 = dma.vmem_to_hbm [thread:$0]  %s5820, 32, %s10, [#allocation3]
    $region45: #{tpu_custom_call.1} parent=1 // pred_fallthru
      _
    // Predicated region
    $region46: #{tpu_custom_call.1} parent=1 // pred_check
      _
    $region47: #{tpu_custom_call.1} parent=1 // pred_check_branch
      %5824 = sbr.rel (0) target = $region49
    $region48: #{tpu_custom_call.1} parent=1 // pred_region
      %s5826 = ssub.s32 16, 16
      %5827 = vsyncadd [#allocation4], %s5826
      %5830 = dma.smem_to_hbm [#allocation5], 16, %s11, [#allocation4]
    $region49: #{tpu_custom_call.1} parent=1 // pred_fallthru
      _
    // Predicated region
    $region50: #{tpu_custom_call.1} parent=1 // pred_check
      _
    $region51: #{tpu_custom_call.1} parent=1 // pred_check_branch
      %5832 = sbr.rel (0) target = $region53
    $region52: #{tpu_custom_call.1} parent=1 // pred_region
      %5833 = dma.done [#allocation3], 32
    $region53: #{tpu_custom_call.1} parent=1 // pred_fallthru
      _
    // Predicated region
    $region54: #{tpu_custom_call.1} parent=1 // pred_check
      _
    $region55: #{tpu_custom_call.1} parent=1 // pred_check_branch
      %5835 = sbr.rel (0) target = $region57
    $region56: #{tpu_custom_call.1} parent=1 // pred_region
      %5836 = dma.done [#allocation4], 16
    $region57: #{tpu_custom_call.1} parent=1 // pred_fallthru
      _
    %5837 = sfence
    %5838 = vsyncpa [#allocation3], 1
    %5839 = vsyncpa [#allocation4], 1

</llo_original>
